<compile_context>
chip_gen: v7x
topology: tpu7x:2x2x1
jax: 0.10.0
libtpu: 0.0.40
codegen_flags: <defaults>
</compile_context>

<pallas_src>
import functools

import jax
import jax.numpy as jnp
import numpy as np
from jax import lax
from jax.experimental import pallas as pl
from jax.experimental.pallas import tpu as pltpu


def _predictor_kernel(x_ref, w1_ref, b1_ref, w2_ref, b2_ref, mask_ref,
                      logits_ref, px_ref, *, Cin, Cout, W, L, compute_dtype):
    """Fused forward for NB images (channels on sublanes, NB*H*W pixels on lanes).

    x_ref      : (1, Cin, L)     NB input images, batch concatenated on the lane axis
    w1_ref     : (9, Cin, Cin)   conv1 weight^T per tap, BN scale folded in
    b1_ref     : (Cin, 1)        conv1 bias with BN folded in
    w2_ref     : (9, Cout, Cin)  conv2 weight^T per tap
    b2_ref     : (Cout, 1)       conv2 bias
    mask_ref   : (9, L)          per-tap zero-padding masks, tiled NB times on lanes
    logits_ref : (1, Cout, L)    pre-softmax output (lane-dense)
    px_ref     : (1, Cout, L)    softmax(channel) output (lane-dense)
    """
    x = x_ref[0]                                        # (Cin, L) f32

    def conv3x3(src, w_ref, b_ref, m_out):
        """3x3 'SAME' conv via 9 lane rolls (XLU) + tap-wise MXU accumulation."""
        acc = jnp.zeros((m_out, L), jnp.float32)
        for k in range(9):
            dh, dw = k // 3 - 1, k % 3 - 1
            s = dh * W + dw                             # pixel-index shift
            if s == 0:
                tap = src                               # centre tap: always valid
            else:
                rolled = pltpu.roll(src, (-s) % L, axis=1)
                # lanes that wrapped across an image / zero-padding boundary are
                # exactly the masked ones.
                tap = rolled * mask_ref[k:k + 1, :]
            acc = acc + jnp.dot(w_ref[k].astype(compute_dtype),
                                tap.astype(compute_dtype),
                                preferred_element_type=jnp.float32)
        return acc + b_ref[...]

    # ---- conv1 (BN folded) + ReLU ------------------------------------------
    h = jnp.maximum(conv3x3(x, w1_ref, b1_ref, Cin), 0.0)       # (Cin, L)

    # ---- conv2 ---------------------------------------------------------------
    logits = conv3x3(h, w2_ref, b2_ref, Cout)                    # (Cout, L)

    # ---- softmax over channels (sublane axis); exact division ---------------
    m = jnp.max(logits, axis=0, keepdims=True)
    e = jnp.exp(logits - m)
    px = e / jnp.sum(e, axis=0, keepdims=True)

    logits_ref[0] = logits.astype(logits_ref.dtype)
    px_ref[0] = px.astype(px_ref.dtype)


def _pick_nb(B):
    """Images per grid step: amortize step overhead, keep >=2 steps for v7x."""
    if B <= 1:
        return 1
    return max(1, min(8, B // 2))


def predictor_forward(x_nchw, params, *, nb=None, use_bf16_mxu=False):
    """x_nchw: (B, Cin, H, W) float32. Returns (logits, px) in NCHW (eval-mode BN)."""
    w1, b1, gamma, beta, rmean, rvar, w2, b2 = (
        params["w1"], params["b1"], params["gamma"], params["beta"],
        params["rmean"], params["rvar"], params["w2"], params["b2"])
    eps = 1e-5
    B, Cin, H, W = x_nchw.shape
    Cout = w2.shape[-1]
    HW = H * W

    # ---- BN fold + per-tap transposed weights (tiny, plain JAX) -------------
    s_g = gamma / jnp.sqrt(rvar + eps)                            # (Cin,)
    w1f = w1 * s_g[None, None, None, :]                           # scale out-channels
    b1f = (b1 * s_g + beta - rmean * s_g).reshape(Cin, 1)         # (Cin, 1)
    w1s = jnp.transpose(w1f.reshape(9, Cin, Cin), (0, 2, 1))      # (9, Cout=Cin, Cin)
    w2s = jnp.transpose(w2.reshape(9, Cin, Cout), (0, 2, 1))      # (9, Cout, Cin)
    b2r = b2.reshape(Cout, 1)                                     # (Cout, 1)

    compute_dtype = jnp.bfloat16 if use_bf16_mxu else jnp.float32
    if use_bf16_mxu:   # bf16 MXU feed (v6e/v7x); accumulation stays f32
        w1s = w1s.astype(jnp.bfloat16)
        w2s = w2s.astype(jnp.bfloat16)

    # ---- batch blocking: NB images per grid step, batch on the lane axis ----
    if nb is None:
        nb = _pick_nb(B)
    G = -(-B // nb)
    Bp = G * nb
    if Bp != B:
        x_nchw = jnp.pad(x_nchw, ((0, Bp - B), (0, 0), (0, 0), (0, 0)))
    L = nb * HW
    x_lanes = (x_nchw.reshape(G, nb, Cin, HW)
               .transpose(0, 2, 1, 3)
               .reshape(G, Cin, L))                               # (G, Cin, nb*H*W)

    # static zero-padding masks for the in-kernel im2col (tiled NB x along lanes)
    pp = np.arange(HW)
    hh, ww = pp // W, pp % W
    mask_np = np.zeros((9, HW), np.float32)
    for k in range(9):
        dh, dw = k // 3 - 1, k % 3 - 1
        mask_np[k] = ((hh + dh >= 0) & (hh + dh < H) &
                      (ww + dw >= 0) & (ww + dw < W)).astype(np.float32)
    mask = jnp.asarray(np.tile(mask_np, (1, nb)))                 # (9, L)

    kernel = functools.partial(_predictor_kernel, Cin=Cin, Cout=Cout, W=W, L=L,
                               compute_dtype=compute_dtype)

    logits_flat, px_flat = pl.pallas_call(
        kernel,
        out_shape=(jax.ShapeDtypeStruct((G, Cout, L), jnp.float32),
                   jax.ShapeDtypeStruct((G, Cout, L), jnp.float32)),
        grid_spec=pltpu.PrefetchScalarGridSpec(
            num_scalar_prefetch=0,
            grid=(G,),
            in_specs=[
                pl.BlockSpec((1, Cin, L), lambda g: (g, 0, 0)),     # NB images
                pl.BlockSpec((9, Cin, Cin), lambda g: (0, 0, 0)),   # w1 (resident)
                pl.BlockSpec((Cin, 1), lambda g: (0, 0)),           # b1 folded
                pl.BlockSpec((9, Cout, Cin), lambda g: (0, 0, 0)),  # w2
                pl.BlockSpec((Cout, 1), lambda g: (0, 0)),          # b2
                pl.BlockSpec((9, L), lambda g: (0, 0)),             # pad masks
            ],
            out_specs=[
                pl.BlockSpec((1, Cout, L), lambda g: (g, 0, 0)),
                pl.BlockSpec((1, Cout, L), lambda g: (g, 0, 0)),
            ],
        ),
        compiler_params=pltpu.CompilerParams(
            dimension_semantics=("parallel",)),
    )(x_lanes, w1s, b1f, w2s, b2r, mask)

    # de-interleave the lane-axis batch; tiny wrapper-side transpose
    def delane(y):
        return (y.reshape(G, Cout, nb, HW)
                 .transpose(0, 2, 1, 3)
                 .reshape(Bp, Cout, H, W))

    return delane(logits_flat)[:B], delane(px_flat)[:B]


def _reference_forward(x_nchw, params):
    """Pure-JAX reference (for validation)."""
    eps = 1e-5
    x = jnp.transpose(x_nchw, (0, 2, 3, 1))
    dn = lax.conv_dimension_numbers(x.shape, params["w1"].shape,
                                    ("NHWC", "HWIO", "NHWC"))
    h = lax.conv_general_dilated(x, params["w1"], (1, 1), "SAME",
                                 dimension_numbers=dn) + params["b1"]
    h = (h - params["rmean"]) / jnp.sqrt(params["rvar"] + eps)
    h = h * params["gamma"] + params["beta"]
    h = jnp.maximum(h, 0.0)
    dn2 = lax.conv_dimension_numbers(h.shape, params["w2"].shape,
                                     ("NHWC", "HWIO", "NHWC"))
    logits = lax.conv_general_dilated(h, params["w2"], (1, 1), "SAME",
                                      dimension_numbers=dn2) + params["b2"]
    px = jax.nn.softmax(logits, axis=-1)
    return (jnp.transpose(logits, (0, 3, 1, 2)),
            jnp.transpose(px, (0, 3, 1, 2)))


def init_params(key, input_ch=32, num_classes=8):
    k = jax.random.split(key, 8)
    fan = input_ch * 9
    bound = 1.0 / np.sqrt(fan)
    return {
        # conv weights in HWIO layout (kh, kw, Cin, Cout)
        "w1": jax.random.uniform(k[0], (3, 3, input_ch, input_ch),
                                 jnp.float32, -bound, bound),
        "b1": jax.random.uniform(k[1], (input_ch,), jnp.float32, -bound, bound),
        "gamma": 1.0 + 0.1 * jax.random.normal(k[2], (input_ch,), jnp.float32),
        "beta": 0.1 * jax.random.normal(k[3], (input_ch,), jnp.float32),
        "rmean": 0.05 * jax.random.normal(k[4], (input_ch,), jnp.float32),
        "rvar": 1.0 + 0.1 * jax.random.uniform(k[5], (input_ch,), jnp.float32),
        "w2": jax.random.uniform(k[6], (3, 3, input_ch, num_classes),
                                 jnp.float32, -bound, bound),
        "b2": jax.random.uniform(k[7], (num_classes,), jnp.float32,
                                 -bound, bound),
    }


if __name__ == "__main__":
    key = jax.random.PRNGKey(0)
    kx, kp = jax.random.split(key)

    B, Cin, H, W = 4, 32, 16, 16
    num_classes = 8

    x = jax.random.normal(kx, (B, Cin, H, W), jnp.float32)
    params = init_params(kp, input_ch=Cin, num_classes=num_classes)

    logits, px = predictor_forward(x, params)       # nb=2 -> grid=(2,)
    jax.block_until_ready((logits, px))

    ref_logits, ref_px = _reference_forward(x, params)
    assert logits.shape == (B, num_classes, H, W)
    assert px.shape == (B, num_classes, H, W)
    np.testing.assert_allclose(np.asarray(logits), np.asarray(ref_logits),
                               rtol=1e-4, atol=1e-4)
    # exact-division softmax -> tolerance tightened from 2e-3 to 1e-4
    np.testing.assert_allclose(np.asarray(px), np.asarray(ref_px),
                               rtol=1e-4, atol=1e-4)

    print("KERNEL_OK")
</pallas_src>

<mosaic_0001>
module attributes {stable_mosaic.version = 11 : i64} {
  func.func @_predictor_kernel(%arg0: i32, %arg1: memref<1x32x512xf32, #tpu.memory_space<vmem>>, %arg2: memref<9x32x32xf32, #tpu.memory_space<vmem>>, %arg3: memref<32x1xf32, #tpu.memory_space<vmem>>, %arg4: memref<9x8x32xf32, #tpu.memory_space<vmem>>, %arg5: memref<8x1xf32, #tpu.memory_space<vmem>>, %arg6: memref<9x512xf32, #tpu.memory_space<vmem>>, %arg7: memref<1x8x512xf32, #tpu.memory_space<vmem>>, %arg8: memref<1x8x512xf32, #tpu.memory_space<vmem>>) attributes {dimension_semantics = [#tpu.dimension_semantics<parallel>], iteration_bounds = array<i64: 2>, scalar_prefetch = 0 : i64, scratch_operands = 0 : i64, tpu.core_type = #tpu.core_type<tc>, window_params = [{transform_indices = @transform_0, window_bounds = array<i64: 1, 32, 512>}, {pipeline_mode = #tpu.pipeline_mode<synchronous>, transform_indices = @transform_1, window_bounds = array<i64: 9, 32, 32>}, {pipeline_mode = #tpu.pipeline_mode<synchronous>, transform_indices = @transform_2, window_bounds = array<i64: 32, 1>}, {pipeline_mode = #tpu.pipeline_mode<synchronous>, transform_indices = @transform_3, window_bounds = array<i64: 9, 8, 32>}, {pipeline_mode = #tpu.pipeline_mode<synchronous>, transform_indices = @transform_4, window_bounds = array<i64: 8, 1>}, {pipeline_mode = #tpu.pipeline_mode<synchronous>, transform_indices = @transform_5, window_bounds = array<i64: 9, 512>}, {transform_indices = @transform_6, window_bounds = array<i64: 1, 8, 512>}, {transform_indices = @transform_7, window_bounds = array<i64: 1, 8, 512>}]} {
    %c0 = arith.constant 0 : index
    %c0_0 = arith.constant 0 : index
    %c0_1 = arith.constant 0 : index
    %0 = vector.load %arg1[%c0, %c0_0, %c0_1] : memref<1x32x512xf32, #tpu.memory_space<vmem>>, vector<1x32x512xf32>
    %1 = vector.shape_cast %0 : vector<1x32x512xf32> to vector<32x512xf32>
    %cst = arith.constant 0.000000e+00 : f32
    %2 = vector.broadcast %cst : f32 to vector<32x512xf32>
    %c17_i32 = arith.constant 17 : i32
    %3 = tpu.dynamic_rotate %1 by %c17_i32 dim 1 : vector<32x512xf32>, i32 -> vector<32x512xf32>
    %c0_2 = arith.constant 0 : index
    %c0_3 = arith.constant 0 : index
    %4 = vector.load %arg6[%c0_2, %c0_3] : memref<9x512xf32, #tpu.memory_space<vmem>>, vector<1x512xf32>
    %5 = vector.broadcast %4 : vector<1x512xf32> to vector<32x512xf32>
    %6 = arith.mulf %3, %5 : vector<32x512xf32>
    %c0_4 = arith.constant 0 : index
    %c0_5 = arith.constant 0 : index
    %c0_6 = arith.constant 0 : index
    %7 = vector.load %arg2[%c0_4, %c0_5, %c0_6] : memref<9x32x32xf32, #tpu.memory_space<vmem>>, vector<1x32x32xf32>
    %8 = vector.shape_cast %7 : vector<1x32x32xf32> to vector<32x32xf32>
    %cst_7 = arith.constant dense<0.000000e+00> : vector<32x512xf32>
    %9 = tpu.matmul %8, %6, %cst_7 {dimension_numbers = #tpu.dot_dimension_numbers<[1], [0], [0], [1], [0, 0, 1, 1], [], []>} : vector<32x32xf32>, vector<32x512xf32>, vector<32x512xf32> -> vector<32x512xf32>
    %10 = arith.addf %2, %9 : vector<32x512xf32>
    %c16_i32 = arith.constant 16 : i32
    %11 = tpu.dynamic_rotate %1 by %c16_i32 dim 1 : vector<32x512xf32>, i32 -> vector<32x512xf32>
    %c1 = arith.constant 1 : index
    %c0_8 = arith.constant 0 : index
    %12 = vector.load %arg6[%c1, %c0_8] : memref<9x512xf32, #tpu.memory_space<vmem>>, vector<1x512xf32>
    %13 = vector.broadcast %12 : vector<1x512xf32> to vector<32x512xf32>
    %14 = arith.mulf %11, %13 : vector<32x512xf32>
    %c1_9 = arith.constant 1 : index
    %c0_10 = arith.constant 0 : index
    %c0_11 = arith.constant 0 : index
    %15 = vector.load %arg2[%c1_9, %c0_10, %c0_11] : memref<9x32x32xf32, #tpu.memory_space<vmem>>, vector<1x32x32xf32>
    %16 = vector.shape_cast %15 : vector<1x32x32xf32> to vector<32x32xf32>
    %cst_12 = arith.constant dense<0.000000e+00> : vector<32x512xf32>
    %17 = tpu.matmul %16, %14, %cst_12 {dimension_numbers = #tpu.dot_dimension_numbers<[1], [0], [0], [1], [0, 0, 1, 1], [], []>} : vector<32x32xf32>, vector<32x512xf32>, vector<32x512xf32> -> vector<32x512xf32>
    %18 = arith.addf %10, %17 : vector<32x512xf32>
    %c15_i32 = arith.constant 15 : i32
    %19 = tpu.dynamic_rotate %1 by %c15_i32 dim 1 : vector<32x512xf32>, i32 -> vector<32x512xf32>
    %c2 = arith.constant 2 : index
    %c0_13 = arith.constant 0 : index
    %20 = vector.load %arg6[%c2, %c0_13] : memref<9x512xf32, #tpu.memory_space<vmem>>, vector<1x512xf32>
    %21 = vector.broadcast %20 : vector<1x512xf32> to vector<32x512xf32>
    %22 = arith.mulf %19, %21 : vector<32x512xf32>
    %c2_14 = arith.constant 2 : index
    %c0_15 = arith.constant 0 : index
    %c0_16 = arith.constant 0 : index
    %23 = vector.load %arg2[%c2_14, %c0_15, %c0_16] : memref<9x32x32xf32, #tpu.memory_space<vmem>>, vector<1x32x32xf32>
    %24 = vector.shape_cast %23 : vector<1x32x32xf32> to vector<32x32xf32>
    %cst_17 = arith.constant dense<0.000000e+00> : vector<32x512xf32>
    %25 = tpu.matmul %24, %22, %cst_17 {dimension_numbers = #tpu.dot_dimension_numbers<[1], [0], [0], [1], [0, 0, 1, 1], [], []>} : vector<32x32xf32>, vector<32x512xf32>, vector<32x512xf32> -> vector<32x512xf32>
    %26 = arith.addf %18, %25 : vector<32x512xf32>
    %c1_i32 = arith.constant 1 : i32
    %27 = tpu.dynamic_rotate %1 by %c1_i32 dim 1 : vector<32x512xf32>, i32 -> vector<32x512xf32>
    %c3 = arith.constant 3 : index
    %c0_18 = arith.constant 0 : index
    %28 = vector.load %arg6[%c3, %c0_18] : memref<9x512xf32, #tpu.memory_space<vmem>>, vector<1x512xf32>
    %29 = vector.broadcast %28 : vector<1x512xf32> to vector<32x512xf32>
    %30 = arith.mulf %27, %29 : vector<32x512xf32>
    %c3_19 = arith.constant 3 : index
    %c0_20 = arith.constant 0 : index
    %c0_21 = arith.constant 0 : index
    %31 = vector.load %arg2[%c3_19, %c0_20, %c0_21] : memref<9x32x32xf32, #tpu.memory_space<vmem>>, vector<1x32x32xf32>
    %32 = vector.shape_cast %31 : vector<1x32x32xf32> to vector<32x32xf32>
    %cst_22 = arith.constant dense<0.000000e+00> : vector<32x512xf32>
    %33 = tpu.matmul %32, %30, %cst_22 {dimension_numbers = #tpu.dot_dimension_numbers<[1], [0], [0], [1], [0, 0, 1, 1], [], []>} : vector<32x32xf32>, vector<32x512xf32>, vector<32x512xf32> -> vector<32x512xf32>
    %34 = arith.addf %26, %33 : vector<32x512xf32>
    %c4 = arith.constant 4 : index
    %c0_23 = arith.constant 0 : index
    %c0_24 = arith.constant 0 : index
    %35 = vector.load %arg2[%c4, %c0_23, %c0_24] : memref<9x32x32xf32, #tpu.memory_space<vmem>>, vector<1x32x32xf32>
    %36 = vector.shape_cast %35 : vector<1x32x32xf32> to vector<32x32xf32>
    %cst_25 = arith.constant dense<0.000000e+00> : vector<32x512xf32>
    %37 = tpu.matmul %36, %1, %cst_25 {dimension_numbers = #tpu.dot_dimension_numbers<[1], [0], [0], [1], [0, 0, 1, 1], [], []>} : vector<32x32xf32>, vector<32x512xf32>, vector<32x512xf32> -> vector<32x512xf32>
    %38 = arith.addf %34, %37 : vector<32x512xf32>
    %c511_i32 = arith.constant 511 : i32
    %39 = tpu.dynamic_rotate %1 by %c511_i32 dim 1 : vector<32x512xf32>, i32 -> vector<32x512xf32>
    %c5 = arith.constant 5 : index
    %c0_26 = arith.constant 0 : index
    %40 = vector.load %arg6[%c5, %c0_26] : memref<9x512xf32, #tpu.memory_space<vmem>>, vector<1x512xf32>
    %41 = vector.broadcast %40 : vector<1x512xf32> to vector<32x512xf32>
    %42 = arith.mulf %39, %41 : vector<32x512xf32>
    %c5_27 = arith.constant 5 : index
    %c0_28 = arith.constant 0 : index
    %c0_29 = arith.constant 0 : index
    %43 = vector.load %arg2[%c5_27, %c0_28, %c0_29] : memref<9x32x32xf32, #tpu.memory_space<vmem>>, vector<1x32x32xf32>
    %44 = vector.shape_cast %43 : vector<1x32x32xf32> to vector<32x32xf32>
    %cst_30 = arith.constant dense<0.000000e+00> : vector<32x512xf32>
    %45 = tpu.matmul %44, %42, %cst_30 {dimension_numbers = #tpu.dot_dimension_numbers<[1], [0], [0], [1], [0, 0, 1, 1], [], []>} : vector<32x32xf32>, vector<32x512xf32>, vector<32x512xf32> -> vector<32x512xf32>
    %46 = arith.addf %38, %45 : vector<32x512xf32>
    %c497_i32 = arith.constant 497 : i32
    %47 = tpu.dynamic_rotate %1 by %c497_i32 dim 1 : vector<32x512xf32>, i32 -> vector<32x512xf32>
    %c6 = arith.constant 6 : index
    %c0_31 = arith.constant 0 : index
    %48 = vector.load %arg6[%c6, %c0_31] : memref<9x512xf32, #tpu.memory_space<vmem>>, vector<1x512xf32>
    %49 = vector.broadcast %48 : vector<1x512xf32> to vector<32x512xf32>
    %50 = arith.mulf %47, %49 : vector<32x512xf32>
    %c6_32 = arith.constant 6 : index
    %c0_33 = arith.constant 0 : index
    %c0_34 = arith.constant 0 : index
    %51 = vector.load %arg2[%c6_32, %c0_33, %c0_34] : memref<9x32x32xf32, #tpu.memory_space<vmem>>, vector<1x32x32xf32>
    %52 = vector.shape_cast %51 : vector<1x32x32xf32> to vector<32x32xf32>
    %cst_35 = arith.constant dense<0.000000e+00> : vector<32x512xf32>
    %53 = tpu.matmul %52, %50, %cst_35 {dimension_numbers = #tpu.dot_dimension_numbers<[1], [0], [0], [1], [0, 0, 1, 1], [], []>} : vector<32x32xf32>, vector<32x512xf32>, vector<32x512xf32> -> vector<32x512xf32>
    %54 = arith.addf %46, %53 : vector<32x512xf32>
    %c496_i32 = arith.constant 496 : i32
    %55 = tpu.dynamic_rotate %1 by %c496_i32 dim 1 : vector<32x512xf32>, i32 -> vector<32x512xf32>
    %c7 = arith.constant 7 : index
    %c0_36 = arith.constant 0 : index
    %56 = vector.load %arg6[%c7, %c0_36] : memref<9x512xf32, #tpu.memory_space<vmem>>, vector<1x512xf32>
    %57 = vector.broadcast %56 : vector<1x512xf32> to vector<32x512xf32>
    %58 = arith.mulf %55, %57 : vector<32x512xf32>
    %c7_37 = arith.constant 7 : index
    %c0_38 = arith.constant 0 : index
    %c0_39 = arith.constant 0 : index
    %59 = vector.load %arg2[%c7_37, %c0_38, %c0_39] : memref<9x32x32xf32, #tpu.memory_space<vmem>>, vector<1x32x32xf32>
    %60 = vector.shape_cast %59 : vector<1x32x32xf32> to vector<32x32xf32>
    %cst_40 = arith.constant dense<0.000000e+00> : vector<32x512xf32>
    %61 = tpu.matmul %60, %58, %cst_40 {dimension_numbers = #tpu.dot_dimension_numbers<[1], [0], [0], [1], [0, 0, 1, 1], [], []>} : vector<32x32xf32>, vector<32x512xf32>, vector<32x512xf32> -> vector<32x512xf32>
    %62 = arith.addf %54, %61 : vector<32x512xf32>
    %c495_i32 = arith.constant 495 : i32
    %63 = tpu.dynamic_rotate %1 by %c495_i32 dim 1 : vector<32x512xf32>, i32 -> vector<32x512xf32>
    %c8 = arith.constant 8 : index
    %c0_41 = arith.constant 0 : index
    %64 = vector.load %arg6[%c8, %c0_41] : memref<9x512xf32, #tpu.memory_space<vmem>>, vector<1x512xf32>
    %65 = vector.broadcast %64 : vector<1x512xf32> to vector<32x512xf32>
    %66 = arith.mulf %63, %65 : vector<32x512xf32>
    %c8_42 = arith.constant 8 : index
    %c0_43 = arith.constant 0 : index
    %c0_44 = arith.constant 0 : index
    %67 = vector.load %arg2[%c8_42, %c0_43, %c0_44] : memref<9x32x32xf32, #tpu.memory_space<vmem>>, vector<1x32x32xf32>
    %68 = vector.shape_cast %67 : vector<1x32x32xf32> to vector<32x32xf32>
    %cst_45 = arith.constant dense<0.000000e+00> : vector<32x512xf32>
    %69 = tpu.matmul %68, %66, %cst_45 {dimension_numbers = #tpu.dot_dimension_numbers<[1], [0], [0], [1], [0, 0, 1, 1], [], []>} : vector<32x32xf32>, vector<32x512xf32>, vector<32x512xf32> -> vector<32x512xf32>
    %70 = arith.addf %62, %69 : vector<32x512xf32>
    %c0_46 = arith.constant 0 : index
    %c0_47 = arith.constant 0 : index
    %71 = vector.load %arg3[%c0_46, %c0_47] : memref<32x1xf32, #tpu.memory_space<vmem>>, vector<32x1xf32>
    %72 = vector.broadcast %71 : vector<32x1xf32> to vector<32x512xf32>
    %73 = arith.addf %70, %72 : vector<32x512xf32>
    %cst_48 = arith.constant 0.000000e+00 : f32
    %74 = vector.broadcast %cst_48 : f32 to vector<32x512xf32>
    %75 = arith.maximumf %73, %74 : vector<32x512xf32>
    %cst_49 = arith.constant 0.000000e+00 : f32
    %76 = vector.broadcast %cst_49 : f32 to vector<8x512xf32>
    %c17_i32_50 = arith.constant 17 : i32
    %77 = tpu.dynamic_rotate %75 by %c17_i32_50 dim 1 : vector<32x512xf32>, i32 -> vector<32x512xf32>
    %c0_51 = arith.constant 0 : index
    %c0_52 = arith.constant 0 : index
    %78 = vector.load %arg6[%c0_51, %c0_52] : memref<9x512xf32, #tpu.memory_space<vmem>>, vector<1x512xf32>
    %79 = vector.broadcast %78 : vector<1x512xf32> to vector<32x512xf32>
    %80 = arith.mulf %77, %79 : vector<32x512xf32>
    %c0_53 = arith.constant 0 : index
    %c0_54 = arith.constant 0 : index
    %c0_55 = arith.constant 0 : index
    %81 = vector.load %arg4[%c0_53, %c0_54, %c0_55] : memref<9x8x32xf32, #tpu.memory_space<vmem>>, vector<1x8x32xf32>
    %82 = vector.shape_cast %81 : vector<1x8x32xf32> to vector<8x32xf32>
    %cst_56 = arith.constant dense<0.000000e+00> : vector<8x512xf32>
    %83 = tpu.matmul %82, %80, %cst_56 {dimension_numbers = #tpu.dot_dimension_numbers<[1], [0], [0], [1], [0, 0, 1, 1], [], []>} : vector<8x32xf32>, vector<32x512xf32>, vector<8x512xf32> -> vector<8x512xf32>
    %84 = arith.addf %76, %83 : vector<8x512xf32>
    %c16_i32_57 = arith.constant 16 : i32
    %85 = tpu.dynamic_rotate %75 by %c16_i32_57 dim 1 : vector<32x512xf32>, i32 -> vector<32x512xf32>
    %c1_58 = arith.constant 1 : index
    %c0_59 = arith.constant 0 : index
    %86 = vector.load %arg6[%c1_58, %c0_59] : memref<9x512xf32, #tpu.memory_space<vmem>>, vector<1x512xf32>
    %87 = vector.broadcast %86 : vector<1x512xf32> to vector<32x512xf32>
    %88 = arith.mulf %85, %87 : vector<32x512xf32>
    %c1_60 = arith.constant 1 : index
    %c0_61 = arith.constant 0 : index
    %c0_62 = arith.constant 0 : index
    %89 = vector.load %arg4[%c1_60, %c0_61, %c0_62] : memref<9x8x32xf32, #tpu.memory_space<vmem>>, vector<1x8x32xf32>
    %90 = vector.shape_cast %89 : vector<1x8x32xf32> to vector<8x32xf32>
    %cst_63 = arith.constant dense<0.000000e+00> : vector<8x512xf32>
    %91 = tpu.matmul %90, %88, %cst_63 {dimension_numbers = #tpu.dot_dimension_numbers<[1], [0], [0], [1], [0, 0, 1, 1], [], []>} : vector<8x32xf32>, vector<32x512xf32>, vector<8x512xf32> -> vector<8x512xf32>
    %92 = arith.addf %84, %91 : vector<8x512xf32>
    %c15_i32_64 = arith.constant 15 : i32
    %93 = tpu.dynamic_rotate %75 by %c15_i32_64 dim 1 : vector<32x512xf32>, i32 -> vector<32x512xf32>
    %c2_65 = arith.constant 2 : index
    %c0_66 = arith.constant 0 : index
    %94 = vector.load %arg6[%c2_65, %c0_66] : memref<9x512xf32, #tpu.memory_space<vmem>>, vector<1x512xf32>
    %95 = vector.broadcast %94 : vector<1x512xf32> to vector<32x512xf32>
    %96 = arith.mulf %93, %95 : vector<32x512xf32>
    %c2_67 = arith.constant 2 : index
    %c0_68 = arith.constant 0 : index
    %c0_69 = arith.constant 0 : index
    %97 = vector.load %arg4[%c2_67, %c0_68, %c0_69] : memref<9x8x32xf32, #tpu.memory_space<vmem>>, vector<1x8x32xf32>
    %98 = vector.shape_cast %97 : vector<1x8x32xf32> to vector<8x32xf32>
    %cst_70 = arith.constant dense<0.000000e+00> : vector<8x512xf32>
    %99 = tpu.matmul %98, %96, %cst_70 {dimension_numbers = #tpu.dot_dimension_numbers<[1], [0], [0], [1], [0, 0, 1, 1], [], []>} : vector<8x32xf32>, vector<32x512xf32>, vector<8x512xf32> -> vector<8x512xf32>
    %100 = arith.addf %92, %99 : vector<8x512xf32>
    %c1_i32_71 = arith.constant 1 : i32
    %101 = tpu.dynamic_rotate %75 by %c1_i32_71 dim 1 : vector<32x512xf32>, i32 -> vector<32x512xf32>
    %c3_72 = arith.constant 3 : index
    %c0_73 = arith.constant 0 : index
    %102 = vector.load %arg6[%c3_72, %c0_73] : memref<9x512xf32, #tpu.memory_space<vmem>>, vector<1x512xf32>
    %103 = vector.broadcast %102 : vector<1x512xf32> to vector<32x512xf32>
    %104 = arith.mulf %101, %103 : vector<32x512xf32>
    %c3_74 = arith.constant 3 : index
    %c0_75 = arith.constant 0 : index
    %c0_76 = arith.constant 0 : index
    %105 = vector.load %arg4[%c3_74, %c0_75, %c0_76] : memref<9x8x32xf32, #tpu.memory_space<vmem>>, vector<1x8x32xf32>
    %106 = vector.shape_cast %105 : vector<1x8x32xf32> to vector<8x32xf32>
    %cst_77 = arith.constant dense<0.000000e+00> : vector<8x512xf32>
    %107 = tpu.matmul %106, %104, %cst_77 {dimension_numbers = #tpu.dot_dimension_numbers<[1], [0], [0], [1], [0, 0, 1, 1], [], []>} : vector<8x32xf32>, vector<32x512xf32>, vector<8x512xf32> -> vector<8x512xf32>
    %108 = arith.addf %100, %107 : vector<8x512xf32>
    %c4_78 = arith.constant 4 : index
    %c0_79 = arith.constant 0 : index
    %c0_80 = arith.constant 0 : index
    %109 = vector.load %arg4[%c4_78, %c0_79, %c0_80] : memref<9x8x32xf32, #tpu.memory_space<vmem>>, vector<1x8x32xf32>
    %110 = vector.shape_cast %109 : vector<1x8x32xf32> to vector<8x32xf32>
    %cst_81 = arith.constant dense<0.000000e+00> : vector<8x512xf32>
    %111 = tpu.matmul %110, %75, %cst_81 {dimension_numbers = #tpu.dot_dimension_numbers<[1], [0], [0], [1], [0, 0, 1, 1], [], []>} : vector<8x32xf32>, vector<32x512xf32>, vector<8x512xf32> -> vector<8x512xf32>
    %112 = arith.addf %108, %111 : vector<8x512xf32>
    %c511_i32_82 = arith.constant 511 : i32
    %113 = tpu.dynamic_rotate %75 by %c511_i32_82 dim 1 : vector<32x512xf32>, i32 -> vector<32x512xf32>
    %c5_83 = arith.constant 5 : index
    %c0_84 = arith.constant 0 : index
    %114 = vector.load %arg6[%c5_83, %c0_84] : memref<9x512xf32, #tpu.memory_space<vmem>>, vector<1x512xf32>
    %115 = vector.broadcast %114 : vector<1x512xf32> to vector<32x512xf32>
    %116 = arith.mulf %113, %115 : vector<32x512xf32>
    %c5_85 = arith.constant 5 : index
    %c0_86 = arith.constant 0 : index
    %c0_87 = arith.constant 0 : index
    %117 = vector.load %arg4[%c5_85, %c0_86, %c0_87] : memref<9x8x32xf32, #tpu.memory_space<vmem>>, vector<1x8x32xf32>
    %118 = vector.shape_cast %117 : vector<1x8x32xf32> to vector<8x32xf32>
    %cst_88 = arith.constant dense<0.000000e+00> : vector<8x512xf32>
    %119 = tpu.matmul %118, %116, %cst_88 {dimension_numbers = #tpu.dot_dimension_numbers<[1], [0], [0], [1], [0, 0, 1, 1], [], []>} : vector<8x32xf32>, vector<32x512xf32>, vector<8x512xf32> -> vector<8x512xf32>
    %120 = arith.addf %112, %119 : vector<8x512xf32>
    %c497_i32_89 = arith.constant 497 : i32
    %121 = tpu.dynamic_rotate %75 by %c497_i32_89 dim 1 : vector<32x512xf32>, i32 -> vector<32x512xf32>
    %c6_90 = arith.constant 6 : index
    %c0_91 = arith.constant 0 : index
    %122 = vector.load %arg6[%c6_90, %c0_91] : memref<9x512xf32, #tpu.memory_space<vmem>>, vector<1x512xf32>
    %123 = vector.broadcast %122 : vector<1x512xf32> to vector<32x512xf32>
    %124 = arith.mulf %121, %123 : vector<32x512xf32>
    %c6_92 = arith.constant 6 : index
    %c0_93 = arith.constant 0 : index
    %c0_94 = arith.constant 0 : index
    %125 = vector.load %arg4[%c6_92, %c0_93, %c0_94] : memref<9x8x32xf32, #tpu.memory_space<vmem>>, vector<1x8x32xf32>
    %126 = vector.shape_cast %125 : vector<1x8x32xf32> to vector<8x32xf32>
    %cst_95 = arith.constant dense<0.000000e+00> : vector<8x512xf32>
    %127 = tpu.matmul %126, %124, %cst_95 {dimension_numbers = #tpu.dot_dimension_numbers<[1], [0], [0], [1], [0, 0, 1, 1], [], []>} : vector<8x32xf32>, vector<32x512xf32>, vector<8x512xf32> -> vector<8x512xf32>
    %128 = arith.addf %120, %127 : vector<8x512xf32>
    %c496_i32_96 = arith.constant 496 : i32
    %129 = tpu.dynamic_rotate %75 by %c496_i32_96 dim 1 : vector<32x512xf32>, i32 -> vector<32x512xf32>
    %c7_97 = arith.constant 7 : index
    %c0_98 = arith.constant 0 : index
    %130 = vector.load %arg6[%c7_97, %c0_98] : memref<9x512xf32, #tpu.memory_space<vmem>>, vector<1x512xf32>
    %131 = vector.broadcast %130 : vector<1x512xf32> to vector<32x512xf32>
    %132 = arith.mulf %129, %131 : vector<32x512xf32>
    %c7_99 = arith.constant 7 : index
    %c0_100 = arith.constant 0 : index
    %c0_101 = arith.constant 0 : index
    %133 = vector.load %arg4[%c7_99, %c0_100, %c0_101] : memref<9x8x32xf32, #tpu.memory_space<vmem>>, vector<1x8x32xf32>
    %134 = vector.shape_cast %133 : vector<1x8x32xf32> to vector<8x32xf32>
    %cst_102 = arith.constant dense<0.000000e+00> : vector<8x512xf32>
    %135 = tpu.matmul %134, %132, %cst_102 {dimension_numbers = #tpu.dot_dimension_numbers<[1], [0], [0], [1], [0, 0, 1, 1], [], []>} : vector<8x32xf32>, vector<32x512xf32>, vector<8x512xf32> -> vector<8x512xf32>
    %136 = arith.addf %128, %135 : vector<8x512xf32>
    %c495_i32_103 = arith.constant 495 : i32
    %137 = tpu.dynamic_rotate %75 by %c495_i32_103 dim 1 : vector<32x512xf32>, i32 -> vector<32x512xf32>
    %c8_104 = arith.constant 8 : index
    %c0_105 = arith.constant 0 : index
    %138 = vector.load %arg6[%c8_104, %c0_105] : memref<9x512xf32, #tpu.memory_space<vmem>>, vector<1x512xf32>
    %139 = vector.broadcast %138 : vector<1x512xf32> to vector<32x512xf32>
    %140 = arith.mulf %137, %139 : vector<32x512xf32>
    %c8_106 = arith.constant 8 : index
    %c0_107 = arith.constant 0 : index
    %c0_108 = arith.constant 0 : index
    %141 = vector.load %arg4[%c8_106, %c0_107, %c0_108] : memref<9x8x32xf32, #tpu.memory_space<vmem>>, vector<1x8x32xf32>
    %142 = vector.shape_cast %141 : vector<1x8x32xf32> to vector<8x32xf32>
    %cst_109 = arith.constant dense<0.000000e+00> : vector<8x512xf32>
    %143 = tpu.matmul %142, %140, %cst_109 {dimension_numbers = #tpu.dot_dimension_numbers<[1], [0], [0], [1], [0, 0, 1, 1], [], []>} : vector<8x32xf32>, vector<32x512xf32>, vector<8x512xf32> -> vector<8x512xf32>
    %144 = arith.addf %136, %143 : vector<8x512xf32>
    %c0_110 = arith.constant 0 : index
    %c0_111 = arith.constant 0 : index
    %145 = vector.load %arg5[%c0_110, %c0_111] : memref<8x1xf32, #tpu.memory_space<vmem>>, vector<8x1xf32>
    %146 = vector.broadcast %145 : vector<8x1xf32> to vector<8x512xf32>
    %147 = arith.addf %144, %146 : vector<8x512xf32>
    %cst_112 = arith.constant dense<0xFF800000> : vector<512xf32>
    %148 = vector.multi_reduction <maximumf>, %147, %cst_112 [0] : vector<8x512xf32> to vector<512xf32>
    %149 = vector.shape_cast %148 : vector<512xf32> to vector<1x512xf32>
    %150 = vector.broadcast %149 : vector<1x512xf32> to vector<8x512xf32>
    %151 = arith.subf %147, %150 : vector<8x512xf32>
    %152 = math.exp %151 : vector<8x512xf32>
    %cst_113 = arith.constant dense<0.000000e+00> : vector<512xf32>
    %153 = vector.multi_reduction <add>, %152, %cst_113 [0] : vector<8x512xf32> to vector<512xf32>
    %154 = vector.shape_cast %153 : vector<512xf32> to vector<1x512xf32>
    %155 = vector.broadcast %154 : vector<1x512xf32> to vector<8x512xf32>
    %156 = arith.divf %152, %155 : vector<8x512xf32>
    %c0_114 = arith.constant 0 : index
    %c0_115 = arith.constant 0 : index
    %c0_116 = arith.constant 0 : index
    %157 = vector.load %arg7[%c0_114, %c0_115, %c0_116] : memref<1x8x512xf32, #tpu.memory_space<vmem>>, vector<1x8x512xf32>
    %158 = vector.shape_cast %157 : vector<1x8x512xf32> to vector<8x512xf32>
    %159 = vector.shape_cast %147 : vector<8x512xf32> to vector<1x8x512xf32>
    tpu.vector_store %arg7[%c0_114, %c0_115, %c0_116], %159 {strides = array<i32>} : memref<1x8x512xf32, #tpu.memory_space<vmem>>, vector<1x8x512xf32>,
    %c0_117 = arith.constant 0 : index
    %c0_118 = arith.constant 0 : index
    %c0_119 = arith.constant 0 : index
    %160 = vector.load %arg8[%c0_117, %c0_118, %c0_119] : memref<1x8x512xf32, #tpu.memory_space<vmem>>, vector<1x8x512xf32>
    %161 = vector.shape_cast %160 : vector<1x8x512xf32> to vector<8x512xf32>
    %162 = vector.shape_cast %156 : vector<8x512xf32> to vector<1x8x512xf32>
    tpu.vector_store %arg8[%c0_117, %c0_118, %c0_119], %162 {strides = array<i32>} : memref<1x8x512xf32, #tpu.memory_space<vmem>>, vector<1x8x512xf32>,
    return
  }
  func.func @transform_0(%arg0: i32) -> (i32, i32, i32) {
    %c0_i32 = arith.constant 0 : i32
    %c0_i32_0 = arith.constant 0 : i32
    %c0_i32_1 = arith.constant 0 : i32
    return %arg0, %c0_i32, %c0_i32_0 : i32, i32, i32
  }
  func.func @transform_1(%arg0: i32) -> (i32, i32, i32) {
    %c0_i32 = arith.constant 0 : i32
    %c0_i32_0 = arith.constant 0 : i32
    %c0_i32_1 = arith.constant 0 : i32
    %c0_i32_2 = arith.constant 0 : i32
    return %c0_i32, %c0_i32_0, %c0_i32_1 : i32, i32, i32
  }
  func.func @transform_2(%arg0: i32) -> (i32, i32) {
    %c0_i32 = arith.constant 0 : i32
    %c0_i32_0 = arith.constant 0 : i32
    %c0_i32_1 = arith.constant 0 : i32
    return %c0_i32, %c0_i32_0 : i32, i32
  }
  func.func @transform_3(%arg0: i32) -> (i32, i32, i32) {
    %c0_i32 = arith.constant 0 : i32
    %c0_i32_0 = arith.constant 0 : i32
    %c0_i32_1 = arith.constant 0 : i32
    %c0_i32_2 = arith.constant 0 : i32
    return %c0_i32, %c0_i32_0, %c0_i32_1 : i32, i32, i32
  }
  func.func @transform_4(%arg0: i32) -> (i32, i32) {
    %c0_i32 = arith.constant 0 : i32
    %c0_i32_0 = arith.constant 0 : i32
    %c0_i32_1 = arith.constant 0 : i32
    return %c0_i32, %c0_i32_0 : i32, i32
  }
  func.func @transform_5(%arg0: i32) -> (i32, i32) {
    %c0_i32 = arith.constant 0 : i32
    %c0_i32_0 = arith.constant 0 : i32
    %c0_i32_1 = arith.constant 0 : i32
    return %c0_i32, %c0_i32_0 : i32, i32
  }
  func.func @transform_6(%arg0: i32) -> (i32, i32, i32) {
    %c0_i32 = arith.constant 0 : i32
    %c0_i32_0 = arith.constant 0 : i32
    %c0_i32_1 = arith.constant 0 : i32
    return %arg0, %c0_i32, %c0_i32_0 : i32, i32, i32
  }
  func.func @transform_7(%arg0: i32) -> (i32, i32, i32) {
    %c0_i32 = arith.constant 0 : i32
    %c0_i32_0 = arith.constant 0 : i32
    %c0_i32_1 = arith.constant 0 : i32
    return %arg0, %c0_i32, %c0_i32_0 : i32, i32, i32
  }
}

</mosaic_0001>

<llo_original>
// kernel: tpu_custom_call.1
$region0: #{tpu_custom_call.1}
  #allocation0 [shape = 'u32[]', space=smem, size = 0x4, offset = 0x4, fixed_abs, tag = 'smem constant byte address 0x4 - core index']
  #allocation1 [shape = 'u32[144,128]{1,0:T(1,128)}', space=vmem, size = 0x12000, scoped, tag = 'internal scratch']
  %s0 = inlined_call_operand.hbm [shape: f32[2,32,512], index: 0, kind: input, shape index: {}]
  %s1 = inlined_call_operand.hbm [shape: f32[9,32,32], index: 1, kind: input, shape index: {}]
  %s2 = inlined_call_operand.vmem [shape: f32[32,1], index: 2, kind: input, shape index: {}]
  %s3 = inlined_call_operand.hbm [shape: f32[9,8,32], index: 3, kind: input, shape index: {}]
  %s4 = inlined_call_operand.vmem [shape: f32[8,1], index: 4, kind: input, shape index: {}]
  %s5 = inlined_call_operand.hbm [shape: f32[9,512], index: 5, kind: input, shape index: {}]
  %s6 = inlined_call_operand.hbm [shape: f32[2,8,512], index: 6, kind: output, shape index: {0}]
  %s7 = inlined_call_operand.hbm [shape: f32[2,8,512], index: 7, kind: output, shape index: {1}]
  %8 = xla_tuple %s6, %s7
  %s9 = sld [smem:[#allocation0]]
  $region81: #{tpu_custom_call.1} parent=0
    _
  %s11 = ssub.s32 1, %s9
  %s12 = scalar_select 0, %s11, %s9
  $region1: #{tpu_custom_call.1} parent=0
    #allocation2 [shape = 'u8[131072]{0}', space=vmem, size = 0x20000, scoped, tag = 'input window, operand 0']
    #allocation3 [shape = 's32[2]{0}', space=sflag, size = 0x8, scoped, tag = 'scoped memory for tpu_custom_call.1']
    #allocation4 [shape = 's32[2]{0}', space=sflag, size = 0x8, scoped, tag = 'scoped memory for tpu_custom_call.1']
    #allocation5 [shape = 'u8[147456]{0}', space=vmem, size = 0x24000, scoped, tag = 'input window, operand 1, single buffered']
    #allocation6 [shape = 's32[1]{0}', space=sflag, size = 0x4, scoped, tag = 'scoped memory for tpu_custom_call.1']
    #allocation7 [shape = 'u8[36864]{0}', space=vmem, size = 0x9000, scoped, tag = 'input window, operand 3, single buffered']
    #allocation8 [shape = 'u8[32768]{0}', space=vmem, size = 0x8000, scoped, tag = 'input window, operand 5, single buffered']
    #allocation9 [shape = 's32[1]{0}', space=sflag, size = 0x4, scoped, tag = 'scoped memory for tpu_custom_call.1']
    #allocation10 [shape = 'u8[32768]{0}', space=vmem, size = 0x8000, scoped, tag = 'output window, operand 0']
    #allocation11 [shape = 'u8[32768]{0}', space=vmem, size = 0x8000, scoped, tag = 'output window, operand 1']
    #allocation12 [shape = 's32[2]{0}', space=sflag, size = 0x8, scoped, tag = 'scoped memory for tpu_custom_call.1']
    %13 = vsyncpa [#allocation3], 0
    %s14 = scalar_lea.sflag [#allocation3], 1
    %15 = vsyncpa %s14, 0
    %16 = vsyncpa [#allocation6], 0
    %17 = vsyncpa [#allocation9], 0
    %18 = vsyncpa [#allocation4], 0
    %s19 = scalar_lea.sflag [#allocation4], 1
    %20 = vsyncpa %s19, 0
    %21 = vsyncpa [#allocation12], 0
    %s22 = scalar_lea.sflag [#allocation12], 1
    %23 = vsyncpa %s22, 0
    loop: start=0, step=1, limit=4
    $region2: #{tpu_custom_call.1} parent=1 // loop_pre_header
      _
    $region3: #{tpu_custom_call.1} parent=1 // loop_header
      %s25 = sphi 0, %s29
      %p26 = scmp.ge.s32.totalorder %s25, 4
      %s35 = sphi 0, %s37
      %s38 = sphi 0, %s35
      %s39 = sphi 0, %s38
      %s55 = sphi 0, %s39
      %s59 = sphi 0, %s59
      %s61 = sphi 0, %s59
      %s62 = sphi 0, %s61
      %s76 = sphi 0, %s62
      %s80 = sphi 0, %s80
      %s82 = sphi 0, %s80
      %s83 = sphi 0, %s82
      %s97 = sphi 0, %s83
      %s101 = sphi 0, %s101
      %s103 = sphi 0, %s101
      %s104 = sphi 0, %s103
      %s118 = sphi 0, %s104
      %s122 = sphi 0, %s122
      %s124 = sphi 0, %s122
      %s125 = sphi 0, %s124
      %s139 = sphi 0, %s125
      %s143 = sphi 0, %s143
      %s145 = sphi 0, %s143
      %s146 = sphi 0, %s145
      %s160 = sphi 0, %s146
      %s166 = sphi 0, %s168
      %s169 = sphi 0, %s166
      %s170 = sphi 0, %s169
      %s186 = sphi 0, %s170
      %s192 = sphi 0, %s194
      %s195 = sphi 0, %s192
      %s196 = sphi 0, %s195
      %s212 = sphi 0, %s196
    $region4: #{tpu_custom_call.1} parent=1 // loop_header_branch
      %28 = sbr.rel (%p26) target = $region8
    $region5: #{tpu_custom_call.1} parent=1 // loop_body
      %s30 = ssub.s32 %s25, 1
      %s31 = ssub.s32 %s25, 2
      %s32 = sadd.s32 %s25, 1
      %s33 = ssub.s32 %s25, %s32
      %p34 = scmp.eq.s32.totalorder %s33, 0
      %s36 = sadd.s32 %s35, 1
      %s37 = scalar_select %p34, %s35, %s36
      %p40 = pneg %p34
      %p41 = scmp.eq.s32.totalorder %s25, 1
      %p42 = por %p40, %p41
      %p43 = scmp.ne.s32.totalorder %s35, %s38
      %p44 = scmp.eq.s32.totalorder %s25, 0
      %p45 = por %p43, %p44
      %p46 = scmp.ne.s32.totalorder %s35, %s38
      %p47 = scmp.eq.s32.totalorder %s30, 1
      %p48 = por %p46, %p47
      %p49 = scmp.ne.s32.totalorder %s38, %s39
      %p50 = scmp.eq.s32.totalorder %s30, 0
      %p51 = por %p49, %p50
      %p52 = scmp.ne.s32.totalorder %s38, %s39
      %p53 = scmp.eq.s32.totalorder %s31, 1
      %p54 = por %p52, %p53
      %p56 = scmp.ne.s32.totalorder %s39, %s55
      %p57 = scmp.eq.s32.totalorder %s31, 0
      %p58 = por %p56, %p57
      %s60 = sadd.s32 %s59, 1
      %p63 = scmp.eq.s32.totalorder %s25, 1
      %p64 = scmp.ne.s32.totalorder %s59, %s61
      %p65 = scmp.eq.s32.totalorder %s25, 0
      %p66 = por %p64, %p65
      %p67 = scmp.ne.s32.totalorder %s59, %s61
      %p68 = scmp.eq.s32.totalorder %s30, 1
      %p69 = por %p67, %p68
      %p70 = scmp.ne.s32.totalorder %s61, %s62
      %p71 = scmp.eq.s32.totalorder %s30, 0
      %p72 = por %p70, %p71
      %p73 = scmp.ne.s32.totalorder %s61, %s62
      %p74 = scmp.eq.s32.totalorder %s31, 1
      %p75 = por %p73, %p74
      %p77 = scmp.ne.s32.totalorder %s62, %s76
      %p78 = scmp.eq.s32.totalorder %s31, 0
      %p79 = por %p77, %p78
      %s81 = sadd.s32 %s80, 1
      %p84 = scmp.eq.s32.totalorder %s25, 1
      %p85 = scmp.ne.s32.totalorder %s80, %s82
      %p86 = scmp.eq.s32.totalorder %s25, 0
      %p87 = por %p85, %p86
      %p88 = scmp.ne.s32.totalorder %s80, %s82
      %p89 = scmp.eq.s32.totalorder %s30, 1
      %p90 = por %p88, %p89
      %p91 = scmp.ne.s32.totalorder %s82, %s83
      %p92 = scmp.eq.s32.totalorder %s30, 0
      %p93 = por %p91, %p92
      %p94 = scmp.ne.s32.totalorder %s82, %s83
      %p95 = scmp.eq.s32.totalorder %s31, 1
      %p96 = por %p94, %p95
      %p98 = scmp.ne.s32.totalorder %s83, %s97
      %p99 = scmp.eq.s32.totalorder %s31, 0
      %p100 = por %p98, %p99
      %s102 = sadd.s32 %s101, 1
      %p105 = scmp.eq.s32.totalorder %s25, 1
      %p106 = scmp.ne.s32.totalorder %s101, %s103
      %p107 = scmp.eq.s32.totalorder %s25, 0
      %p108 = por %p106, %p107
      %p109 = scmp.ne.s32.totalorder %s101, %s103
      %p110 = scmp.eq.s32.totalorder %s30, 1
      %p111 = por %p109, %p110
      %p112 = scmp.ne.s32.totalorder %s103, %s104
      %p113 = scmp.eq.s32.totalorder %s30, 0
      %p114 = por %p112, %p113
      %p115 = scmp.ne.s32.totalorder %s103, %s104
      %p116 = scmp.eq.s32.totalorder %s31, 1
      %p117 = por %p115, %p116
      %p119 = scmp.ne.s32.totalorder %s104, %s118
      %p120 = scmp.eq.s32.totalorder %s31, 0
      %p121 = por %p119, %p120
      %s123 = sadd.s32 %s122, 1
      %p126 = scmp.eq.s32.totalorder %s25, 1
      %p127 = scmp.ne.s32.totalorder %s122, %s124
      %p128 = scmp.eq.s32.totalorder %s25, 0
      %p129 = por %p127, %p128
      %p130 = scmp.ne.s32.totalorder %s122, %s124
      %p131 = scmp.eq.s32.totalorder %s30, 1
      %p132 = por %p130, %p131
      %p133 = scmp.ne.s32.totalorder %s124, %s125
      %p134 = scmp.eq.s32.totalorder %s30, 0
      %p135 = por %p133, %p134
      %p136 = scmp.ne.s32.totalorder %s124, %s125
      %p137 = scmp.eq.s32.totalorder %s31, 1
      %p138 = por %p136, %p137
      %p140 = scmp.ne.s32.totalorder %s125, %s139
      %p141 = scmp.eq.s32.totalorder %s31, 0
      %p142 = por %p140, %p141
      %s144 = sadd.s32 %s143, 1
      %p147 = scmp.eq.s32.totalorder %s25, 1
      %p148 = scmp.ne.s32.totalorder %s143, %s145
      %p149 = scmp.eq.s32.totalorder %s25, 0
      %p150 = por %p148, %p149
      %p151 = scmp.ne.s32.totalorder %s143, %s145
      %p152 = scmp.eq.s32.totalorder %s30, 1
      %p153 = por %p151, %p152
      %p154 = scmp.ne.s32.totalorder %s145, %s146
      %p155 = scmp.eq.s32.totalorder %s30, 0
      %p156 = por %p154, %p155
      %p157 = scmp.ne.s32.totalorder %s145, %s146
      %p158 = scmp.eq.s32.totalorder %s31, 1
      %p159 = por %p157, %p158
      %p161 = scmp.ne.s32.totalorder %s146, %s160
      %p162 = scmp.eq.s32.totalorder %s31, 0
      %p163 = por %p161, %p162
      %s164 = ssub.s32 %s25, %s32
      %p165 = scmp.eq.s32.totalorder %s164, 0
      %s167 = sadd.s32 %s166, 1
      %s168 = scalar_select %p165, %s166, %s167
      %p171 = pneg %p165
      %p172 = scmp.eq.s32.totalorder %s25, 1
      %p173 = por %p171, %p172
      %p174 = scmp.ne.s32.totalorder %s166, %s169
      %p175 = scmp.eq.s32.totalorder %s25, 0
      %p176 = por %p174, %p175
      %p177 = scmp.ne.s32.totalorder %s166, %s169
      %p178 = scmp.eq.s32.totalorder %s30, 1
      %p179 = por %p177, %p178
      %p180 = scmp.ne.s32.totalorder %s169, %s170
      %p181 = scmp.eq.s32.totalorder %s30, 0
      %p182 = por %p180, %p181
      %p183 = scmp.ne.s32.totalorder %s169, %s170
      %p184 = scmp.eq.s32.totalorder %s31, 1
      %p185 = por %p183, %p184
      %p187 = scmp.ne.s32.totalorder %s170, %s186
      %p188 = scmp.eq.s32.totalorder %s31, 0
      %p189 = por %p187, %p188
      %s190 = ssub.s32 %s25, %s32
      %p191 = scmp.eq.s32.totalorder %s190, 0
      %s193 = sadd.s32 %s192, 1
      %s194 = scalar_select %p191, %s192, %s193
      %p197 = pneg %p191
      %p198 = scmp.eq.s32.totalorder %s25, 1
      %p199 = por %p197, %p198
      %p200 = scmp.ne.s32.totalorder %s192, %s195
      %p201 = scmp.eq.s32.totalorder %s25, 0
      %p202 = por %p200, %p201
      %p203 = scmp.ne.s32.totalorder %s192, %s195
      %p204 = scmp.eq.s32.totalorder %s30, 1
      %p205 = por %p203, %p204
      %p206 = scmp.ne.s32.totalorder %s195, %s196
      %p207 = scmp.eq.s32.totalorder %s30, 0
      %p208 = por %p206, %p207
      %p209 = scmp.ne.s32.totalorder %s195, %s196
      %p210 = scmp.eq.s32.totalorder %s31, 1
      %p211 = por %p209, %p210
      %p213 = scmp.ne.s32.totalorder %s196, %s212
      %p214 = scmp.eq.s32.totalorder %s31, 0
      %p215 = por %p213, %p214
      %p216 = scmp.le.s32.totalorder 1, %s25
      %p217 = scmp.lt.s32.totalorder %s25, 3
      %p218 = pnand %p216, %p217
      %p219 = pneg %p218
      // Predicated region
      $region9: #{tpu_custom_call.1} parent=5 // pred_check
        _
      $region10: #{tpu_custom_call.1} parent=5 // pred_check_branch
        %221 = sbr.rel (%p218) target = $region12
      $region11: #{tpu_custom_call.1} parent=5 // pred_region
        %s222 = ssub.s32 %s25, 1
        // Predicated region
        $region13: #{tpu_custom_call.1} parent=11 // pred_check
          %p223 = pneg %p72
        $region14: #{tpu_custom_call.1} parent=11 // pred_check_branch
          %225 = sbr.rel (%p223) target = $region16
        $region15: #{tpu_custom_call.1} parent=11 // pred_region
          %s227 = ssub.s32 4608, 4608
          %228 = vsyncadd [#allocation6], %s227
          %s229 = sshll.u32 [#allocation5], 4
          %s230 = int_to_ptr.vmem [resolvable:$true] %s229
          %235 = dma.hbm_to_vmem [thread:$0]  %s1, 4608, %s230, [#allocation6], 128, 128, 8
        $region16: #{tpu_custom_call.1} parent=11 // pred_fallthru
          _
        // Predicated region
        $region17: #{tpu_custom_call.1} parent=11 // pred_check
          %p236 = pneg %p93
        $region18: #{tpu_custom_call.1} parent=11 // pred_check_branch
          %238 = sbr.rel (%p236) target = $region20
        $region19: #{tpu_custom_call.1} parent=11 // pred_region
          _
        $region20: #{tpu_custom_call.1} parent=11 // pred_fallthru
          _
        // Predicated region
        $region21: #{tpu_custom_call.1} parent=11 // pred_check
          %p239 = pneg %p114
        $region22: #{tpu_custom_call.1} parent=11 // pred_check_branch
          %241 = sbr.rel (%p239) target = $region24
        $region23: #{tpu_custom_call.1} parent=11 // pred_region
          %s243 = ssub.s32 1152, 1152
          %244 = vsyncadd [#allocation6], %s243
          %s245 = sshll.u32 [#allocation7], 4
          %s246 = int_to_ptr.vmem [resolvable:$true] %s245
          %251 = dma.hbm_to_vmem [thread:$0]  %s3, 1152, %s246, [#allocation6], 128, 128, 8
        $region24: #{tpu_custom_call.1} parent=11 // pred_fallthru
          _
        // Predicated region
        $region25: #{tpu_custom_call.1} parent=11 // pred_check
          %p252 = pneg %p135
        $region26: #{tpu_custom_call.1} parent=11 // pred_check_branch
          %254 = sbr.rel (%p252) target = $region28
        $region27: #{tpu_custom_call.1} parent=11 // pred_region
          _
        $region28: #{tpu_custom_call.1} parent=11 // pred_fallthru
          _
        // Predicated region
        $region29: #{tpu_custom_call.1} parent=11 // pred_check
          %p255 = pneg %p156
        $region30: #{tpu_custom_call.1} parent=11 // pred_check_branch
          %257 = sbr.rel (%p255) target = $region32
        $region31: #{tpu_custom_call.1} parent=11 // pred_region
          %s259 = ssub.s32 1024, 1024
          %260 = vsyncadd [#allocation9], %s259
          %s261 = sshll.u32 [#allocation8], 4
          %s262 = int_to_ptr.vmem [resolvable:$true] %s261
          %267 = dma.hbm_to_vmem [thread:$0]  %s5, 1024, %s262, [#allocation9], 512, 512, 32
        $region32: #{tpu_custom_call.1} parent=11 // pred_fallthru
          _
      $region12: #{tpu_custom_call.1} parent=5 // pred_fallthru
        _
      %p268 = scmp.lt.s32.totalorder %s25, 2
      // Predicated region
      $region33: #{tpu_custom_call.1} parent=5 // pred_check
        %p269 = pneg %p268
      $region34: #{tpu_custom_call.1} parent=5 // pred_check_branch
        %271 = sbr.rel (%p269) target = $region36
      $region35: #{tpu_custom_call.1} parent=5 // pred_region
        // Predicated region
        $region37: #{tpu_custom_call.1} parent=35 // pred_check
          %p272 = pneg %p45
        $region38: #{tpu_custom_call.1} parent=35 // pred_check_branch
          %274 = sbr.rel (%p272) target = $region40
        $region39: #{tpu_custom_call.1} parent=35 // pred_region
          %s275 = sand.u32 %s35, 1
          %s276 = scalar_lea.sflag [#allocation3], %s275
          %s277 = sand.u32 %s35, 1
          %s278 = smul.addr %s277, 128
          %s279 = scalar_lea.vmem [#allocation2], %s278
          %s281 = ssub.s32 2048, 2048
          %282 = vsyncadd %s276, %s281
          %s283 = smul.addr %s25, 16
          %s284 = smul.addr %s283, 128
          %s285 = scalar_lea.hbm %s0, %s284
          %s286 = sshll.u32 %s279, 4
          %s287 = int_to_ptr.vmem [resolvable:$true] %s286
          %292 = dma.hbm_to_vmem [thread:$0]  %s285, 2048, %s287, %s276, 512, 512, 32
        $region40: #{tpu_custom_call.1} parent=35 // pred_fallthru
          _
      $region36: #{tpu_custom_call.1} parent=5 // pred_fallthru
        _
      %p293 = scmp.le.s32.totalorder 1, %s25
      %p294 = scmp.lt.s32.totalorder %s25, 3
      %p295 = pnand %p293, %p294
      %p296 = pneg %p295
      // Predicated region
      $region41: #{tpu_custom_call.1} parent=5 // pred_check
        _
      $region42: #{tpu_custom_call.1} parent=5 // pred_check_branch
        %298 = sbr.rel (%p295) target = $region44
      $region43: #{tpu_custom_call.1} parent=5 // pred_region
        %s299 = ssub.s32 %s25, 1
        %s300 = sand.u32 %s38, 1
        %s301 = scalar_lea.sflag [#allocation3], %s300
        %s302 = sand.u32 %s38, 1
        %s303 = smul.addr %s302, 128
        %s304 = scalar_lea.vmem [#allocation2], %s303
        // Predicated region
        $region45: #{tpu_custom_call.1} parent=43 // pred_check
          %p305 = pneg %p51
        $region46: #{tpu_custom_call.1} parent=43 // pred_check_branch
          %307 = sbr.rel (%p305) target = $region48
        $region47: #{tpu_custom_call.1} parent=43 // pred_region
          %308 = dma.done %s301, 2048
        $region48: #{tpu_custom_call.1} parent=43 // pred_fallthru
          _
        // Predicated region
        $region49: #{tpu_custom_call.1} parent=43 // pred_check
          %p309 = pneg %p72
        $region50: #{tpu_custom_call.1} parent=43 // pred_check_branch
          %311 = sbr.rel (%p309) target = $region52
        $region51: #{tpu_custom_call.1} parent=43 // pred_region
          %312 = dma.done [#allocation6], 4608
        $region52: #{tpu_custom_call.1} parent=43 // pred_fallthru
          _
        // Predicated region
        $region53: #{tpu_custom_call.1} parent=43 // pred_check
          %p313 = pneg %p114
        $region54: #{tpu_custom_call.1} parent=43 // pred_check_branch
          %315 = sbr.rel (%p313) target = $region56
        $region55: #{tpu_custom_call.1} parent=43 // pred_region
          %316 = dma.done [#allocation6], 1152
        $region56: #{tpu_custom_call.1} parent=43 // pred_fallthru
          _
        // Predicated region
        $region57: #{tpu_custom_call.1} parent=43 // pred_check
          %p317 = pneg %p156
        $region58: #{tpu_custom_call.1} parent=43 // pred_check_branch
          %319 = sbr.rel (%p317) target = $region60
        $region59: #{tpu_custom_call.1} parent=43 // pred_region
          %320 = dma.done [#allocation9], 1024
        $region60: #{tpu_custom_call.1} parent=43 // pred_fallthru
          _
        %s321 = sand.u32 %s38, 1
        %s322 = scalar_lea.sflag [#allocation3], %s321
        %s323 = sand.u32 %s38, 1
        %s324 = smul.addr %s323, 128
        %s325 = scalar_lea.vmem [#allocation2], %s324
        %p326 = pneg %p51
        %p327 = pneg %p48
        %p328 = pneg %p72
        %p329 = pneg %p69
        %p330 = pneg %p93
        %p331 = pneg %p90
        %p332 = pneg %p114
        %p333 = pneg %p111
        %p334 = pneg %p135
        %p335 = pneg %p132
        %p336 = pneg %p156
        %p337 = pneg %p153
        %p338 = pneg %p182
        %p339 = pneg %p179
        %s340 = sand.u32 %s169, 1
        %s341 = scalar_lea.sflag [#allocation4], %s340
        %s342 = sand.u32 %s169, 1
        %s343 = smul.addr %s342, 32
        %s344 = scalar_lea.vmem [#allocation10], %s343
        %p345 = pneg %p208
        %p346 = pneg %p205
        %s347 = sand.u32 %s195, 1
        %s348 = scalar_lea.sflag [#allocation12], %s347
        %s349 = sand.u32 %s195, 1
        %s350 = smul.addr %s349, 32
        %s351 = scalar_lea.vmem [#allocation11], %s350
        %v352 = vld [vmem:[%s304] sm:$0xff]
        %v353 = vld [vmem:[%s304 + $0x8] sm:$0xff]
        %v354 = vld [vmem:[%s304 + $0x10] sm:$0xff]
        %v355 = vld [vmem:[%s304 + $0x18] sm:$0xff]
        %v356 = vld [vmem:[%s304 + $0x20] sm:$0xff]
        %v357 = vld [vmem:[%s304 + $0x28] sm:$0xff]
        %v358 = vld [vmem:[%s304 + $0x30] sm:$0xff]
        %v359 = vld [vmem:[%s304 + $0x38] sm:$0xff]
        %v360 = vld [vmem:[%s304 + $0x40] sm:$0xff]
        %v361 = vld [vmem:[%s304 + $0x48] sm:$0xff]
        %v362 = vld [vmem:[%s304 + $0x50] sm:$0xff]
        %v363 = vld [vmem:[%s304 + $0x58] sm:$0xff]
        %v364 = vld [vmem:[%s304 + $0x60] sm:$0xff]
        %v365 = vld [vmem:[%s304 + $0x68] sm:$0xff]
        %v366 = vld [vmem:[%s304 + $0x70] sm:$0xff]
        %v367 = vld [vmem:[%s304 + $0x78] sm:$0xff]
        %368 = vrot.lane.b32.xlu0 %v352, 17
        %v369 = vpop.permute.xlu0 %368
        %370 = vrot.lane.b32.xlu0 %v356, 17
        %v371 = vpop.permute.xlu0 %370
        %372 = vrot.lane.b32.xlu0 %v360, 17
        %v373 = vpop.permute.xlu0 %372
        %374 = vrot.lane.b32.xlu0 %v364, 17
        %v375 = vpop.permute.xlu0 %374
        %376 = vrot.lane.b32.xlu0 %v353, 17
        %v377 = vpop.permute.xlu0 %376
        %378 = vrot.lane.b32.xlu0 %v357, 17
        %v379 = vpop.permute.xlu0 %378
        %380 = vrot.lane.b32.xlu0 %v361, 17
        %v381 = vpop.permute.xlu0 %380
        %382 = vrot.lane.b32.xlu0 %v365, 17
        %v383 = vpop.permute.xlu0 %382
        %384 = vrot.lane.b32.xlu0 %v354, 17
        %v385 = vpop.permute.xlu0 %384
        %386 = vrot.lane.b32.xlu0 %v358, 17
        %v387 = vpop.permute.xlu0 %386
        %388 = vrot.lane.b32.xlu0 %v362, 17
        %v389 = vpop.permute.xlu0 %388
        %390 = vrot.lane.b32.xlu0 %v366, 17
        %v391 = vpop.permute.xlu0 %390
        %392 = vrot.lane.b32.xlu0 %v355, 17
        %v393 = vpop.permute.xlu0 %392
        %394 = vrot.lane.b32.xlu0 %v359, 17
        %v395 = vpop.permute.xlu0 %394
        %396 = vrot.lane.b32.xlu0 %v363, 17
        %v397 = vpop.permute.xlu0 %396
        %398 = vrot.lane.b32.xlu0 %v367, 17
        %v399 = vpop.permute.xlu0 %398
        %v400 = vlaneseq
        %v401 = vand.u32 %v400, 127
        %vm402 = vcmp.lt.s32.totalorder %v401, 17
        %v403 = vsel %vm402, %v385, %v393
        %v404 = vsel %vm402, %v387, %v395
        %v405 = vsel %vm402, %v389, %v397
        %v406 = vsel %vm402, %v391, %v399
        %v407 = vsel %vm402, %v377, %v385
        %v408 = vsel %vm402, %v379, %v387
        %v409 = vsel %vm402, %v381, %v389
        %v410 = vsel %vm402, %v383, %v391
        %v411 = vsel %vm402, %v369, %v377
        %v412 = vsel %vm402, %v371, %v379
        %v413 = vsel %vm402, %v373, %v381
        %v414 = vsel %vm402, %v375, %v383
        %v415 = vsel %vm402, %v393, %v369
        %v416 = vsel %vm402, %v395, %v371
        %v417 = vsel %vm402, %v397, %v373
        %v418 = vsel %vm402, %v399, %v375
        %v419 = vld [vmem:[#allocation8] ss:$8 sm:$0xf]
        %v421 = vlaneseq
        %v422 = vshrl.u32 %v421, 7
        %v423 = vsub.s32 0, %v422
        %v424 = vrot.slane %v419, %v423
        %v425 = vlaneseq
        %v426 = vshrl.u32 %v425, 7
        %v427 = vsub.s32 1, %v426
        %v428 = vrot.slane %v419, %v427
        %v429 = vlaneseq
        %v430 = vshrl.u32 %v429, 7
        %v431 = vsub.s32 2, %v430
        %v432 = vrot.slane %v419, %v431
        %v433 = vlaneseq
        %v434 = vshrl.u32 %v433, 7
        %v435 = vsub.s32 3, %v434
        %v436 = vrot.slane %v419, %v435
        %v441 = vmul.f32 %v415, %v424
        %v442 = vmul.f32 %v411, %v428
        %v443 = vmul.f32 %v407, %v432
        %v444 = vmul.f32 %v403, %v436
        %v445 = vmul.f32 %v416, %v424
        %v446 = vmul.f32 %v412, %v428
        %v447 = vmul.f32 %v408, %v432
        %v448 = vmul.f32 %v404, %v436
        %v449 = vmul.f32 %v417, %v424
        %v450 = vmul.f32 %v413, %v428
        %v451 = vmul.f32 %v409, %v432
        %v452 = vmul.f32 %v405, %v436
        %v453 = vmul.f32 %v418, %v424
        %v454 = vmul.f32 %v414, %v428
        %v455 = vmul.f32 %v410, %v432
        %v456 = vmul.f32 %v406, %v436
        %v457 = vld [vmem:[#allocation5] sm:$0xff]
        %v458 = vld [vmem:[#allocation5 + $0x8] sm:$0xff]
        %v459 = vld [vmem:[#allocation5 + $0x10] sm:$0xff]
        %v460 = vld [vmem:[#allocation5 + $0x18] sm:$0xff]
        %461 = vrot.lane.b32.xlu0 %v352, 16
        %v462 = vpop.permute.xlu0 %461
        %463 = vrot.lane.b32.xlu0 %v356, 16
        %v464 = vpop.permute.xlu0 %463
        %465 = vrot.lane.b32.xlu0 %v360, 16
        %v466 = vpop.permute.xlu0 %465
        %467 = vrot.lane.b32.xlu0 %v364, 16
        %v468 = vpop.permute.xlu0 %467
        %469 = vrot.lane.b32.xlu0 %v353, 16
        %v470 = vpop.permute.xlu0 %469
        %471 = vrot.lane.b32.xlu0 %v357, 16
        %v472 = vpop.permute.xlu0 %471
        %473 = vrot.lane.b32.xlu0 %v361, 16
        %v474 = vpop.permute.xlu0 %473
        %475 = vrot.lane.b32.xlu0 %v365, 16
        %v476 = vpop.permute.xlu0 %475
        %477 = vrot.lane.b32.xlu0 %v354, 16
        %v478 = vpop.permute.xlu0 %477
        %479 = vrot.lane.b32.xlu0 %v358, 16
        %v480 = vpop.permute.xlu0 %479
        %481 = vrot.lane.b32.xlu0 %v362, 16
        %v482 = vpop.permute.xlu0 %481
        %483 = vrot.lane.b32.xlu0 %v366, 16
        %v484 = vpop.permute.xlu0 %483
        %485 = vrot.lane.b32.xlu0 %v355, 16
        %v486 = vpop.permute.xlu0 %485
        %487 = vrot.lane.b32.xlu0 %v359, 16
        %v488 = vpop.permute.xlu0 %487
        %489 = vrot.lane.b32.xlu0 %v363, 16
        %v490 = vpop.permute.xlu0 %489
        %491 = vrot.lane.b32.xlu0 %v367, 16
        %v492 = vpop.permute.xlu0 %491
        %vm493 = vcmp.lt.s32.totalorder %v401, 16
        %v494 = vsel %vm493, %v478, %v486
        %v495 = vsel %vm493, %v480, %v488
        %v496 = vsel %vm493, %v482, %v490
        %v497 = vsel %vm493, %v484, %v492
        %v498 = vsel %vm493, %v470, %v478
        %v499 = vsel %vm493, %v472, %v480
        %v500 = vsel %vm493, %v474, %v482
        %v501 = vsel %vm493, %v476, %v484
        %v502 = vsel %vm493, %v462, %v470
        %v503 = vsel %vm493, %v464, %v472
        %v504 = vsel %vm493, %v466, %v474
        %v505 = vsel %vm493, %v468, %v476
        %v506 = vsel %vm493, %v486, %v462
        %v507 = vsel %vm493, %v488, %v464
        %v508 = vsel %vm493, %v490, %v466
        %v509 = vsel %vm493, %v492, %v468
        %s510 = scalar_lea.vmem [#allocation8], 1
        %v511 = vld [vmem:[%s510] ss:$8 sm:$0xf]
        %v513 = vlaneseq
        %v514 = vshrl.u32 %v513, 7
        %v515 = vsub.s32 0, %v514
        %v516 = vrot.slane %v511, %v515
        %v517 = vlaneseq
        %v518 = vshrl.u32 %v517, 7
        %v519 = vsub.s32 1, %v518
        %v520 = vrot.slane %v511, %v519
        %v521 = vlaneseq
        %v522 = vshrl.u32 %v521, 7
        %v523 = vsub.s32 2, %v522
        %v524 = vrot.slane %v511, %v523
        %v525 = vlaneseq
        %v526 = vshrl.u32 %v525, 7
        %v527 = vsub.s32 3, %v526
        %v528 = vrot.slane %v511, %v527
        %v533 = vmul.f32 %v506, %v516
        %v534 = vmul.f32 %v502, %v520
        %v535 = vmul.f32 %v498, %v524
        %v536 = vmul.f32 %v494, %v528
        %v537 = vmul.f32 %v507, %v516
        %v538 = vmul.f32 %v503, %v520
        %v539 = vmul.f32 %v499, %v524
        %v540 = vmul.f32 %v495, %v528
        %v541 = vmul.f32 %v508, %v516
        %v542 = vmul.f32 %v504, %v520
        %v543 = vmul.f32 %v500, %v524
        %v544 = vmul.f32 %v496, %v528
        %v545 = vmul.f32 %v509, %v516
        %v546 = vmul.f32 %v505, %v520
        %v547 = vmul.f32 %v501, %v524
        %v548 = vmul.f32 %v497, %v528
        %s549 = scalar_lea.vmem [#allocation5], 32
        %v550 = vld [vmem:[%s549] sm:$0xff]
        %v551 = vld [vmem:[%s549 + $0x8] sm:$0xff]
        %v552 = vld [vmem:[%s549 + $0x10] sm:$0xff]
        %v553 = vld [vmem:[%s549 + $0x18] sm:$0xff]
        %vm554 = vcmask 261120
        %v556 = vsel %vm554, %v550, 0
        %v559 = vsel %vm554, %v551, 0
        %v562 = vsel %vm554, %v552, 0
        %v565 = vsel %vm554, %v553, 0
        %567 = vmatprep.subr.mxu0 %v534
        %568 = vmatpush1.msra.mxu0 %v533
        %569 = vmatprep.subr.mxu0 %v538
        %570 = vmatpush1.msra.mxu0 %v537
        %571 = vmatprep.subr.mxu0 %v542
        %572 = vmatpush1.msra.mxu0 %v541
        %573 = vmatprep.subr.mxu0 %v546
        %574 = vmatpush1.msra.mxu0 %v545
        %575 = vmatprep.subr.mxu0 0.0
        %576 = vmatpush1.msra.mxu0 0.0
        %577 = vmatprep.subr.mxu0 0.0
        %578 = vmatpush1.msra.mxu0 0.0
        %579 = vmatprep.subr.mxu0 0.0
        %580 = vmatpush1.msra.mxu0 0.0
        %581 = vmatprep.subr.mxu0 0.0
        %582 = vmatpush1.msra.mxu0 0.0
        %583 = vmatprep.subr.mxu0 0.0
        %584 = vmatpush1.msra.mxu0 0.0
        %585 = vmatprep.subr.mxu0 0.0
        %586 = vmatpush1.msra.mxu0 0.0
        %587 = vmatprep.subr.mxu0 0.0
        %588 = vmatpush1.msra.mxu0 0.0
        %589 = vmatprep.subr.mxu0 0.0
        %590 = vmatpush1.msra.mxu0 0.0
        %591 = vmatprep.subr.mxu0 0.0
        %592 = vmatpush1.msra.mxu0 0.0
        %593 = vmatprep.subr.mxu0 0.0
        %594 = vmatpush1.msra.mxu0 0.0
        %595 = vmatprep.subr.mxu0 0.0
        %596 = vmatpush1.msra.mxu0 0.0
        %597 = vmatprep.subr.mxu0 0.0
        %598 = vmatpush1.msra.mxu0 0.0
        %599 = vmatprep.subr.mxu0 0.0
        %600 = vmatpush1.msra.mxu0 0.0
        %601 = vmatprep.subr.mxu0 0.0
        %602 = vmatpush1.msra.mxu0 0.0
        %603 = vmatprep.subr.mxu0 0.0
        %604 = vmatpush1.msra.mxu0 0.0
        %605 = vmatprep.subr.mxu0 0.0
        %606 = vmatpush1.msra.mxu0 0.0
        %607 = vmatprep.subr.mxu0 0.0
        %608 = vmatpush1.msra.mxu0 0.0
        %609 = vmatprep.subr.mxu0 0.0
        %610 = vmatpush1.msra.mxu0 0.0
        %611 = vmatprep.subr.mxu0 0.0
        %612 = vmatpush1.msra.mxu0 0.0
        %613 = vmatprep.subr.mxu0 0.0
        %614 = vmatpush1.msra.mxu0 0.0
        %615 = vmatprep.subr.mxu0 0.0
        %616 = vmatpush1.msra.mxu0 0.0
        %617 = vmatprep.subr.mxu0 0.0
        %618 = vmatpush1.msra.mxu0 0.0
        %619 = vmatprep.subr.mxu0 0.0
        %620 = vmatpush1.msra.mxu0 0.0
        %621 = vmatprep.subr.mxu0 0.0
        %622 = vmatpush1.msra.mxu0 0.0
        %623 = vmatprep.subr.mxu0 0.0
        %624 = vmatpush1.msra.mxu0 0.0
        %625 = vmatprep.subr.mxu0 0.0
        %626 = vmatpush1.msra.mxu0 0.0
        %627 = vmatprep.subr.mxu0 0.0
        %628 = vmatpush1.msra.mxu0 0.0
        %629 = vmatprep.subr.mxu0 0.0
        %630 = vmatpush1.msra.mxu0 0.0
        %631 = vmatprep.mubr.f32.mxu0 0.0
        %632 = vmatmul.mubr.f32.gmra.mrb[0].mxu0 %v556
        %v633 = vpop.f32.mrb[0].mxu0
        %v634 = vadd.f32 0.0, %v633
        %v635 = vpop.f32.mrb[0].mxu0
        %v636 = vadd.f32 0.0, %v635
        %637 = vmatprep.mubr.f32.mxu0 0.0
        %638 = vmatmul.mubr.f32.gmra.mrb[0].mxu0 %v559
        %v639 = vpop.f32.mrb[0].mxu0
        %v640 = vadd.f32 0.0, %v639
        %v641 = vpop.f32.mrb[0].mxu0
        %v642 = vadd.f32 0.0, %v641
        %643 = vmatprep.mubr.f32.mxu0 0.0
        %644 = vmatmul.mubr.f32.gmra.mrb[0].mxu0 %v562
        %v645 = vpop.f32.mrb[0].mxu0
        %v646 = vadd.f32 0.0, %v645
        %v647 = vpop.f32.mrb[0].mxu0
        %v648 = vadd.f32 0.0, %v647
        %649 = vmatprep.mubr.f32.mxu0 0.0
        %650 = vmatmul.mubr.f32.gmra.mrb[0].mxu0 %v565
        %v651 = vpop.f32.mrb[0].mxu0
        %v652 = vadd.f32 0.0, %v651
        %v653 = vpop.f32.mrb[0].mxu0
        %v654 = vadd.f32 0.0, %v653
        %655 = vdwg.mxu0
        %656 = vmatprep.subr.mxu0 %v536
        %657 = vmatpush1.msra.mxu0 %v535
        %658 = vmatprep.subr.mxu0 %v540
        %659 = vmatpush1.msra.mxu0 %v539
        %660 = vmatprep.subr.mxu0 %v544
        %661 = vmatpush1.msra.mxu0 %v543
        %662 = vmatprep.subr.mxu0 %v548
        %663 = vmatpush1.msra.mxu0 %v547
        %664 = vmatprep.subr.mxu0 0.0
        %665 = vmatpush1.msra.mxu0 0.0
        %666 = vmatprep.subr.mxu0 0.0
        %667 = vmatpush1.msra.mxu0 0.0
        %668 = vmatprep.subr.mxu0 0.0
        %669 = vmatpush1.msra.mxu0 0.0
        %670 = vmatprep.subr.mxu0 0.0
        %671 = vmatpush1.msra.mxu0 0.0
        %672 = vmatprep.subr.mxu0 0.0
        %673 = vmatpush1.msra.mxu0 0.0
        %674 = vmatprep.subr.mxu0 0.0
        %675 = vmatpush1.msra.mxu0 0.0
        %676 = vmatprep.subr.mxu0 0.0
        %677 = vmatpush1.msra.mxu0 0.0
        %678 = vmatprep.subr.mxu0 0.0
        %679 = vmatpush1.msra.mxu0 0.0
        %680 = vmatprep.subr.mxu0 0.0
        %681 = vmatpush1.msra.mxu0 0.0
        %682 = vmatprep.subr.mxu0 0.0
        %683 = vmatpush1.msra.mxu0 0.0
        %684 = vmatprep.subr.mxu0 0.0
        %685 = vmatpush1.msra.mxu0 0.0
        %686 = vmatprep.subr.mxu0 0.0
        %687 = vmatpush1.msra.mxu0 0.0
        %688 = vmatprep.subr.mxu0 0.0
        %689 = vmatpush1.msra.mxu0 0.0
        %690 = vmatprep.subr.mxu0 0.0
        %691 = vmatpush1.msra.mxu0 0.0
        %692 = vmatprep.subr.mxu0 0.0
        %693 = vmatpush1.msra.mxu0 0.0
        %694 = vmatprep.subr.mxu0 0.0
        %695 = vmatpush1.msra.mxu0 0.0
        %696 = vmatprep.subr.mxu0 0.0
        %697 = vmatpush1.msra.mxu0 0.0
        %698 = vmatprep.subr.mxu0 0.0
        %699 = vmatpush1.msra.mxu0 0.0
        %700 = vmatprep.subr.mxu0 0.0
        %701 = vmatpush1.msra.mxu0 0.0
        %702 = vmatprep.subr.mxu0 0.0
        %703 = vmatpush1.msra.mxu0 0.0
        %704 = vmatprep.subr.mxu0 0.0
        %705 = vmatpush1.msra.mxu0 0.0
        %706 = vmatprep.subr.mxu0 0.0
        %707 = vmatpush1.msra.mxu0 0.0
        %708 = vmatprep.subr.mxu0 0.0
        %709 = vmatpush1.msra.mxu0 0.0
        %710 = vmatprep.subr.mxu0 0.0
        %711 = vmatpush1.msra.mxu0 0.0
        %712 = vmatprep.subr.mxu0 0.0
        %713 = vmatpush1.msra.mxu0 0.0
        %714 = vmatprep.subr.mxu0 0.0
        %715 = vmatpush1.msra.mxu0 0.0
        %716 = vmatprep.subr.mxu0 0.0
        %717 = vmatpush1.msra.mxu0 0.0
        %718 = vmatprep.subr.mxu0 0.0
        %719 = vmatpush1.msra.mxu0 0.0
        %720 = vmatprep.mubr.f32.mxu0 0.0
        %721 = vmatmul.mubr.f32.gmra.mrb[0].mxu0 %v556
        %v722 = vpop.f32.mrb[0].mxu0
        %v723 = vadd.f32 0.0, %v722
        %v724 = vpop.f32.mrb[0].mxu0
        %v725 = vadd.f32 0.0, %v724
        %726 = vmatprep.mubr.f32.mxu0 0.0
        %727 = vmatmul.mubr.f32.gmra.mrb[0].mxu0 %v559
        %v728 = vpop.f32.mrb[0].mxu0
        %v729 = vadd.f32 0.0, %v728
        %v730 = vpop.f32.mrb[0].mxu0
        %v731 = vadd.f32 0.0, %v730
        %732 = vmatprep.mubr.f32.mxu0 0.0
        %733 = vmatmul.mubr.f32.gmra.mrb[0].mxu0 %v562
        %v734 = vpop.f32.mrb[0].mxu0
        %v735 = vadd.f32 0.0, %v734
        %v736 = vpop.f32.mrb[0].mxu0
        %v737 = vadd.f32 0.0, %v736
        %738 = vmatprep.mubr.f32.mxu0 0.0
        %739 = vmatmul.mubr.f32.gmra.mrb[0].mxu0 %v565
        %v740 = vpop.f32.mrb[0].mxu0
        %v741 = vadd.f32 0.0, %v740
        %v742 = vpop.f32.mrb[0].mxu0
        %v743 = vadd.f32 0.0, %v742
        %744 = vdwg.mxu0
        %v746 = vsel %vm554, %v457, 0
        %v749 = vsel %vm554, %v458, 0
        %v752 = vsel %vm554, %v459, 0
        %v755 = vsel %vm554, %v460, 0
        %757 = vmatprep.subr.mxu0 %v442
        %758 = vmatpush1.msra.mxu0 %v441
        %759 = vmatprep.subr.mxu0 %v446
        %760 = vmatpush1.msra.mxu0 %v445
        %761 = vmatprep.subr.mxu0 %v450
        %762 = vmatpush1.msra.mxu0 %v449
        %763 = vmatprep.subr.mxu0 %v454
        %764 = vmatpush1.msra.mxu0 %v453
        %765 = vmatprep.subr.mxu0 0.0
        %766 = vmatpush1.msra.mxu0 0.0
        %767 = vmatprep.subr.mxu0 0.0
        %768 = vmatpush1.msra.mxu0 0.0
        %769 = vmatprep.subr.mxu0 0.0
        %770 = vmatpush1.msra.mxu0 0.0
        %771 = vmatprep.subr.mxu0 0.0
        %772 = vmatpush1.msra.mxu0 0.0
        %773 = vmatprep.subr.mxu0 0.0
        %774 = vmatpush1.msra.mxu0 0.0
        %775 = vmatprep.subr.mxu0 0.0
        %776 = vmatpush1.msra.mxu0 0.0
        %777 = vmatprep.subr.mxu0 0.0
        %778 = vmatpush1.msra.mxu0 0.0
        %779 = vmatprep.subr.mxu0 0.0
        %780 = vmatpush1.msra.mxu0 0.0
        %781 = vmatprep.subr.mxu0 0.0
        %782 = vmatpush1.msra.mxu0 0.0
        %783 = vmatprep.subr.mxu0 0.0
        %784 = vmatpush1.msra.mxu0 0.0
        %785 = vmatprep.subr.mxu0 0.0
        %786 = vmatpush1.msra.mxu0 0.0
        %787 = vmatprep.subr.mxu0 0.0
        %788 = vmatpush1.msra.mxu0 0.0
        %789 = vmatprep.subr.mxu0 0.0
        %790 = vmatpush1.msra.mxu0 0.0
        %791 = vmatprep.subr.mxu0 0.0
        %792 = vmatpush1.msra.mxu0 0.0
        %793 = vmatprep.subr.mxu0 0.0
        %794 = vmatpush1.msra.mxu0 0.0
        %795 = vmatprep.subr.mxu0 0.0
        %796 = vmatpush1.msra.mxu0 0.0
        %797 = vmatprep.subr.mxu0 0.0
        %798 = vmatpush1.msra.mxu0 0.0
        %799 = vmatprep.subr.mxu0 0.0
        %800 = vmatpush1.msra.mxu0 0.0
        %801 = vmatprep.subr.mxu0 0.0
        %802 = vmatpush1.msra.mxu0 0.0
        %803 = vmatprep.subr.mxu0 0.0
        %804 = vmatpush1.msra.mxu0 0.0
        %805 = vmatprep.subr.mxu0 0.0
        %806 = vmatpush1.msra.mxu0 0.0
        %807 = vmatprep.subr.mxu0 0.0
        %808 = vmatpush1.msra.mxu0 0.0
        %809 = vmatprep.subr.mxu0 0.0
        %810 = vmatpush1.msra.mxu0 0.0
        %811 = vmatprep.subr.mxu0 0.0
        %812 = vmatpush1.msra.mxu0 0.0
        %813 = vmatprep.subr.mxu0 0.0
        %814 = vmatpush1.msra.mxu0 0.0
        %815 = vmatprep.subr.mxu0 0.0
        %816 = vmatpush1.msra.mxu0 0.0
        %817 = vmatprep.subr.mxu0 0.0
        %818 = vmatpush1.msra.mxu0 0.0
        %819 = vmatprep.subr.mxu0 0.0
        %820 = vmatpush1.msra.mxu0 0.0
        %821 = vmatprep.mubr.f32.mxu0 0.0
        %822 = vmatmul.mubr.f32.gmra.mrb[0].mxu0 %v746
        %v823 = vpop.f32.mrb[0].mxu0
        %v824 = vadd.f32 %v634, %v823
        %v825 = vpop.f32.mrb[0].mxu0
        %v826 = vadd.f32 %v636, %v825
        %827 = vmatprep.mubr.f32.mxu0 0.0
        %828 = vmatmul.mubr.f32.gmra.mrb[0].mxu0 %v749
        %v829 = vpop.f32.mrb[0].mxu0
        %v830 = vadd.f32 %v640, %v829
        %v831 = vpop.f32.mrb[0].mxu0
        %v832 = vadd.f32 %v642, %v831
        %833 = vmatprep.mubr.f32.mxu0 0.0
        %834 = vmatmul.mubr.f32.gmra.mrb[0].mxu0 %v752
        %v835 = vpop.f32.mrb[0].mxu0
        %v836 = vadd.f32 %v646, %v835
        %v837 = vpop.f32.mrb[0].mxu0
        %v838 = vadd.f32 %v648, %v837
        %839 = vmatprep.mubr.f32.mxu0 0.0
        %840 = vmatmul.mubr.f32.gmra.mrb[0].mxu0 %v755
        %v841 = vpop.f32.mrb[0].mxu0
        %v842 = vadd.f32 %v652, %v841
        %v843 = vpop.f32.mrb[0].mxu0
        %v844 = vadd.f32 %v654, %v843
        %845 = vdwg.mxu0
        %846 = vmatprep.subr.mxu0 %v444
        %847 = vmatpush1.msra.mxu0 %v443
        %848 = vmatprep.subr.mxu0 %v448
        %849 = vmatpush1.msra.mxu0 %v447
        %850 = vmatprep.subr.mxu0 %v452
        %851 = vmatpush1.msra.mxu0 %v451
        %852 = vmatprep.subr.mxu0 %v456
        %853 = vmatpush1.msra.mxu0 %v455
        %854 = vmatprep.subr.mxu0 0.0
        %855 = vmatpush1.msra.mxu0 0.0
        %856 = vmatprep.subr.mxu0 0.0
        %857 = vmatpush1.msra.mxu0 0.0
        %858 = vmatprep.subr.mxu0 0.0
        %859 = vmatpush1.msra.mxu0 0.0
        %860 = vmatprep.subr.mxu0 0.0
        %861 = vmatpush1.msra.mxu0 0.0
        %862 = vmatprep.subr.mxu0 0.0
        %863 = vmatpush1.msra.mxu0 0.0
        %864 = vmatprep.subr.mxu0 0.0
        %865 = vmatpush1.msra.mxu0 0.0
        %866 = vmatprep.subr.mxu0 0.0
        %867 = vmatpush1.msra.mxu0 0.0
        %868 = vmatprep.subr.mxu0 0.0
        %869 = vmatpush1.msra.mxu0 0.0
        %870 = vmatprep.subr.mxu0 0.0
        %871 = vmatpush1.msra.mxu0 0.0
        %872 = vmatprep.subr.mxu0 0.0
        %873 = vmatpush1.msra.mxu0 0.0
        %874 = vmatprep.subr.mxu0 0.0
        %875 = vmatpush1.msra.mxu0 0.0
        %876 = vmatprep.subr.mxu0 0.0
        %877 = vmatpush1.msra.mxu0 0.0
        %878 = vmatprep.subr.mxu0 0.0
        %879 = vmatpush1.msra.mxu0 0.0
        %880 = vmatprep.subr.mxu0 0.0
        %881 = vmatpush1.msra.mxu0 0.0
        %882 = vmatprep.subr.mxu0 0.0
        %883 = vmatpush1.msra.mxu0 0.0
        %884 = vmatprep.subr.mxu0 0.0
        %885 = vmatpush1.msra.mxu0 0.0
        %886 = vmatprep.subr.mxu0 0.0
        %887 = vmatpush1.msra.mxu0 0.0
        %888 = vmatprep.subr.mxu0 0.0
        %889 = vmatpush1.msra.mxu0 0.0
        %890 = vmatprep.subr.mxu0 0.0
        %891 = vmatpush1.msra.mxu0 0.0
        %892 = vmatprep.subr.mxu0 0.0
        %893 = vmatpush1.msra.mxu0 0.0
        %894 = vmatprep.subr.mxu0 0.0
        %895 = vmatpush1.msra.mxu0 0.0
        %896 = vmatprep.subr.mxu0 0.0
        %897 = vmatpush1.msra.mxu0 0.0
        %898 = vmatprep.subr.mxu0 0.0
        %899 = vmatpush1.msra.mxu0 0.0
        %900 = vmatprep.subr.mxu0 0.0
        %901 = vmatpush1.msra.mxu0 0.0
        %902 = vmatprep.subr.mxu0 0.0
        %903 = vmatpush1.msra.mxu0 0.0
        %904 = vmatprep.subr.mxu0 0.0
        %905 = vmatpush1.msra.mxu0 0.0
        %906 = vmatprep.subr.mxu0 0.0
        %907 = vmatpush1.msra.mxu0 0.0
        %908 = vmatprep.subr.mxu0 0.0
        %909 = vmatpush1.msra.mxu0 0.0
        %910 = vmatprep.mubr.f32.mxu0 0.0
        %911 = vmatmul.mubr.f32.gmra.mrb[0].mxu0 %v746
        %v912 = vpop.f32.mrb[0].mxu0
        %v913 = vadd.f32 %v723, %v912
        %v914 = vpop.f32.mrb[0].mxu0
        %v915 = vadd.f32 %v725, %v914
        %916 = vmatprep.mubr.f32.mxu0 0.0
        %917 = vmatmul.mubr.f32.gmra.mrb[0].mxu0 %v749
        %v918 = vpop.f32.mrb[0].mxu0
        %v919 = vadd.f32 %v729, %v918
        %v920 = vpop.f32.mrb[0].mxu0
        %v921 = vadd.f32 %v731, %v920
        %922 = vmatprep.mubr.f32.mxu0 0.0
        %923 = vmatmul.mubr.f32.gmra.mrb[0].mxu0 %v752
        %v924 = vpop.f32.mrb[0].mxu0
        %v925 = vadd.f32 %v735, %v924
        %v926 = vpop.f32.mrb[0].mxu0
        %v927 = vadd.f32 %v737, %v926
        %928 = vmatprep.mubr.f32.mxu0 0.0
        %929 = vmatmul.mubr.f32.gmra.mrb[0].mxu0 %v755
        %v930 = vpop.f32.mrb[0].mxu0
        %v931 = vadd.f32 %v741, %v930
        %v932 = vpop.f32.mrb[0].mxu0
        %v933 = vadd.f32 %v743, %v932
        %934 = vdwg.mxu0
        %935 = vrot.lane.b32.xlu0 %v352, 15
        %v936 = vpop.permute.xlu0 %935
        %937 = vrot.lane.b32.xlu0 %v356, 15
        %v938 = vpop.permute.xlu0 %937
        %939 = vrot.lane.b32.xlu0 %v360, 15
        %v940 = vpop.permute.xlu0 %939
        %941 = vrot.lane.b32.xlu0 %v364, 15
        %v942 = vpop.permute.xlu0 %941
        %943 = vrot.lane.b32.xlu0 %v353, 15
        %v944 = vpop.permute.xlu0 %943
        %945 = vrot.lane.b32.xlu0 %v357, 15
        %v946 = vpop.permute.xlu0 %945
        %947 = vrot.lane.b32.xlu0 %v361, 15
        %v948 = vpop.permute.xlu0 %947
        %949 = vrot.lane.b32.xlu0 %v365, 15
        %v950 = vpop.permute.xlu0 %949
        %951 = vrot.lane.b32.xlu0 %v354, 15
        %v952 = vpop.permute.xlu0 %951
        %953 = vrot.lane.b32.xlu0 %v358, 15
        %v954 = vpop.permute.xlu0 %953
        %955 = vrot.lane.b32.xlu0 %v362, 15
        %v956 = vpop.permute.xlu0 %955
        %957 = vrot.lane.b32.xlu0 %v366, 15
        %v958 = vpop.permute.xlu0 %957
        %959 = vrot.lane.b32.xlu0 %v355, 15
        %v960 = vpop.permute.xlu0 %959
        %961 = vrot.lane.b32.xlu0 %v359, 15
        %v962 = vpop.permute.xlu0 %961
        %963 = vrot.lane.b32.xlu0 %v363, 15
        %v964 = vpop.permute.xlu0 %963
        %965 = vrot.lane.b32.xlu0 %v367, 15
        %v966 = vpop.permute.xlu0 %965
        %vm967 = vcmp.lt.s32.totalorder %v401, 15
        %v968 = vsel %vm967, %v952, %v960
        %v969 = vsel %vm967, %v954, %v962
        %v970 = vsel %vm967, %v956, %v964
        %v971 = vsel %vm967, %v958, %v966
        %v972 = vsel %vm967, %v944, %v952
        %v973 = vsel %vm967, %v946, %v954
        %v974 = vsel %vm967, %v948, %v956
        %v975 = vsel %vm967, %v950, %v958
        %v976 = vsel %vm967, %v936, %v944
        %v977 = vsel %vm967, %v938, %v946
        %v978 = vsel %vm967, %v940, %v948
        %v979 = vsel %vm967, %v942, %v950
        %v980 = vsel %vm967, %v960, %v936
        %v981 = vsel %vm967, %v962, %v938
        %v982 = vsel %vm967, %v964, %v940
        %v983 = vsel %vm967, %v966, %v942
        %s984 = scalar_lea.vmem [#allocation8], 2
        %v985 = vld [vmem:[%s984] ss:$8 sm:$0xf]
        %v987 = vlaneseq
        %v988 = vshrl.u32 %v987, 7
        %v989 = vsub.s32 0, %v988
        %v990 = vrot.slane %v985, %v989
        %v991 = vlaneseq
        %v992 = vshrl.u32 %v991, 7
        %v993 = vsub.s32 1, %v992
        %v994 = vrot.slane %v985, %v993
        %v995 = vlaneseq
        %v996 = vshrl.u32 %v995, 7
        %v997 = vsub.s32 2, %v996
        %v998 = vrot.slane %v985, %v997
        %v999 = vlaneseq
        %v1000 = vshrl.u32 %v999, 7
        %v1001 = vsub.s32 3, %v1000
        %v1002 = vrot.slane %v985, %v1001
        %v1007 = vmul.f32 %v980, %v990
        %v1008 = vmul.f32 %v976, %v994
        %v1009 = vmul.f32 %v972, %v998
        %v1010 = vmul.f32 %v968, %v1002
        %v1011 = vmul.f32 %v981, %v990
        %v1012 = vmul.f32 %v977, %v994
        %v1013 = vmul.f32 %v973, %v998
        %v1014 = vmul.f32 %v969, %v1002
        %v1015 = vmul.f32 %v982, %v990
        %v1016 = vmul.f32 %v978, %v994
        %v1017 = vmul.f32 %v974, %v998
        %v1018 = vmul.f32 %v970, %v1002
        %v1019 = vmul.f32 %v983, %v990
        %v1020 = vmul.f32 %v979, %v994
        %v1021 = vmul.f32 %v975, %v998
        %v1022 = vmul.f32 %v971, %v1002
        %s1023 = scalar_lea.vmem [#allocation5], 64
        %v1024 = vld [vmem:[%s1023] sm:$0xff]
        %v1025 = vld [vmem:[%s1023 + $0x8] sm:$0xff]
        %v1026 = vld [vmem:[%s1023 + $0x10] sm:$0xff]
        %v1027 = vld [vmem:[%s1023 + $0x18] sm:$0xff]
        %v1029 = vsel %vm554, %v1024, 0
        %v1032 = vsel %vm554, %v1025, 0
        %v1035 = vsel %vm554, %v1026, 0
        %v1038 = vsel %vm554, %v1027, 0
        %1040 = vmatprep.subr.mxu0 %v1008
        %1041 = vmatpush1.msra.mxu0 %v1007
        %1042 = vmatprep.subr.mxu0 %v1012
        %1043 = vmatpush1.msra.mxu0 %v1011
        %1044 = vmatprep.subr.mxu0 %v1016
        %1045 = vmatpush1.msra.mxu0 %v1015
        %1046 = vmatprep.subr.mxu0 %v1020
        %1047 = vmatpush1.msra.mxu0 %v1019
        %1048 = vmatprep.subr.mxu0 0.0
        %1049 = vmatpush1.msra.mxu0 0.0
        %1050 = vmatprep.subr.mxu0 0.0
        %1051 = vmatpush1.msra.mxu0 0.0
        %1052 = vmatprep.subr.mxu0 0.0
        %1053 = vmatpush1.msra.mxu0 0.0
        %1054 = vmatprep.subr.mxu0 0.0
        %1055 = vmatpush1.msra.mxu0 0.0
        %1056 = vmatprep.subr.mxu0 0.0
        %1057 = vmatpush1.msra.mxu0 0.0
        %1058 = vmatprep.subr.mxu0 0.0
        %1059 = vmatpush1.msra.mxu0 0.0
        %1060 = vmatprep.subr.mxu0 0.0
        %1061 = vmatpush1.msra.mxu0 0.0
        %1062 = vmatprep.subr.mxu0 0.0
        %1063 = vmatpush1.msra.mxu0 0.0
        %1064 = vmatprep.subr.mxu0 0.0
        %1065 = vmatpush1.msra.mxu0 0.0
        %1066 = vmatprep.subr.mxu0 0.0
        %1067 = vmatpush1.msra.mxu0 0.0
        %1068 = vmatprep.subr.mxu0 0.0
        %1069 = vmatpush1.msra.mxu0 0.0
        %1070 = vmatprep.subr.mxu0 0.0
        %1071 = vmatpush1.msra.mxu0 0.0
        %1072 = vmatprep.subr.mxu0 0.0
        %1073 = vmatpush1.msra.mxu0 0.0
        %1074 = vmatprep.subr.mxu0 0.0
        %1075 = vmatpush1.msra.mxu0 0.0
        %1076 = vmatprep.subr.mxu0 0.0
        %1077 = vmatpush1.msra.mxu0 0.0
        %1078 = vmatprep.subr.mxu0 0.0
        %1079 = vmatpush1.msra.mxu0 0.0
        %1080 = vmatprep.subr.mxu0 0.0
        %1081 = vmatpush1.msra.mxu0 0.0
        %1082 = vmatprep.subr.mxu0 0.0
        %1083 = vmatpush1.msra.mxu0 0.0
        %1084 = vmatprep.subr.mxu0 0.0
        %1085 = vmatpush1.msra.mxu0 0.0
        %1086 = vmatprep.subr.mxu0 0.0
        %1087 = vmatpush1.msra.mxu0 0.0
        %1088 = vmatprep.subr.mxu0 0.0
        %1089 = vmatpush1.msra.mxu0 0.0
        %1090 = vmatprep.subr.mxu0 0.0
        %1091 = vmatpush1.msra.mxu0 0.0
        %1092 = vmatprep.subr.mxu0 0.0
        %1093 = vmatpush1.msra.mxu0 0.0
        %1094 = vmatprep.subr.mxu0 0.0
        %1095 = vmatpush1.msra.mxu0 0.0
        %1096 = vmatprep.subr.mxu0 0.0
        %1097 = vmatpush1.msra.mxu0 0.0
        %1098 = vmatprep.subr.mxu0 0.0
        %1099 = vmatpush1.msra.mxu0 0.0
        %1100 = vmatprep.subr.mxu0 0.0
        %1101 = vmatpush1.msra.mxu0 0.0
        %1102 = vmatprep.subr.mxu0 0.0
        %1103 = vmatpush1.msra.mxu0 0.0
        %1104 = vmatprep.mubr.f32.mxu0 0.0
        %1105 = vmatmul.mubr.f32.gmra.mrb[0].mxu0 %v1029
        %v1106 = vpop.f32.mrb[0].mxu0
        %v1107 = vadd.f32 0.0, %v1106
        %v1108 = vpop.f32.mrb[0].mxu0
        %v1109 = vadd.f32 0.0, %v1108
        %1110 = vmatprep.mubr.f32.mxu0 0.0
        %1111 = vmatmul.mubr.f32.gmra.mrb[0].mxu0 %v1032
        %v1112 = vpop.f32.mrb[0].mxu0
        %v1113 = vadd.f32 0.0, %v1112
        %v1114 = vpop.f32.mrb[0].mxu0
        %v1115 = vadd.f32 0.0, %v1114
        %1116 = vmatprep.mubr.f32.mxu0 0.0
        %1117 = vmatmul.mubr.f32.gmra.mrb[0].mxu0 %v1035
        %v1118 = vpop.f32.mrb[0].mxu0
        %v1119 = vadd.f32 0.0, %v1118
        %v1120 = vpop.f32.mrb[0].mxu0
        %v1121 = vadd.f32 0.0, %v1120
        %1122 = vmatprep.mubr.f32.mxu0 0.0
        %1123 = vmatmul.mubr.f32.gmra.mrb[0].mxu0 %v1038
        %v1124 = vpop.f32.mrb[0].mxu0
        %v1125 = vadd.f32 0.0, %v1124
        %v1126 = vpop.f32.mrb[0].mxu0
        %v1127 = vadd.f32 0.0, %v1126
        %1128 = vdwg.mxu0
        %1129 = vmatprep.subr.mxu0 %v1010
        %1130 = vmatpush1.msra.mxu0 %v1009
        %1131 = vmatprep.subr.mxu0 %v1014
        %1132 = vmatpush1.msra.mxu0 %v1013
        %1133 = vmatprep.subr.mxu0 %v1018
        %1134 = vmatpush1.msra.mxu0 %v1017
        %1135 = vmatprep.subr.mxu0 %v1022
        %1136 = vmatpush1.msra.mxu0 %v1021
        %1137 = vmatprep.subr.mxu0 0.0
        %1138 = vmatpush1.msra.mxu0 0.0
        %1139 = vmatprep.subr.mxu0 0.0
        %1140 = vmatpush1.msra.mxu0 0.0
        %1141 = vmatprep.subr.mxu0 0.0
        %1142 = vmatpush1.msra.mxu0 0.0
        %1143 = vmatprep.subr.mxu0 0.0
        %1144 = vmatpush1.msra.mxu0 0.0
        %1145 = vmatprep.subr.mxu0 0.0
        %1146 = vmatpush1.msra.mxu0 0.0
        %1147 = vmatprep.subr.mxu0 0.0
        %1148 = vmatpush1.msra.mxu0 0.0
        %1149 = vmatprep.subr.mxu0 0.0
        %1150 = vmatpush1.msra.mxu0 0.0
        %1151 = vmatprep.subr.mxu0 0.0
        %1152 = vmatpush1.msra.mxu0 0.0
        %1153 = vmatprep.subr.mxu0 0.0
        %1154 = vmatpush1.msra.mxu0 0.0
        %1155 = vmatprep.subr.mxu0 0.0
        %1156 = vmatpush1.msra.mxu0 0.0
        %1157 = vmatprep.subr.mxu0 0.0
        %1158 = vmatpush1.msra.mxu0 0.0
        %1159 = vmatprep.subr.mxu0 0.0
        %1160 = vmatpush1.msra.mxu0 0.0
        %1161 = vmatprep.subr.mxu0 0.0
        %1162 = vmatpush1.msra.mxu0 0.0
        %1163 = vmatprep.subr.mxu0 0.0
        %1164 = vmatpush1.msra.mxu0 0.0
        %1165 = vmatprep.subr.mxu0 0.0
        %1166 = vmatpush1.msra.mxu0 0.0
        %1167 = vmatprep.subr.mxu0 0.0
        %1168 = vmatpush1.msra.mxu0 0.0
        %1169 = vmatprep.subr.mxu0 0.0
        %1170 = vmatpush1.msra.mxu0 0.0
        %1171 = vmatprep.subr.mxu0 0.0
        %1172 = vmatpush1.msra.mxu0 0.0
        %1173 = vmatprep.subr.mxu0 0.0
        %1174 = vmatpush1.msra.mxu0 0.0
        %1175 = vmatprep.subr.mxu0 0.0
        %1176 = vmatpush1.msra.mxu0 0.0
        %1177 = vmatprep.subr.mxu0 0.0
        %1178 = vmatpush1.msra.mxu0 0.0
        %1179 = vmatprep.subr.mxu0 0.0
        %1180 = vmatpush1.msra.mxu0 0.0
        %1181 = vmatprep.subr.mxu0 0.0
        %1182 = vmatpush1.msra.mxu0 0.0
        %1183 = vmatprep.subr.mxu0 0.0
        %1184 = vmatpush1.msra.mxu0 0.0
        %1185 = vmatprep.subr.mxu0 0.0
        %1186 = vmatpush1.msra.mxu0 0.0
        %1187 = vmatprep.subr.mxu0 0.0
        %1188 = vmatpush1.msra.mxu0 0.0
        %1189 = vmatprep.subr.mxu0 0.0
        %1190 = vmatpush1.msra.mxu0 0.0
        %1191 = vmatprep.subr.mxu0 0.0
        %1192 = vmatpush1.msra.mxu0 0.0
        %1193 = vmatprep.mubr.f32.mxu0 0.0
        %1194 = vmatmul.mubr.f32.gmra.mrb[0].mxu0 %v1029
        %v1195 = vpop.f32.mrb[0].mxu0
        %v1196 = vadd.f32 0.0, %v1195
        %v1197 = vpop.f32.mrb[0].mxu0
        %v1198 = vadd.f32 0.0, %v1197
        %1199 = vmatprep.mubr.f32.mxu0 0.0
        %1200 = vmatmul.mubr.f32.gmra.mrb[0].mxu0 %v1032
        %v1201 = vpop.f32.mrb[0].mxu0
        %v1202 = vadd.f32 0.0, %v1201
        %v1203 = vpop.f32.mrb[0].mxu0
        %v1204 = vadd.f32 0.0, %v1203
        %1205 = vmatprep.mubr.f32.mxu0 0.0
        %1206 = vmatmul.mubr.f32.gmra.mrb[0].mxu0 %v1035
        %v1207 = vpop.f32.mrb[0].mxu0
        %v1208 = vadd.f32 0.0, %v1207
        %v1209 = vpop.f32.mrb[0].mxu0
        %v1210 = vadd.f32 0.0, %v1209
        %1211 = vmatprep.mubr.f32.mxu0 0.0
        %1212 = vmatmul.mubr.f32.gmra.mrb[0].mxu0 %v1038
        %v1213 = vpop.f32.mrb[0].mxu0
        %v1214 = vadd.f32 0.0, %v1213
        %v1215 = vpop.f32.mrb[0].mxu0
        %v1216 = vadd.f32 0.0, %v1215
        %1217 = vdwg.mxu0
        %v1218 = vadd.f32 %v824, %v1107
        %v1219 = vadd.f32 %v826, %v1109
        %v1220 = vadd.f32 %v913, %v1196
        %v1221 = vadd.f32 %v915, %v1198
        %v1222 = vadd.f32 %v830, %v1113
        %v1223 = vadd.f32 %v832, %v1115
        %v1224 = vadd.f32 %v919, %v1202
        %v1225 = vadd.f32 %v921, %v1204
        %v1226 = vadd.f32 %v836, %v1119
        %v1227 = vadd.f32 %v838, %v1121
        %v1228 = vadd.f32 %v925, %v1208
        %v1229 = vadd.f32 %v927, %v1210
        %v1230 = vadd.f32 %v842, %v1125
        %v1231 = vadd.f32 %v844, %v1127
        %v1232 = vadd.f32 %v931, %v1214
        %v1233 = vadd.f32 %v933, %v1216
        %1234 = vrot.lane.b32.xlu0 %v352, 1
        %v1235 = vpop.permute.xlu0 %1234
        %1236 = vrot.lane.b32.xlu0 %v356, 1
        %v1237 = vpop.permute.xlu0 %1236
        %1238 = vrot.lane.b32.xlu0 %v360, 1
        %v1239 = vpop.permute.xlu0 %1238
        %1240 = vrot.lane.b32.xlu0 %v364, 1
        %v1241 = vpop.permute.xlu0 %1240
        %1242 = vrot.lane.b32.xlu0 %v353, 1
        %v1243 = vpop.permute.xlu0 %1242
        %1244 = vrot.lane.b32.xlu0 %v357, 1
        %v1245 = vpop.permute.xlu0 %1244
        %1246 = vrot.lane.b32.xlu0 %v361, 1
        %v1247 = vpop.permute.xlu0 %1246
        %1248 = vrot.lane.b32.xlu0 %v365, 1
        %v1249 = vpop.permute.xlu0 %1248
        %1250 = vrot.lane.b32.xlu0 %v354, 1
        %v1251 = vpop.permute.xlu0 %1250
        %1252 = vrot.lane.b32.xlu0 %v358, 1
        %v1253 = vpop.permute.xlu0 %1252
        %1254 = vrot.lane.b32.xlu0 %v362, 1
        %v1255 = vpop.permute.xlu0 %1254
        %1256 = vrot.lane.b32.xlu0 %v366, 1
        %v1257 = vpop.permute.xlu0 %1256
        %1258 = vrot.lane.b32.xlu0 %v355, 1
        %v1259 = vpop.permute.xlu0 %1258
        %1260 = vrot.lane.b32.xlu0 %v359, 1
        %v1261 = vpop.permute.xlu0 %1260
        %1262 = vrot.lane.b32.xlu0 %v363, 1
        %v1263 = vpop.permute.xlu0 %1262
        %1264 = vrot.lane.b32.xlu0 %v367, 1
        %v1265 = vpop.permute.xlu0 %1264
        %vm1266 = vcmp.lt.s32.totalorder %v401, 1
        %v1267 = vsel %vm1266, %v1251, %v1259
        %v1268 = vsel %vm1266, %v1253, %v1261
        %v1269 = vsel %vm1266, %v1255, %v1263
        %v1270 = vsel %vm1266, %v1257, %v1265
        %v1271 = vsel %vm1266, %v1243, %v1251
        %v1272 = vsel %vm1266, %v1245, %v1253
        %v1273 = vsel %vm1266, %v1247, %v1255
        %v1274 = vsel %vm1266, %v1249, %v1257
        %v1275 = vsel %vm1266, %v1235, %v1243
        %v1276 = vsel %vm1266, %v1237, %v1245
        %v1277 = vsel %vm1266, %v1239, %v1247
        %v1278 = vsel %vm1266, %v1241, %v1249
        %v1279 = vsel %vm1266, %v1259, %v1235
        %v1280 = vsel %vm1266, %v1261, %v1237
        %v1281 = vsel %vm1266, %v1263, %v1239
        %v1282 = vsel %vm1266, %v1265, %v1241
        %s1283 = scalar_lea.vmem [#allocation8], 3
        %v1284 = vld [vmem:[%s1283] ss:$8 sm:$0xf]
        %v1286 = vlaneseq
        %v1287 = vshrl.u32 %v1286, 7
        %v1288 = vsub.s32 0, %v1287
        %v1289 = vrot.slane %v1284, %v1288
        %v1290 = vlaneseq
        %v1291 = vshrl.u32 %v1290, 7
        %v1292 = vsub.s32 1, %v1291
        %v1293 = vrot.slane %v1284, %v1292
        %v1294 = vlaneseq
        %v1295 = vshrl.u32 %v1294, 7
        %v1296 = vsub.s32 2, %v1295
        %v1297 = vrot.slane %v1284, %v1296
        %v1298 = vlaneseq
        %v1299 = vshrl.u32 %v1298, 7
        %v1300 = vsub.s32 3, %v1299
        %v1301 = vrot.slane %v1284, %v1300
        %v1306 = vmul.f32 %v1279, %v1289
        %v1307 = vmul.f32 %v1275, %v1293
        %v1308 = vmul.f32 %v1271, %v1297
        %v1309 = vmul.f32 %v1267, %v1301
        %v1310 = vmul.f32 %v1280, %v1289
        %v1311 = vmul.f32 %v1276, %v1293
        %v1312 = vmul.f32 %v1272, %v1297
        %v1313 = vmul.f32 %v1268, %v1301
        %v1314 = vmul.f32 %v1281, %v1289
        %v1315 = vmul.f32 %v1277, %v1293
        %v1316 = vmul.f32 %v1273, %v1297
        %v1317 = vmul.f32 %v1269, %v1301
        %v1318 = vmul.f32 %v1282, %v1289
        %v1319 = vmul.f32 %v1278, %v1293
        %v1320 = vmul.f32 %v1274, %v1297
        %v1321 = vmul.f32 %v1270, %v1301
        %s1322 = scalar_lea.vmem [#allocation5], 96
        %v1323 = vld [vmem:[%s1322] sm:$0xff]
        %v1324 = vld [vmem:[%s1322 + $0x8] sm:$0xff]
        %v1325 = vld [vmem:[%s1322 + $0x10] sm:$0xff]
        %v1326 = vld [vmem:[%s1322 + $0x18] sm:$0xff]
        %v1328 = vsel %vm554, %v1323, 0
        %v1331 = vsel %vm554, %v1324, 0
        %v1334 = vsel %vm554, %v1325, 0
        %v1337 = vsel %vm554, %v1326, 0
        %1339 = vmatprep.subr.mxu0 %v1307
        %1340 = vmatpush1.msra.mxu0 %v1306
        %1341 = vmatprep.subr.mxu0 %v1311
        %1342 = vmatpush1.msra.mxu0 %v1310
        %1343 = vmatprep.subr.mxu0 %v1315
        %1344 = vmatpush1.msra.mxu0 %v1314
        %1345 = vmatprep.subr.mxu0 %v1319
        %1346 = vmatpush1.msra.mxu0 %v1318
        %1347 = vmatprep.subr.mxu0 0.0
        %1348 = vmatpush1.msra.mxu0 0.0
        %1349 = vmatprep.subr.mxu0 0.0
        %1350 = vmatpush1.msra.mxu0 0.0
        %1351 = vmatprep.subr.mxu0 0.0
        %1352 = vmatpush1.msra.mxu0 0.0
        %1353 = vmatprep.subr.mxu0 0.0
        %1354 = vmatpush1.msra.mxu0 0.0
        %1355 = vmatprep.subr.mxu0 0.0
        %1356 = vmatpush1.msra.mxu0 0.0
        %1357 = vmatprep.subr.mxu0 0.0
        %1358 = vmatpush1.msra.mxu0 0.0
        %1359 = vmatprep.subr.mxu0 0.0
        %1360 = vmatpush1.msra.mxu0 0.0
        %1361 = vmatprep.subr.mxu0 0.0
        %1362 = vmatpush1.msra.mxu0 0.0
        %1363 = vmatprep.subr.mxu0 0.0
        %1364 = vmatpush1.msra.mxu0 0.0
        %1365 = vmatprep.subr.mxu0 0.0
        %1366 = vmatpush1.msra.mxu0 0.0
        %1367 = vmatprep.subr.mxu0 0.0
        %1368 = vmatpush1.msra.mxu0 0.0
        %1369 = vmatprep.subr.mxu0 0.0
        %1370 = vmatpush1.msra.mxu0 0.0
        %1371 = vmatprep.subr.mxu0 0.0
        %1372 = vmatpush1.msra.mxu0 0.0
        %1373 = vmatprep.subr.mxu0 0.0
        %1374 = vmatpush1.msra.mxu0 0.0
        %1375 = vmatprep.subr.mxu0 0.0
        %1376 = vmatpush1.msra.mxu0 0.0
        %1377 = vmatprep.subr.mxu0 0.0
        %1378 = vmatpush1.msra.mxu0 0.0
        %1379 = vmatprep.subr.mxu0 0.0
        %1380 = vmatpush1.msra.mxu0 0.0
        %1381 = vmatprep.subr.mxu0 0.0
        %1382 = vmatpush1.msra.mxu0 0.0
        %1383 = vmatprep.subr.mxu0 0.0
        %1384 = vmatpush1.msra.mxu0 0.0
        %1385 = vmatprep.subr.mxu0 0.0
        %1386 = vmatpush1.msra.mxu0 0.0
        %1387 = vmatprep.subr.mxu0 0.0
        %1388 = vmatpush1.msra.mxu0 0.0
        %1389 = vmatprep.subr.mxu0 0.0
        %1390 = vmatpush1.msra.mxu0 0.0
        %1391 = vmatprep.subr.mxu0 0.0
        %1392 = vmatpush1.msra.mxu0 0.0
        %1393 = vmatprep.subr.mxu0 0.0
        %1394 = vmatpush1.msra.mxu0 0.0
        %1395 = vmatprep.subr.mxu0 0.0
        %1396 = vmatpush1.msra.mxu0 0.0
        %1397 = vmatprep.subr.mxu0 0.0
        %1398 = vmatpush1.msra.mxu0 0.0
        %1399 = vmatprep.subr.mxu0 0.0
        %1400 = vmatpush1.msra.mxu0 0.0
        %1401 = vmatprep.subr.mxu0 0.0
        %1402 = vmatpush1.msra.mxu0 0.0
        %1403 = vmatprep.mubr.f32.mxu0 0.0
        %1404 = vmatmul.mubr.f32.gmra.mrb[0].mxu0 %v1328
        %v1405 = vpop.f32.mrb[0].mxu0
        %v1406 = vadd.f32 0.0, %v1405
        %v1407 = vpop.f32.mrb[0].mxu0
        %v1408 = vadd.f32 0.0, %v1407
        %1409 = vmatprep.mubr.f32.mxu0 0.0
        %1410 = vmatmul.mubr.f32.gmra.mrb[0].mxu0 %v1331
        %v1411 = vpop.f32.mrb[0].mxu0
        %v1412 = vadd.f32 0.0, %v1411
        %v1413 = vpop.f32.mrb[0].mxu0
        %v1414 = vadd.f32 0.0, %v1413
        %1415 = vmatprep.mubr.f32.mxu0 0.0
        %1416 = vmatmul.mubr.f32.gmra.mrb[0].mxu0 %v1334
        %v1417 = vpop.f32.mrb[0].mxu0
        %v1418 = vadd.f32 0.0, %v1417
        %v1419 = vpop.f32.mrb[0].mxu0
        %v1420 = vadd.f32 0.0, %v1419
        %1421 = vmatprep.mubr.f32.mxu0 0.0
        %1422 = vmatmul.mubr.f32.gmra.mrb[0].mxu0 %v1337
        %v1423 = vpop.f32.mrb[0].mxu0
        %v1424 = vadd.f32 0.0, %v1423
        %v1425 = vpop.f32.mrb[0].mxu0
        %v1426 = vadd.f32 0.0, %v1425
        %1427 = vdwg.mxu0
        %1428 = vmatprep.subr.mxu0 %v1309
        %1429 = vmatpush1.msra.mxu0 %v1308
        %1430 = vmatprep.subr.mxu0 %v1313
        %1431 = vmatpush1.msra.mxu0 %v1312
        %1432 = vmatprep.subr.mxu0 %v1317
        %1433 = vmatpush1.msra.mxu0 %v1316
        %1434 = vmatprep.subr.mxu0 %v1321
        %1435 = vmatpush1.msra.mxu0 %v1320
        %1436 = vmatprep.subr.mxu0 0.0
        %1437 = vmatpush1.msra.mxu0 0.0
        %1438 = vmatprep.subr.mxu0 0.0
        %1439 = vmatpush1.msra.mxu0 0.0
        %1440 = vmatprep.subr.mxu0 0.0
        %1441 = vmatpush1.msra.mxu0 0.0
        %1442 = vmatprep.subr.mxu0 0.0
        %1443 = vmatpush1.msra.mxu0 0.0
        %1444 = vmatprep.subr.mxu0 0.0
        %1445 = vmatpush1.msra.mxu0 0.0
        %1446 = vmatprep.subr.mxu0 0.0
        %1447 = vmatpush1.msra.mxu0 0.0
        %1448 = vmatprep.subr.mxu0 0.0
        %1449 = vmatpush1.msra.mxu0 0.0
        %1450 = vmatprep.subr.mxu0 0.0
        %1451 = vmatpush1.msra.mxu0 0.0
        %1452 = vmatprep.subr.mxu0 0.0
        %1453 = vmatpush1.msra.mxu0 0.0
        %1454 = vmatprep.subr.mxu0 0.0
        %1455 = vmatpush1.msra.mxu0 0.0
        %1456 = vmatprep.subr.mxu0 0.0
        %1457 = vmatpush1.msra.mxu0 0.0
        %1458 = vmatprep.subr.mxu0 0.0
        %1459 = vmatpush1.msra.mxu0 0.0
        %1460 = vmatprep.subr.mxu0 0.0
        %1461 = vmatpush1.msra.mxu0 0.0
        %1462 = vmatprep.subr.mxu0 0.0
        %1463 = vmatpush1.msra.mxu0 0.0
        %1464 = vmatprep.subr.mxu0 0.0
        %1465 = vmatpush1.msra.mxu0 0.0
        %1466 = vmatprep.subr.mxu0 0.0
        %1467 = vmatpush1.msra.mxu0 0.0
        %1468 = vmatprep.subr.mxu0 0.0
        %1469 = vmatpush1.msra.mxu0 0.0
        %1470 = vmatprep.subr.mxu0 0.0
        %1471 = vmatpush1.msra.mxu0 0.0
        %1472 = vmatprep.subr.mxu0 0.0
        %1473 = vmatpush1.msra.mxu0 0.0
        %1474 = vmatprep.subr.mxu0 0.0
        %1475 = vmatpush1.msra.mxu0 0.0
        %1476 = vmatprep.subr.mxu0 0.0
        %1477 = vmatpush1.msra.mxu0 0.0
        %1478 = vmatprep.subr.mxu0 0.0
        %1479 = vmatpush1.msra.mxu0 0.0
        %1480 = vmatprep.subr.mxu0 0.0
        %1481 = vmatpush1.msra.mxu0 0.0
        %1482 = vmatprep.subr.mxu0 0.0
        %1483 = vmatpush1.msra.mxu0 0.0
        %1484 = vmatprep.subr.mxu0 0.0
        %1485 = vmatpush1.msra.mxu0 0.0
        %1486 = vmatprep.subr.mxu0 0.0
        %1487 = vmatpush1.msra.mxu0 0.0
        %1488 = vmatprep.subr.mxu0 0.0
        %1489 = vmatpush1.msra.mxu0 0.0
        %1490 = vmatprep.subr.mxu0 0.0
        %1491 = vmatpush1.msra.mxu0 0.0
        %1492 = vmatprep.mubr.f32.mxu0 0.0
        %1493 = vmatmul.mubr.f32.gmra.mrb[0].mxu0 %v1328
        %v1494 = vpop.f32.mrb[0].mxu0
        %v1495 = vadd.f32 0.0, %v1494
        %v1496 = vpop.f32.mrb[0].mxu0
        %v1497 = vadd.f32 0.0, %v1496
        %1498 = vmatprep.mubr.f32.mxu0 0.0
        %1499 = vmatmul.mubr.f32.gmra.mrb[0].mxu0 %v1331
        %v1500 = vpop.f32.mrb[0].mxu0
        %v1501 = vadd.f32 0.0, %v1500
        %v1502 = vpop.f32.mrb[0].mxu0
        %v1503 = vadd.f32 0.0, %v1502
        %1504 = vmatprep.mubr.f32.mxu0 0.0
        %1505 = vmatmul.mubr.f32.gmra.mrb[0].mxu0 %v1334
        %v1506 = vpop.f32.mrb[0].mxu0
        %v1507 = vadd.f32 0.0, %v1506
        %v1508 = vpop.f32.mrb[0].mxu0
        %v1509 = vadd.f32 0.0, %v1508
        %1510 = vmatprep.mubr.f32.mxu0 0.0
        %1511 = vmatmul.mubr.f32.gmra.mrb[0].mxu0 %v1337
        %v1512 = vpop.f32.mrb[0].mxu0
        %v1513 = vadd.f32 0.0, %v1512
        %v1514 = vpop.f32.mrb[0].mxu0
        %v1515 = vadd.f32 0.0, %v1514
        %1516 = vdwg.mxu0
        %v1517 = vadd.f32 %v1218, %v1406
        %v1518 = vadd.f32 %v1219, %v1408
        %v1519 = vadd.f32 %v1220, %v1495
        %v1520 = vadd.f32 %v1221, %v1497
        %v1521 = vadd.f32 %v1222, %v1412
        %v1522 = vadd.f32 %v1223, %v1414
        %v1523 = vadd.f32 %v1224, %v1501
        %v1524 = vadd.f32 %v1225, %v1503
        %v1525 = vadd.f32 %v1226, %v1418
        %v1526 = vadd.f32 %v1227, %v1420
        %v1527 = vadd.f32 %v1228, %v1507
        %v1528 = vadd.f32 %v1229, %v1509
        %v1529 = vadd.f32 %v1230, %v1424
        %v1530 = vadd.f32 %v1231, %v1426
        %v1531 = vadd.f32 %v1232, %v1513
        %v1532 = vadd.f32 %v1233, %v1515
        %s1533 = scalar_lea.vmem [#allocation5], 128
        %v1534 = vld [vmem:[%s1533] sm:$0xff]
        %v1535 = vld [vmem:[%s1533 + $0x8] sm:$0xff]
        %v1536 = vld [vmem:[%s1533 + $0x10] sm:$0xff]
        %v1537 = vld [vmem:[%s1533 + $0x18] sm:$0xff]
        %v1539 = vsel %vm554, %v1534, 0
        %v1542 = vsel %vm554, %v1535, 0
        %v1545 = vsel %vm554, %v1536, 0
        %v1548 = vsel %vm554, %v1537, 0
        %1550 = vmatprep.subr.mxu0 %v353
        %1551 = vmatpush1.msra.mxu0 %v352
        %1552 = vmatprep.subr.mxu0 %v357
        %1553 = vmatpush1.msra.mxu0 %v356
        %1554 = vmatprep.subr.mxu0 %v361
        %1555 = vmatpush1.msra.mxu0 %v360
        %1556 = vmatprep.subr.mxu0 %v365
        %1557 = vmatpush1.msra.mxu0 %v364
        %1558 = vmatprep.subr.mxu0 0.0
        %1559 = vmatpush1.msra.mxu0 0.0
        %1560 = vmatprep.subr.mxu0 0.0
        %1561 = vmatpush1.msra.mxu0 0.0
        %1562 = vmatprep.subr.mxu0 0.0
        %1563 = vmatpush1.msra.mxu0 0.0
        %1564 = vmatprep.subr.mxu0 0.0
        %1565 = vmatpush1.msra.mxu0 0.0
        %1566 = vmatprep.subr.mxu0 0.0
        %1567 = vmatpush1.msra.mxu0 0.0
        %1568 = vmatprep.subr.mxu0 0.0
        %1569 = vmatpush1.msra.mxu0 0.0
        %1570 = vmatprep.subr.mxu0 0.0
        %1571 = vmatpush1.msra.mxu0 0.0
        %1572 = vmatprep.subr.mxu0 0.0
        %1573 = vmatpush1.msra.mxu0 0.0
        %1574 = vmatprep.subr.mxu0 0.0
        %1575 = vmatpush1.msra.mxu0 0.0
        %1576 = vmatprep.subr.mxu0 0.0
        %1577 = vmatpush1.msra.mxu0 0.0
        %1578 = vmatprep.subr.mxu0 0.0
        %1579 = vmatpush1.msra.mxu0 0.0
        %1580 = vmatprep.subr.mxu0 0.0
        %1581 = vmatpush1.msra.mxu0 0.0
        %1582 = vmatprep.subr.mxu0 0.0
        %1583 = vmatpush1.msra.mxu0 0.0
        %1584 = vmatprep.subr.mxu0 0.0
        %1585 = vmatpush1.msra.mxu0 0.0
        %1586 = vmatprep.subr.mxu0 0.0
        %1587 = vmatpush1.msra.mxu0 0.0
        %1588 = vmatprep.subr.mxu0 0.0
        %1589 = vmatpush1.msra.mxu0 0.0
        %1590 = vmatprep.subr.mxu0 0.0
        %1591 = vmatpush1.msra.mxu0 0.0
        %1592 = vmatprep.subr.mxu0 0.0
        %1593 = vmatpush1.msra.mxu0 0.0
        %1594 = vmatprep.subr.mxu0 0.0
        %1595 = vmatpush1.msra.mxu0 0.0
        %1596 = vmatprep.subr.mxu0 0.0
        %1597 = vmatpush1.msra.mxu0 0.0
        %1598 = vmatprep.subr.mxu0 0.0
        %1599 = vmatpush1.msra.mxu0 0.0
        %1600 = vmatprep.subr.mxu0 0.0
        %1601 = vmatpush1.msra.mxu0 0.0
        %1602 = vmatprep.subr.mxu0 0.0
        %1603 = vmatpush1.msra.mxu0 0.0
        %1604 = vmatprep.subr.mxu0 0.0
        %1605 = vmatpush1.msra.mxu0 0.0
        %1606 = vmatprep.subr.mxu0 0.0
        %1607 = vmatpush1.msra.mxu0 0.0
        %1608 = vmatprep.subr.mxu0 0.0
        %1609 = vmatpush1.msra.mxu0 0.0
        %1610 = vmatprep.subr.mxu0 0.0
        %1611 = vmatpush1.msra.mxu0 0.0
        %1612 = vmatprep.subr.mxu0 0.0
        %1613 = vmatpush1.msra.mxu0 0.0
        %1614 = vmatprep.mubr.f32.mxu0 0.0
        %1615 = vmatmul.mubr.f32.gmra.mrb[0].mxu0 %v1539
        %v1616 = vpop.f32.mrb[0].mxu0
        %v1617 = vadd.f32 0.0, %v1616
        %v1618 = vpop.f32.mrb[0].mxu0
        %v1619 = vadd.f32 0.0, %v1618
        %1620 = vmatprep.mubr.f32.mxu0 0.0
        %1621 = vmatmul.mubr.f32.gmra.mrb[0].mxu0 %v1542
        %v1622 = vpop.f32.mrb[0].mxu0
        %v1623 = vadd.f32 0.0, %v1622
        %v1624 = vpop.f32.mrb[0].mxu0
        %v1625 = vadd.f32 0.0, %v1624
        %1626 = vmatprep.mubr.f32.mxu0 0.0
        %1627 = vmatmul.mubr.f32.gmra.mrb[0].mxu0 %v1545
        %v1628 = vpop.f32.mrb[0].mxu0
        %v1629 = vadd.f32 0.0, %v1628
        %v1630 = vpop.f32.mrb[0].mxu0
        %v1631 = vadd.f32 0.0, %v1630
        %1632 = vmatprep.mubr.f32.mxu0 0.0
        %1633 = vmatmul.mubr.f32.gmra.mrb[0].mxu0 %v1548
        %v1634 = vpop.f32.mrb[0].mxu0
        %v1635 = vadd.f32 0.0, %v1634
        %v1636 = vpop.f32.mrb[0].mxu0
        %v1637 = vadd.f32 0.0, %v1636
        %1638 = vdwg.mxu0
        %1639 = vmatprep.subr.mxu0 %v355
        %1640 = vmatpush1.msra.mxu0 %v354
        %1641 = vmatprep.subr.mxu0 %v359
        %1642 = vmatpush1.msra.mxu0 %v358
        %1643 = vmatprep.subr.mxu0 %v363
        %1644 = vmatpush1.msra.mxu0 %v362
        %1645 = vmatprep.subr.mxu0 %v367
        %1646 = vmatpush1.msra.mxu0 %v366
        %1647 = vmatprep.subr.mxu0 0.0
        %1648 = vmatpush1.msra.mxu0 0.0
        %1649 = vmatprep.subr.mxu0 0.0
        %1650 = vmatpush1.msra.mxu0 0.0
        %1651 = vmatprep.subr.mxu0 0.0
        %1652 = vmatpush1.msra.mxu0 0.0
        %1653 = vmatprep.subr.mxu0 0.0
        %1654 = vmatpush1.msra.mxu0 0.0
        %1655 = vmatprep.subr.mxu0 0.0
        %1656 = vmatpush1.msra.mxu0 0.0
        %1657 = vmatprep.subr.mxu0 0.0
        %1658 = vmatpush1.msra.mxu0 0.0
        %1659 = vmatprep.subr.mxu0 0.0
        %1660 = vmatpush1.msra.mxu0 0.0
        %1661 = vmatprep.subr.mxu0 0.0
        %1662 = vmatpush1.msra.mxu0 0.0
        %1663 = vmatprep.subr.mxu0 0.0
        %1664 = vmatpush1.msra.mxu0 0.0
        %1665 = vmatprep.subr.mxu0 0.0
        %1666 = vmatpush1.msra.mxu0 0.0
        %1667 = vmatprep.subr.mxu0 0.0
        %1668 = vmatpush1.msra.mxu0 0.0
        %1669 = vmatprep.subr.mxu0 0.0
        %1670 = vmatpush1.msra.mxu0 0.0
        %1671 = vmatprep.subr.mxu0 0.0
        %1672 = vmatpush1.msra.mxu0 0.0
        %1673 = vmatprep.subr.mxu0 0.0
        %1674 = vmatpush1.msra.mxu0 0.0
        %1675 = vmatprep.subr.mxu0 0.0
        %1676 = vmatpush1.msra.mxu0 0.0
        %1677 = vmatprep.subr.mxu0 0.0
        %1678 = vmatpush1.msra.mxu0 0.0
        %1679 = vmatprep.subr.mxu0 0.0
        %1680 = vmatpush1.msra.mxu0 0.0
        %1681 = vmatprep.subr.mxu0 0.0
        %1682 = vmatpush1.msra.mxu0 0.0
        %1683 = vmatprep.subr.mxu0 0.0
        %1684 = vmatpush1.msra.mxu0 0.0
        %1685 = vmatprep.subr.mxu0 0.0
        %1686 = vmatpush1.msra.mxu0 0.0
        %1687 = vmatprep.subr.mxu0 0.0
        %1688 = vmatpush1.msra.mxu0 0.0
        %1689 = vmatprep.subr.mxu0 0.0
        %1690 = vmatpush1.msra.mxu0 0.0
        %1691 = vmatprep.subr.mxu0 0.0
        %1692 = vmatpush1.msra.mxu0 0.0
        %1693 = vmatprep.subr.mxu0 0.0
        %1694 = vmatpush1.msra.mxu0 0.0
        %1695 = vmatprep.subr.mxu0 0.0
        %1696 = vmatpush1.msra.mxu0 0.0
        %1697 = vmatprep.subr.mxu0 0.0
        %1698 = vmatpush1.msra.mxu0 0.0
        %1699 = vmatprep.subr.mxu0 0.0
        %1700 = vmatpush1.msra.mxu0 0.0
        %1701 = vmatprep.subr.mxu0 0.0
        %1702 = vmatpush1.msra.mxu0 0.0
        %1703 = vmatprep.mubr.f32.mxu0 0.0
        %1704 = vmatmul.mubr.f32.gmra.mrb[0].mxu0 %v1539
        %v1705 = vpop.f32.mrb[0].mxu0
        %v1706 = vadd.f32 0.0, %v1705
        %v1707 = vpop.f32.mrb[0].mxu0
        %v1708 = vadd.f32 0.0, %v1707
        %1709 = vmatprep.mubr.f32.mxu0 0.0
        %1710 = vmatmul.mubr.f32.gmra.mrb[0].mxu0 %v1542
        %v1711 = vpop.f32.mrb[0].mxu0
        %v1712 = vadd.f32 0.0, %v1711
        %v1713 = vpop.f32.mrb[0].mxu0
        %v1714 = vadd.f32 0.0, %v1713
        %1715 = vmatprep.mubr.f32.mxu0 0.0
        %1716 = vmatmul.mubr.f32.gmra.mrb[0].mxu0 %v1545
        %v1717 = vpop.f32.mrb[0].mxu0
        %v1718 = vadd.f32 0.0, %v1717
        %v1719 = vpop.f32.mrb[0].mxu0
        %v1720 = vadd.f32 0.0, %v1719
        %1721 = vmatprep.mubr.f32.mxu0 0.0
        %1722 = vmatmul.mubr.f32.gmra.mrb[0].mxu0 %v1548
        %v1723 = vpop.f32.mrb[0].mxu0
        %v1724 = vadd.f32 0.0, %v1723
        %v1725 = vpop.f32.mrb[0].mxu0
        %v1726 = vadd.f32 0.0, %v1725
        %1727 = vdwg.mxu0
        %v1728 = vadd.f32 %v1517, %v1617
        %v1729 = vadd.f32 %v1518, %v1619
        %v1730 = vadd.f32 %v1519, %v1706
        %v1731 = vadd.f32 %v1520, %v1708
        %v1732 = vadd.f32 %v1521, %v1623
        %v1733 = vadd.f32 %v1522, %v1625
        %v1734 = vadd.f32 %v1523, %v1712
        %v1735 = vadd.f32 %v1524, %v1714
        %v1736 = vadd.f32 %v1525, %v1629
        %v1737 = vadd.f32 %v1526, %v1631
        %v1738 = vadd.f32 %v1527, %v1718
        %v1739 = vadd.f32 %v1528, %v1720
        %v1740 = vadd.f32 %v1529, %v1635
        %v1741 = vadd.f32 %v1530, %v1637
        %v1742 = vadd.f32 %v1531, %v1724
        %v1743 = vadd.f32 %v1532, %v1726
        %1744 = vrot.lane.b32.xlu0 %v352, 127
        %v1745 = vpop.permute.xlu0 %1744
        %1746 = vrot.lane.b32.xlu0 %v356, 127
        %v1747 = vpop.permute.xlu0 %1746
        %1748 = vrot.lane.b32.xlu0 %v360, 127
        %v1749 = vpop.permute.xlu0 %1748
        %1750 = vrot.lane.b32.xlu0 %v364, 127
        %v1751 = vpop.permute.xlu0 %1750
        %1752 = vrot.lane.b32.xlu0 %v353, 127
        %v1753 = vpop.permute.xlu0 %1752
        %1754 = vrot.lane.b32.xlu0 %v357, 127
        %v1755 = vpop.permute.xlu0 %1754
        %1756 = vrot.lane.b32.xlu0 %v361, 127
        %v1757 = vpop.permute.xlu0 %1756
        %1758 = vrot.lane.b32.xlu0 %v365, 127
        %v1759 = vpop.permute.xlu0 %1758
        %1760 = vrot.lane.b32.xlu0 %v354, 127
        %v1761 = vpop.permute.xlu0 %1760
        %1762 = vrot.lane.b32.xlu0 %v358, 127
        %v1763 = vpop.permute.xlu0 %1762
        %1764 = vrot.lane.b32.xlu0 %v362, 127
        %v1765 = vpop.permute.xlu0 %1764
        %1766 = vrot.lane.b32.xlu0 %v366, 127
        %v1767 = vpop.permute.xlu0 %1766
        %1768 = vrot.lane.b32.xlu0 %v355, 127
        %v1769 = vpop.permute.xlu0 %1768
        %1770 = vrot.lane.b32.xlu0 %v359, 127
        %v1771 = vpop.permute.xlu0 %1770
        %1772 = vrot.lane.b32.xlu0 %v363, 127
        %v1773 = vpop.permute.xlu0 %1772
        %1774 = vrot.lane.b32.xlu0 %v367, 127
        %v1775 = vpop.permute.xlu0 %1774
        %vm1776 = vcmp.lt.s32.totalorder %v401, 127
        %v1777 = vsel %vm1776, %v1761, %v1769
        %v1778 = vsel %vm1776, %v1763, %v1771
        %v1779 = vsel %vm1776, %v1765, %v1773
        %v1780 = vsel %vm1776, %v1767, %v1775
        %v1781 = vsel %vm1776, %v1753, %v1761
        %v1782 = vsel %vm1776, %v1755, %v1763
        %v1783 = vsel %vm1776, %v1757, %v1765
        %v1784 = vsel %vm1776, %v1759, %v1767
        %v1785 = vsel %vm1776, %v1745, %v1753
        %v1786 = vsel %vm1776, %v1747, %v1755
        %v1787 = vsel %vm1776, %v1749, %v1757
        %v1788 = vsel %vm1776, %v1751, %v1759
        %v1789 = vsel %vm1776, %v1769, %v1745
        %v1790 = vsel %vm1776, %v1771, %v1747
        %v1791 = vsel %vm1776, %v1773, %v1749
        %v1792 = vsel %vm1776, %v1775, %v1751
        %s1793 = scalar_lea.vmem [#allocation8], 5
        %v1794 = vld [vmem:[%s1793] ss:$8 sm:$0xf]
        %v1796 = vlaneseq
        %v1797 = vshrl.u32 %v1796, 7
        %v1798 = vsub.s32 0, %v1797
        %v1799 = vrot.slane %v1794, %v1798
        %v1800 = vlaneseq
        %v1801 = vshrl.u32 %v1800, 7
        %v1802 = vsub.s32 1, %v1801
        %v1803 = vrot.slane %v1794, %v1802
        %v1804 = vlaneseq
        %v1805 = vshrl.u32 %v1804, 7
        %v1806 = vsub.s32 2, %v1805
        %v1807 = vrot.slane %v1794, %v1806
        %v1808 = vlaneseq
        %v1809 = vshrl.u32 %v1808, 7
        %v1810 = vsub.s32 3, %v1809
        %v1811 = vrot.slane %v1794, %v1810
        %v1816 = vmul.f32 %v1785, %v1799
        %v1817 = vmul.f32 %v1781, %v1803
        %v1818 = vmul.f32 %v1777, %v1807
        %v1819 = vmul.f32 %v1789, %v1811
        %v1820 = vmul.f32 %v1786, %v1799
        %v1821 = vmul.f32 %v1782, %v1803
        %v1822 = vmul.f32 %v1778, %v1807
        %v1823 = vmul.f32 %v1790, %v1811
        %v1824 = vmul.f32 %v1787, %v1799
        %v1825 = vmul.f32 %v1783, %v1803
        %v1826 = vmul.f32 %v1779, %v1807
        %v1827 = vmul.f32 %v1791, %v1811
        %v1828 = vmul.f32 %v1788, %v1799
        %v1829 = vmul.f32 %v1784, %v1803
        %v1830 = vmul.f32 %v1780, %v1807
        %v1831 = vmul.f32 %v1792, %v1811
        %s1832 = scalar_lea.vmem [#allocation5], 160
        %v1833 = vld [vmem:[%s1832] sm:$0xff]
        %v1834 = vld [vmem:[%s1832 + $0x8] sm:$0xff]
        %v1835 = vld [vmem:[%s1832 + $0x10] sm:$0xff]
        %v1836 = vld [vmem:[%s1832 + $0x18] sm:$0xff]
        %v1838 = vsel %vm554, %v1833, 0
        %v1841 = vsel %vm554, %v1834, 0
        %v1844 = vsel %vm554, %v1835, 0
        %v1847 = vsel %vm554, %v1836, 0
        %1849 = vmatprep.subr.mxu0 %v1817
        %1850 = vmatpush1.msra.mxu0 %v1816
        %1851 = vmatprep.subr.mxu0 %v1821
        %1852 = vmatpush1.msra.mxu0 %v1820
        %1853 = vmatprep.subr.mxu0 %v1825
        %1854 = vmatpush1.msra.mxu0 %v1824
        %1855 = vmatprep.subr.mxu0 %v1829
        %1856 = vmatpush1.msra.mxu0 %v1828
        %1857 = vmatprep.subr.mxu0 0.0
        %1858 = vmatpush1.msra.mxu0 0.0
        %1859 = vmatprep.subr.mxu0 0.0
        %1860 = vmatpush1.msra.mxu0 0.0
        %1861 = vmatprep.subr.mxu0 0.0
        %1862 = vmatpush1.msra.mxu0 0.0
        %1863 = vmatprep.subr.mxu0 0.0
        %1864 = vmatpush1.msra.mxu0 0.0
        %1865 = vmatprep.subr.mxu0 0.0
        %1866 = vmatpush1.msra.mxu0 0.0
        %1867 = vmatprep.subr.mxu0 0.0
        %1868 = vmatpush1.msra.mxu0 0.0
        %1869 = vmatprep.subr.mxu0 0.0
        %1870 = vmatpush1.msra.mxu0 0.0
        %1871 = vmatprep.subr.mxu0 0.0
        %1872 = vmatpush1.msra.mxu0 0.0
        %1873 = vmatprep.subr.mxu0 0.0
        %1874 = vmatpush1.msra.mxu0 0.0
        %1875 = vmatprep.subr.mxu0 0.0
        %1876 = vmatpush1.msra.mxu0 0.0
        %1877 = vmatprep.subr.mxu0 0.0
        %1878 = vmatpush1.msra.mxu0 0.0
        %1879 = vmatprep.subr.mxu0 0.0
        %1880 = vmatpush1.msra.mxu0 0.0
        %1881 = vmatprep.subr.mxu0 0.0
        %1882 = vmatpush1.msra.mxu0 0.0
        %1883 = vmatprep.subr.mxu0 0.0
        %1884 = vmatpush1.msra.mxu0 0.0
        %1885 = vmatprep.subr.mxu0 0.0
        %1886 = vmatpush1.msra.mxu0 0.0
        %1887 = vmatprep.subr.mxu0 0.0
        %1888 = vmatpush1.msra.mxu0 0.0
        %1889 = vmatprep.subr.mxu0 0.0
        %1890 = vmatpush1.msra.mxu0 0.0
        %1891 = vmatprep.subr.mxu0 0.0
        %1892 = vmatpush1.msra.mxu0 0.0
        %1893 = vmatprep.subr.mxu0 0.0
        %1894 = vmatpush1.msra.mxu0 0.0
        %1895 = vmatprep.subr.mxu0 0.0
        %1896 = vmatpush1.msra.mxu0 0.0
        %1897 = vmatprep.subr.mxu0 0.0
        %1898 = vmatpush1.msra.mxu0 0.0
        %1899 = vmatprep.subr.mxu0 0.0
        %1900 = vmatpush1.msra.mxu0 0.0
        %1901 = vmatprep.subr.mxu0 0.0
        %1902 = vmatpush1.msra.mxu0 0.0
        %1903 = vmatprep.subr.mxu0 0.0
        %1904 = vmatpush1.msra.mxu0 0.0
        %1905 = vmatprep.subr.mxu0 0.0
        %1906 = vmatpush1.msra.mxu0 0.0
        %1907 = vmatprep.subr.mxu0 0.0
        %1908 = vmatpush1.msra.mxu0 0.0
        %1909 = vmatprep.subr.mxu0 0.0
        %1910 = vmatpush1.msra.mxu0 0.0
        %1911 = vmatprep.subr.mxu0 0.0
        %1912 = vmatpush1.msra.mxu0 0.0
        %1913 = vmatprep.mubr.f32.mxu0 0.0
        %1914 = vmatmul.mubr.f32.gmra.mrb[0].mxu0 %v1838
        %v1915 = vpop.f32.mrb[0].mxu0
        %v1916 = vadd.f32 0.0, %v1915
        %v1917 = vpop.f32.mrb[0].mxu0
        %v1918 = vadd.f32 0.0, %v1917
        %1919 = vmatprep.mubr.f32.mxu0 0.0
        %1920 = vmatmul.mubr.f32.gmra.mrb[0].mxu0 %v1841
        %v1921 = vpop.f32.mrb[0].mxu0
        %v1922 = vadd.f32 0.0, %v1921
        %v1923 = vpop.f32.mrb[0].mxu0
        %v1924 = vadd.f32 0.0, %v1923
        %1925 = vmatprep.mubr.f32.mxu0 0.0
        %1926 = vmatmul.mubr.f32.gmra.mrb[0].mxu0 %v1844
        %v1927 = vpop.f32.mrb[0].mxu0
        %v1928 = vadd.f32 0.0, %v1927
        %v1929 = vpop.f32.mrb[0].mxu0
        %v1930 = vadd.f32 0.0, %v1929
        %1931 = vmatprep.mubr.f32.mxu0 0.0
        %1932 = vmatmul.mubr.f32.gmra.mrb[0].mxu0 %v1847
        %v1933 = vpop.f32.mrb[0].mxu0
        %v1934 = vadd.f32 0.0, %v1933
        %v1935 = vpop.f32.mrb[0].mxu0
        %v1936 = vadd.f32 0.0, %v1935
        %1937 = vdwg.mxu0
        %1938 = vmatprep.subr.mxu0 %v1819
        %1939 = vmatpush1.msra.mxu0 %v1818
        %1940 = vmatprep.subr.mxu0 %v1823
        %1941 = vmatpush1.msra.mxu0 %v1822
        %1942 = vmatprep.subr.mxu0 %v1827
        %1943 = vmatpush1.msra.mxu0 %v1826
        %1944 = vmatprep.subr.mxu0 %v1831
        %1945 = vmatpush1.msra.mxu0 %v1830
        %1946 = vmatprep.subr.mxu0 0.0
        %1947 = vmatpush1.msra.mxu0 0.0
        %1948 = vmatprep.subr.mxu0 0.0
        %1949 = vmatpush1.msra.mxu0 0.0
        %1950 = vmatprep.subr.mxu0 0.0
        %1951 = vmatpush1.msra.mxu0 0.0
        %1952 = vmatprep.subr.mxu0 0.0
        %1953 = vmatpush1.msra.mxu0 0.0
        %1954 = vmatprep.subr.mxu0 0.0
        %1955 = vmatpush1.msra.mxu0 0.0
        %1956 = vmatprep.subr.mxu0 0.0
        %1957 = vmatpush1.msra.mxu0 0.0
        %1958 = vmatprep.subr.mxu0 0.0
        %1959 = vmatpush1.msra.mxu0 0.0
        %1960 = vmatprep.subr.mxu0 0.0
        %1961 = vmatpush1.msra.mxu0 0.0
        %1962 = vmatprep.subr.mxu0 0.0
        %1963 = vmatpush1.msra.mxu0 0.0
        %1964 = vmatprep.subr.mxu0 0.0
        %1965 = vmatpush1.msra.mxu0 0.0
        %1966 = vmatprep.subr.mxu0 0.0
        %1967 = vmatpush1.msra.mxu0 0.0
        %1968 = vmatprep.subr.mxu0 0.0
        %1969 = vmatpush1.msra.mxu0 0.0
        %1970 = vmatprep.subr.mxu0 0.0
        %1971 = vmatpush1.msra.mxu0 0.0
        %1972 = vmatprep.subr.mxu0 0.0
        %1973 = vmatpush1.msra.mxu0 0.0
        %1974 = vmatprep.subr.mxu0 0.0
        %1975 = vmatpush1.msra.mxu0 0.0
        %1976 = vmatprep.subr.mxu0 0.0
        %1977 = vmatpush1.msra.mxu0 0.0
        %1978 = vmatprep.subr.mxu0 0.0
        %1979 = vmatpush1.msra.mxu0 0.0
        %1980 = vmatprep.subr.mxu0 0.0
        %1981 = vmatpush1.msra.mxu0 0.0
        %1982 = vmatprep.subr.mxu0 0.0
        %1983 = vmatpush1.msra.mxu0 0.0
        %1984 = vmatprep.subr.mxu0 0.0
        %1985 = vmatpush1.msra.mxu0 0.0
        %1986 = vmatprep.subr.mxu0 0.0
        %1987 = vmatpush1.msra.mxu0 0.0
        %1988 = vmatprep.subr.mxu0 0.0
        %1989 = vmatpush1.msra.mxu0 0.0
        %1990 = vmatprep.subr.mxu0 0.0
        %1991 = vmatpush1.msra.mxu0 0.0
        %1992 = vmatprep.subr.mxu0 0.0
        %1993 = vmatpush1.msra.mxu0 0.0
        %1994 = vmatprep.subr.mxu0 0.0
        %1995 = vmatpush1.msra.mxu0 0.0
        %1996 = vmatprep.subr.mxu0 0.0
        %1997 = vmatpush1.msra.mxu0 0.0
        %1998 = vmatprep.subr.mxu0 0.0
        %1999 = vmatpush1.msra.mxu0 0.0
        %2000 = vmatprep.subr.mxu0 0.0
        %2001 = vmatpush1.msra.mxu0 0.0
        %2002 = vmatprep.mubr.f32.mxu0 0.0
        %2003 = vmatmul.mubr.f32.gmra.mrb[0].mxu0 %v1838
        %v2004 = vpop.f32.mrb[0].mxu0
        %v2005 = vadd.f32 0.0, %v2004
        %v2006 = vpop.f32.mrb[0].mxu0
        %v2007 = vadd.f32 0.0, %v2006
        %2008 = vmatprep.mubr.f32.mxu0 0.0
        %2009 = vmatmul.mubr.f32.gmra.mrb[0].mxu0 %v1841
        %v2010 = vpop.f32.mrb[0].mxu0
        %v2011 = vadd.f32 0.0, %v2010
        %v2012 = vpop.f32.mrb[0].mxu0
        %v2013 = vadd.f32 0.0, %v2012
        %2014 = vmatprep.mubr.f32.mxu0 0.0
        %2015 = vmatmul.mubr.f32.gmra.mrb[0].mxu0 %v1844
        %v2016 = vpop.f32.mrb[0].mxu0
        %v2017 = vadd.f32 0.0, %v2016
        %v2018 = vpop.f32.mrb[0].mxu0
        %v2019 = vadd.f32 0.0, %v2018
        %2020 = vmatprep.mubr.f32.mxu0 0.0
        %2021 = vmatmul.mubr.f32.gmra.mrb[0].mxu0 %v1847
        %v2022 = vpop.f32.mrb[0].mxu0
        %v2023 = vadd.f32 0.0, %v2022
        %v2024 = vpop.f32.mrb[0].mxu0
        %v2025 = vadd.f32 0.0, %v2024
        %2026 = vdwg.mxu0
        %v2027 = vadd.f32 %v1728, %v1916
        %v2028 = vadd.f32 %v1729, %v1918
        %v2029 = vadd.f32 %v1730, %v2005
        %v2030 = vadd.f32 %v1731, %v2007
        %v2031 = vadd.f32 %v1732, %v1922
        %v2032 = vadd.f32 %v1733, %v1924
        %v2033 = vadd.f32 %v1734, %v2011
        %v2034 = vadd.f32 %v1735, %v2013
        %v2035 = vadd.f32 %v1736, %v1928
        %v2036 = vadd.f32 %v1737, %v1930
        %v2037 = vadd.f32 %v1738, %v2017
        %v2038 = vadd.f32 %v1739, %v2019
        %v2039 = vadd.f32 %v1740, %v1934
        %v2040 = vadd.f32 %v1741, %v1936
        %v2041 = vadd.f32 %v1742, %v2023
        %v2042 = vadd.f32 %v1743, %v2025
        %2043 = vrot.lane.b32.xlu0 %v352, 113
        %v2044 = vpop.permute.xlu0 %2043
        %2045 = vrot.lane.b32.xlu0 %v356, 113
        %v2046 = vpop.permute.xlu0 %2045
        %2047 = vrot.lane.b32.xlu0 %v360, 113
        %v2048 = vpop.permute.xlu0 %2047
        %2049 = vrot.lane.b32.xlu0 %v364, 113
        %v2050 = vpop.permute.xlu0 %2049
        %2051 = vrot.lane.b32.xlu0 %v353, 113
        %v2052 = vpop.permute.xlu0 %2051
        %2053 = vrot.lane.b32.xlu0 %v357, 113
        %v2054 = vpop.permute.xlu0 %2053
        %2055 = vrot.lane.b32.xlu0 %v361, 113
        %v2056 = vpop.permute.xlu0 %2055
        %2057 = vrot.lane.b32.xlu0 %v365, 113
        %v2058 = vpop.permute.xlu0 %2057
        %2059 = vrot.lane.b32.xlu0 %v354, 113
        %v2060 = vpop.permute.xlu0 %2059
        %2061 = vrot.lane.b32.xlu0 %v358, 113
        %v2062 = vpop.permute.xlu0 %2061
        %2063 = vrot.lane.b32.xlu0 %v362, 113
        %v2064 = vpop.permute.xlu0 %2063
        %2065 = vrot.lane.b32.xlu0 %v366, 113
        %v2066 = vpop.permute.xlu0 %2065
        %2067 = vrot.lane.b32.xlu0 %v355, 113
        %v2068 = vpop.permute.xlu0 %2067
        %2069 = vrot.lane.b32.xlu0 %v359, 113
        %v2070 = vpop.permute.xlu0 %2069
        %2071 = vrot.lane.b32.xlu0 %v363, 113
        %v2072 = vpop.permute.xlu0 %2071
        %2073 = vrot.lane.b32.xlu0 %v367, 113
        %v2074 = vpop.permute.xlu0 %2073
        %vm2075 = vcmp.lt.s32.totalorder %v401, 113
        %v2076 = vsel %vm2075, %v2060, %v2068
        %v2077 = vsel %vm2075, %v2062, %v2070
        %v2078 = vsel %vm2075, %v2064, %v2072
        %v2079 = vsel %vm2075, %v2066, %v2074
        %v2080 = vsel %vm2075, %v2052, %v2060
        %v2081 = vsel %vm2075, %v2054, %v2062
        %v2082 = vsel %vm2075, %v2056, %v2064
        %v2083 = vsel %vm2075, %v2058, %v2066
        %v2084 = vsel %vm2075, %v2044, %v2052
        %v2085 = vsel %vm2075, %v2046, %v2054
        %v2086 = vsel %vm2075, %v2048, %v2056
        %v2087 = vsel %vm2075, %v2050, %v2058
        %v2088 = vsel %vm2075, %v2068, %v2044
        %v2089 = vsel %vm2075, %v2070, %v2046
        %v2090 = vsel %vm2075, %v2072, %v2048
        %v2091 = vsel %vm2075, %v2074, %v2050
        %s2092 = scalar_lea.vmem [#allocation8], 6
        %v2093 = vld [vmem:[%s2092] ss:$8 sm:$0xf]
        %v2095 = vlaneseq
        %v2096 = vshrl.u32 %v2095, 7
        %v2097 = vsub.s32 0, %v2096
        %v2098 = vrot.slane %v2093, %v2097
        %v2099 = vlaneseq
        %v2100 = vshrl.u32 %v2099, 7
        %v2101 = vsub.s32 1, %v2100
        %v2102 = vrot.slane %v2093, %v2101
        %v2103 = vlaneseq
        %v2104 = vshrl.u32 %v2103, 7
        %v2105 = vsub.s32 2, %v2104
        %v2106 = vrot.slane %v2093, %v2105
        %v2107 = vlaneseq
        %v2108 = vshrl.u32 %v2107, 7
        %v2109 = vsub.s32 3, %v2108
        %v2110 = vrot.slane %v2093, %v2109
        %v2115 = vmul.f32 %v2084, %v2098
        %v2116 = vmul.f32 %v2080, %v2102
        %v2117 = vmul.f32 %v2076, %v2106
        %v2118 = vmul.f32 %v2088, %v2110
        %v2119 = vmul.f32 %v2085, %v2098
        %v2120 = vmul.f32 %v2081, %v2102
        %v2121 = vmul.f32 %v2077, %v2106
        %v2122 = vmul.f32 %v2089, %v2110
        %v2123 = vmul.f32 %v2086, %v2098
        %v2124 = vmul.f32 %v2082, %v2102
        %v2125 = vmul.f32 %v2078, %v2106
        %v2126 = vmul.f32 %v2090, %v2110
        %v2127 = vmul.f32 %v2087, %v2098
        %v2128 = vmul.f32 %v2083, %v2102
        %v2129 = vmul.f32 %v2079, %v2106
        %v2130 = vmul.f32 %v2091, %v2110
        %s2131 = scalar_lea.vmem [#allocation5], 192
        %v2132 = vld [vmem:[%s2131] sm:$0xff]
        %v2133 = vld [vmem:[%s2131 + $0x8] sm:$0xff]
        %v2134 = vld [vmem:[%s2131 + $0x10] sm:$0xff]
        %v2135 = vld [vmem:[%s2131 + $0x18] sm:$0xff]
        %v2137 = vsel %vm554, %v2132, 0
        %v2140 = vsel %vm554, %v2133, 0
        %v2143 = vsel %vm554, %v2134, 0
        %v2146 = vsel %vm554, %v2135, 0
        %2148 = vmatprep.subr.mxu0 %v2116
        %2149 = vmatpush1.msra.mxu0 %v2115
        %2150 = vmatprep.subr.mxu0 %v2120
        %2151 = vmatpush1.msra.mxu0 %v2119
        %2152 = vmatprep.subr.mxu0 %v2124
        %2153 = vmatpush1.msra.mxu0 %v2123
        %2154 = vmatprep.subr.mxu0 %v2128
        %2155 = vmatpush1.msra.mxu0 %v2127
        %2156 = vmatprep.subr.mxu0 0.0
        %2157 = vmatpush1.msra.mxu0 0.0
        %2158 = vmatprep.subr.mxu0 0.0
        %2159 = vmatpush1.msra.mxu0 0.0
        %2160 = vmatprep.subr.mxu0 0.0
        %2161 = vmatpush1.msra.mxu0 0.0
        %2162 = vmatprep.subr.mxu0 0.0
        %2163 = vmatpush1.msra.mxu0 0.0
        %2164 = vmatprep.subr.mxu0 0.0
        %2165 = vmatpush1.msra.mxu0 0.0
        %2166 = vmatprep.subr.mxu0 0.0
        %2167 = vmatpush1.msra.mxu0 0.0
        %2168 = vmatprep.subr.mxu0 0.0
        %2169 = vmatpush1.msra.mxu0 0.0
        %2170 = vmatprep.subr.mxu0 0.0
        %2171 = vmatpush1.msra.mxu0 0.0
        %2172 = vmatprep.subr.mxu0 0.0
        %2173 = vmatpush1.msra.mxu0 0.0
        %2174 = vmatprep.subr.mxu0 0.0
        %2175 = vmatpush1.msra.mxu0 0.0
        %2176 = vmatprep.subr.mxu0 0.0
        %2177 = vmatpush1.msra.mxu0 0.0
        %2178 = vmatprep.subr.mxu0 0.0
        %2179 = vmatpush1.msra.mxu0 0.0
        %2180 = vmatprep.subr.mxu0 0.0
        %2181 = vmatpush1.msra.mxu0 0.0
        %2182 = vmatprep.subr.mxu0 0.0
        %2183 = vmatpush1.msra.mxu0 0.0
        %2184 = vmatprep.subr.mxu0 0.0
        %2185 = vmatpush1.msra.mxu0 0.0
        %2186 = vmatprep.subr.mxu0 0.0
        %2187 = vmatpush1.msra.mxu0 0.0
        %2188 = vmatprep.subr.mxu0 0.0
        %2189 = vmatpush1.msra.mxu0 0.0
        %2190 = vmatprep.subr.mxu0 0.0
        %2191 = vmatpush1.msra.mxu0 0.0
        %2192 = vmatprep.subr.mxu0 0.0
        %2193 = vmatpush1.msra.mxu0 0.0
        %2194 = vmatprep.subr.mxu0 0.0
        %2195 = vmatpush1.msra.mxu0 0.0
        %2196 = vmatprep.subr.mxu0 0.0
        %2197 = vmatpush1.msra.mxu0 0.0
        %2198 = vmatprep.subr.mxu0 0.0
        %2199 = vmatpush1.msra.mxu0 0.0
        %2200 = vmatprep.subr.mxu0 0.0
        %2201 = vmatpush1.msra.mxu0 0.0
        %2202 = vmatprep.subr.mxu0 0.0
        %2203 = vmatpush1.msra.mxu0 0.0
        %2204 = vmatprep.subr.mxu0 0.0
        %2205 = vmatpush1.msra.mxu0 0.0
        %2206 = vmatprep.subr.mxu0 0.0
        %2207 = vmatpush1.msra.mxu0 0.0
        %2208 = vmatprep.subr.mxu0 0.0
        %2209 = vmatpush1.msra.mxu0 0.0
        %2210 = vmatprep.subr.mxu0 0.0
        %2211 = vmatpush1.msra.mxu0 0.0
        %2212 = vmatprep.mubr.f32.mxu0 0.0
        %2213 = vmatmul.mubr.f32.gmra.mrb[0].mxu0 %v2137
        %v2214 = vpop.f32.mrb[0].mxu0
        %v2215 = vadd.f32 0.0, %v2214
        %v2216 = vpop.f32.mrb[0].mxu0
        %v2217 = vadd.f32 0.0, %v2216
        %2218 = vmatprep.mubr.f32.mxu0 0.0
        %2219 = vmatmul.mubr.f32.gmra.mrb[0].mxu0 %v2140
        %v2220 = vpop.f32.mrb[0].mxu0
        %v2221 = vadd.f32 0.0, %v2220
        %v2222 = vpop.f32.mrb[0].mxu0
        %v2223 = vadd.f32 0.0, %v2222
        %2224 = vmatprep.mubr.f32.mxu0 0.0
        %2225 = vmatmul.mubr.f32.gmra.mrb[0].mxu0 %v2143
        %v2226 = vpop.f32.mrb[0].mxu0
        %v2227 = vadd.f32 0.0, %v2226
        %v2228 = vpop.f32.mrb[0].mxu0
        %v2229 = vadd.f32 0.0, %v2228
        %2230 = vmatprep.mubr.f32.mxu0 0.0
        %2231 = vmatmul.mubr.f32.gmra.mrb[0].mxu0 %v2146
        %v2232 = vpop.f32.mrb[0].mxu0
        %v2233 = vadd.f32 0.0, %v2232
        %v2234 = vpop.f32.mrb[0].mxu0
        %v2235 = vadd.f32 0.0, %v2234
        %2236 = vdwg.mxu0
        %2237 = vmatprep.subr.mxu0 %v2118
        %2238 = vmatpush1.msra.mxu0 %v2117
        %2239 = vmatprep.subr.mxu0 %v2122
        %2240 = vmatpush1.msra.mxu0 %v2121
        %2241 = vmatprep.subr.mxu0 %v2126
        %2242 = vmatpush1.msra.mxu0 %v2125
        %2243 = vmatprep.subr.mxu0 %v2130
        %2244 = vmatpush1.msra.mxu0 %v2129
        %2245 = vmatprep.subr.mxu0 0.0
        %2246 = vmatpush1.msra.mxu0 0.0
        %2247 = vmatprep.subr.mxu0 0.0
        %2248 = vmatpush1.msra.mxu0 0.0
        %2249 = vmatprep.subr.mxu0 0.0
        %2250 = vmatpush1.msra.mxu0 0.0
        %2251 = vmatprep.subr.mxu0 0.0
        %2252 = vmatpush1.msra.mxu0 0.0
        %2253 = vmatprep.subr.mxu0 0.0
        %2254 = vmatpush1.msra.mxu0 0.0
        %2255 = vmatprep.subr.mxu0 0.0
        %2256 = vmatpush1.msra.mxu0 0.0
        %2257 = vmatprep.subr.mxu0 0.0
        %2258 = vmatpush1.msra.mxu0 0.0
        %2259 = vmatprep.subr.mxu0 0.0
        %2260 = vmatpush1.msra.mxu0 0.0
        %2261 = vmatprep.subr.mxu0 0.0
        %2262 = vmatpush1.msra.mxu0 0.0
        %2263 = vmatprep.subr.mxu0 0.0
        %2264 = vmatpush1.msra.mxu0 0.0
        %2265 = vmatprep.subr.mxu0 0.0
        %2266 = vmatpush1.msra.mxu0 0.0
        %2267 = vmatprep.subr.mxu0 0.0
        %2268 = vmatpush1.msra.mxu0 0.0
        %2269 = vmatprep.subr.mxu0 0.0
        %2270 = vmatpush1.msra.mxu0 0.0
        %2271 = vmatprep.subr.mxu0 0.0
        %2272 = vmatpush1.msra.mxu0 0.0
        %2273 = vmatprep.subr.mxu0 0.0
        %2274 = vmatpush1.msra.mxu0 0.0
        %2275 = vmatprep.subr.mxu0 0.0
        %2276 = vmatpush1.msra.mxu0 0.0
        %2277 = vmatprep.subr.mxu0 0.0
        %2278 = vmatpush1.msra.mxu0 0.0
        %2279 = vmatprep.subr.mxu0 0.0
        %2280 = vmatpush1.msra.mxu0 0.0
        %2281 = vmatprep.subr.mxu0 0.0
        %2282 = vmatpush1.msra.mxu0 0.0
        %2283 = vmatprep.subr.mxu0 0.0
        %2284 = vmatpush1.msra.mxu0 0.0
        %2285 = vmatprep.subr.mxu0 0.0
        %2286 = vmatpush1.msra.mxu0 0.0
        %2287 = vmatprep.subr.mxu0 0.0
        %2288 = vmatpush1.msra.mxu0 0.0
        %2289 = vmatprep.subr.mxu0 0.0
        %2290 = vmatpush1.msra.mxu0 0.0
        %2291 = vmatprep.subr.mxu0 0.0
        %2292 = vmatpush1.msra.mxu0 0.0
        %2293 = vmatprep.subr.mxu0 0.0
        %2294 = vmatpush1.msra.mxu0 0.0
        %2295 = vmatprep.subr.mxu0 0.0
        %2296 = vmatpush1.msra.mxu0 0.0
        %2297 = vmatprep.subr.mxu0 0.0
        %2298 = vmatpush1.msra.mxu0 0.0
        %2299 = vmatprep.subr.mxu0 0.0
        %2300 = vmatpush1.msra.mxu0 0.0
        %2301 = vmatprep.mubr.f32.mxu0 0.0
        %2302 = vmatmul.mubr.f32.gmra.mrb[0].mxu0 %v2137
        %v2303 = vpop.f32.mrb[0].mxu0
        %v2304 = vadd.f32 0.0, %v2303
        %v2305 = vpop.f32.mrb[0].mxu0
        %v2306 = vadd.f32 0.0, %v2305
        %2307 = vmatprep.mubr.f32.mxu0 0.0
        %2308 = vmatmul.mubr.f32.gmra.mrb[0].mxu0 %v2140
        %v2309 = vpop.f32.mrb[0].mxu0
        %v2310 = vadd.f32 0.0, %v2309
        %v2311 = vpop.f32.mrb[0].mxu0
        %v2312 = vadd.f32 0.0, %v2311
        %2313 = vmatprep.mubr.f32.mxu0 0.0
        %2314 = vmatmul.mubr.f32.gmra.mrb[0].mxu0 %v2143
        %v2315 = vpop.f32.mrb[0].mxu0
        %v2316 = vadd.f32 0.0, %v2315
        %v2317 = vpop.f32.mrb[0].mxu0
        %v2318 = vadd.f32 0.0, %v2317
        %2319 = vmatprep.mubr.f32.mxu0 0.0
        %2320 = vmatmul.mubr.f32.gmra.mrb[0].mxu0 %v2146
        %v2321 = vpop.f32.mrb[0].mxu0
        %v2322 = vadd.f32 0.0, %v2321
        %v2323 = vpop.f32.mrb[0].mxu0
        %v2324 = vadd.f32 0.0, %v2323
        %2325 = vdwg.mxu0
        %v2326 = vadd.f32 %v2027, %v2215
        %v2327 = vadd.f32 %v2028, %v2217
        %v2328 = vadd.f32 %v2029, %v2304
        %v2329 = vadd.f32 %v2030, %v2306
        %v2330 = vadd.f32 %v2031, %v2221
        %v2331 = vadd.f32 %v2032, %v2223
        %v2332 = vadd.f32 %v2033, %v2310
        %v2333 = vadd.f32 %v2034, %v2312
        %v2334 = vadd.f32 %v2035, %v2227
        %v2335 = vadd.f32 %v2036, %v2229
        %v2336 = vadd.f32 %v2037, %v2316
        %v2337 = vadd.f32 %v2038, %v2318
        %v2338 = vadd.f32 %v2039, %v2233
        %v2339 = vadd.f32 %v2040, %v2235
        %v2340 = vadd.f32 %v2041, %v2322
        %v2341 = vadd.f32 %v2042, %v2324
        %2342 = vrot.lane.b32.xlu0 %v352, 112
        %v2343 = vpop.permute.xlu0 %2342
        %2344 = vrot.lane.b32.xlu0 %v356, 112
        %v2345 = vpop.permute.xlu0 %2344
        %2346 = vrot.lane.b32.xlu0 %v360, 112
        %v2347 = vpop.permute.xlu0 %2346
        %2348 = vrot.lane.b32.xlu0 %v364, 112
        %v2349 = vpop.permute.xlu0 %2348
        %2350 = vrot.lane.b32.xlu0 %v353, 112
        %v2351 = vpop.permute.xlu0 %2350
        %2352 = vrot.lane.b32.xlu0 %v357, 112
        %v2353 = vpop.permute.xlu0 %2352
        %2354 = vrot.lane.b32.xlu0 %v361, 112
        %v2355 = vpop.permute.xlu0 %2354
        %2356 = vrot.lane.b32.xlu0 %v365, 112
        %v2357 = vpop.permute.xlu0 %2356
        %2358 = vrot.lane.b32.xlu0 %v354, 112
        %v2359 = vpop.permute.xlu0 %2358
        %2360 = vrot.lane.b32.xlu0 %v358, 112
        %v2361 = vpop.permute.xlu0 %2360
        %2362 = vrot.lane.b32.xlu0 %v362, 112
        %v2363 = vpop.permute.xlu0 %2362
        %2364 = vrot.lane.b32.xlu0 %v366, 112
        %v2365 = vpop.permute.xlu0 %2364
        %2366 = vrot.lane.b32.xlu0 %v355, 112
        %v2367 = vpop.permute.xlu0 %2366
        %2368 = vrot.lane.b32.xlu0 %v359, 112
        %v2369 = vpop.permute.xlu0 %2368
        %2370 = vrot.lane.b32.xlu0 %v363, 112
        %v2371 = vpop.permute.xlu0 %2370
        %2372 = vrot.lane.b32.xlu0 %v367, 112
        %v2373 = vpop.permute.xlu0 %2372
        %vm2374 = vcmp.lt.s32.totalorder %v401, 112
        %v2375 = vsel %vm2374, %v2359, %v2367
        %v2376 = vsel %vm2374, %v2361, %v2369
        %v2377 = vsel %vm2374, %v2363, %v2371
        %v2378 = vsel %vm2374, %v2365, %v2373
        %v2379 = vsel %vm2374, %v2351, %v2359
        %v2380 = vsel %vm2374, %v2353, %v2361
        %v2381 = vsel %vm2374, %v2355, %v2363
        %v2382 = vsel %vm2374, %v2357, %v2365
        %v2383 = vsel %vm2374, %v2343, %v2351
        %v2384 = vsel %vm2374, %v2345, %v2353
        %v2385 = vsel %vm2374, %v2347, %v2355
        %v2386 = vsel %vm2374, %v2349, %v2357
        %v2387 = vsel %vm2374, %v2367, %v2343
        %v2388 = vsel %vm2374, %v2369, %v2345
        %v2389 = vsel %vm2374, %v2371, %v2347
        %v2390 = vsel %vm2374, %v2373, %v2349
        %s2391 = scalar_lea.vmem [#allocation8], 7
        %v2392 = vld [vmem:[%s2391] ss:$8 sm:$0xf]
        %v2394 = vlaneseq
        %v2395 = vshrl.u32 %v2394, 7
        %v2396 = vsub.s32 0, %v2395
        %v2397 = vrot.slane %v2392, %v2396
        %v2398 = vlaneseq
        %v2399 = vshrl.u32 %v2398, 7
        %v2400 = vsub.s32 1, %v2399
        %v2401 = vrot.slane %v2392, %v2400
        %v2402 = vlaneseq
        %v2403 = vshrl.u32 %v2402, 7
        %v2404 = vsub.s32 2, %v2403
        %v2405 = vrot.slane %v2392, %v2404
        %v2406 = vlaneseq
        %v2407 = vshrl.u32 %v2406, 7
        %v2408 = vsub.s32 3, %v2407
        %v2409 = vrot.slane %v2392, %v2408
        %v2414 = vmul.f32 %v2383, %v2397
        %v2415 = vmul.f32 %v2379, %v2401
        %v2416 = vmul.f32 %v2375, %v2405
        %v2417 = vmul.f32 %v2387, %v2409
        %v2418 = vmul.f32 %v2384, %v2397
        %v2419 = vmul.f32 %v2380, %v2401
        %v2420 = vmul.f32 %v2376, %v2405
        %v2421 = vmul.f32 %v2388, %v2409
        %v2422 = vmul.f32 %v2385, %v2397
        %v2423 = vmul.f32 %v2381, %v2401
        %v2424 = vmul.f32 %v2377, %v2405
        %v2425 = vmul.f32 %v2389, %v2409
        %v2426 = vmul.f32 %v2386, %v2397
        %v2427 = vmul.f32 %v2382, %v2401
        %v2428 = vmul.f32 %v2378, %v2405
        %v2429 = vmul.f32 %v2390, %v2409
        %s2430 = scalar_lea.vmem [#allocation5], 224
        %v2431 = vld [vmem:[%s2430] sm:$0xff]
        %v2432 = vld [vmem:[%s2430 + $0x8] sm:$0xff]
        %v2433 = vld [vmem:[%s2430 + $0x10] sm:$0xff]
        %v2434 = vld [vmem:[%s2430 + $0x18] sm:$0xff]
        %v2436 = vsel %vm554, %v2431, 0
        %v2439 = vsel %vm554, %v2432, 0
        %v2442 = vsel %vm554, %v2433, 0
        %v2445 = vsel %vm554, %v2434, 0
        %2447 = vmatprep.subr.mxu0 %v2415
        %2448 = vmatpush1.msra.mxu0 %v2414
        %2449 = vmatprep.subr.mxu0 %v2419
        %2450 = vmatpush1.msra.mxu0 %v2418
        %2451 = vmatprep.subr.mxu0 %v2423
        %2452 = vmatpush1.msra.mxu0 %v2422
        %2453 = vmatprep.subr.mxu0 %v2427
        %2454 = vmatpush1.msra.mxu0 %v2426
        %2455 = vmatprep.subr.mxu0 0.0
        %2456 = vmatpush1.msra.mxu0 0.0
        %2457 = vmatprep.subr.mxu0 0.0
        %2458 = vmatpush1.msra.mxu0 0.0
        %2459 = vmatprep.subr.mxu0 0.0
        %2460 = vmatpush1.msra.mxu0 0.0
        %2461 = vmatprep.subr.mxu0 0.0
        %2462 = vmatpush1.msra.mxu0 0.0
        %2463 = vmatprep.subr.mxu0 0.0
        %2464 = vmatpush1.msra.mxu0 0.0
        %2465 = vmatprep.subr.mxu0 0.0
        %2466 = vmatpush1.msra.mxu0 0.0
        %2467 = vmatprep.subr.mxu0 0.0
        %2468 = vmatpush1.msra.mxu0 0.0
        %2469 = vmatprep.subr.mxu0 0.0
        %2470 = vmatpush1.msra.mxu0 0.0
        %2471 = vmatprep.subr.mxu0 0.0
        %2472 = vmatpush1.msra.mxu0 0.0
        %2473 = vmatprep.subr.mxu0 0.0
        %2474 = vmatpush1.msra.mxu0 0.0
        %2475 = vmatprep.subr.mxu0 0.0
        %2476 = vmatpush1.msra.mxu0 0.0
        %2477 = vmatprep.subr.mxu0 0.0
        %2478 = vmatpush1.msra.mxu0 0.0
        %2479 = vmatprep.subr.mxu0 0.0
        %2480 = vmatpush1.msra.mxu0 0.0
        %2481 = vmatprep.subr.mxu0 0.0
        %2482 = vmatpush1.msra.mxu0 0.0
        %2483 = vmatprep.subr.mxu0 0.0
        %2484 = vmatpush1.msra.mxu0 0.0
        %2485 = vmatprep.subr.mxu0 0.0
        %2486 = vmatpush1.msra.mxu0 0.0
        %2487 = vmatprep.subr.mxu0 0.0
        %2488 = vmatpush1.msra.mxu0 0.0
        %2489 = vmatprep.subr.mxu0 0.0
        %2490 = vmatpush1.msra.mxu0 0.0
        %2491 = vmatprep.subr.mxu0 0.0
        %2492 = vmatpush1.msra.mxu0 0.0
        %2493 = vmatprep.subr.mxu0 0.0
        %2494 = vmatpush1.msra.mxu0 0.0
        %2495 = vmatprep.subr.mxu0 0.0
        %2496 = vmatpush1.msra.mxu0 0.0
        %2497 = vmatprep.subr.mxu0 0.0
        %2498 = vmatpush1.msra.mxu0 0.0
        %2499 = vmatprep.subr.mxu0 0.0
        %2500 = vmatpush1.msra.mxu0 0.0
        %2501 = vmatprep.subr.mxu0 0.0
        %2502 = vmatpush1.msra.mxu0 0.0
        %2503 = vmatprep.subr.mxu0 0.0
        %2504 = vmatpush1.msra.mxu0 0.0
        %2505 = vmatprep.subr.mxu0 0.0
        %2506 = vmatpush1.msra.mxu0 0.0
        %2507 = vmatprep.subr.mxu0 0.0
        %2508 = vmatpush1.msra.mxu0 0.0
        %2509 = vmatprep.subr.mxu0 0.0
        %2510 = vmatpush1.msra.mxu0 0.0
        %2511 = vmatprep.mubr.f32.mxu0 0.0
        %2512 = vmatmul.mubr.f32.gmra.mrb[0].mxu0 %v2436
        %v2513 = vpop.f32.mrb[0].mxu0
        %v2514 = vadd.f32 0.0, %v2513
        %v2515 = vpop.f32.mrb[0].mxu0
        %v2516 = vadd.f32 0.0, %v2515
        %2517 = vmatprep.mubr.f32.mxu0 0.0
        %2518 = vmatmul.mubr.f32.gmra.mrb[0].mxu0 %v2439
        %v2519 = vpop.f32.mrb[0].mxu0
        %v2520 = vadd.f32 0.0, %v2519
        %v2521 = vpop.f32.mrb[0].mxu0
        %v2522 = vadd.f32 0.0, %v2521
        %2523 = vmatprep.mubr.f32.mxu0 0.0
        %2524 = vmatmul.mubr.f32.gmra.mrb[0].mxu0 %v2442
        %v2525 = vpop.f32.mrb[0].mxu0
        %v2526 = vadd.f32 0.0, %v2525
        %v2527 = vpop.f32.mrb[0].mxu0
        %v2528 = vadd.f32 0.0, %v2527
        %2529 = vmatprep.mubr.f32.mxu0 0.0
        %2530 = vmatmul.mubr.f32.gmra.mrb[0].mxu0 %v2445
        %v2531 = vpop.f32.mrb[0].mxu0
        %v2532 = vadd.f32 0.0, %v2531
        %v2533 = vpop.f32.mrb[0].mxu0
        %v2534 = vadd.f32 0.0, %v2533
        %2535 = vdwg.mxu0
        %2536 = vmatprep.subr.mxu0 %v2417
        %2537 = vmatpush1.msra.mxu0 %v2416
        %2538 = vmatprep.subr.mxu0 %v2421
        %2539 = vmatpush1.msra.mxu0 %v2420
        %2540 = vmatprep.subr.mxu0 %v2425
        %2541 = vmatpush1.msra.mxu0 %v2424
        %2542 = vmatprep.subr.mxu0 %v2429
        %2543 = vmatpush1.msra.mxu0 %v2428
        %2544 = vmatprep.subr.mxu0 0.0
        %2545 = vmatpush1.msra.mxu0 0.0
        %2546 = vmatprep.subr.mxu0 0.0
        %2547 = vmatpush1.msra.mxu0 0.0
        %2548 = vmatprep.subr.mxu0 0.0
        %2549 = vmatpush1.msra.mxu0 0.0
        %2550 = vmatprep.subr.mxu0 0.0
        %2551 = vmatpush1.msra.mxu0 0.0
        %2552 = vmatprep.subr.mxu0 0.0
        %2553 = vmatpush1.msra.mxu0 0.0
        %2554 = vmatprep.subr.mxu0 0.0
        %2555 = vmatpush1.msra.mxu0 0.0
        %2556 = vmatprep.subr.mxu0 0.0
        %2557 = vmatpush1.msra.mxu0 0.0
        %2558 = vmatprep.subr.mxu0 0.0
        %2559 = vmatpush1.msra.mxu0 0.0
        %2560 = vmatprep.subr.mxu0 0.0
        %2561 = vmatpush1.msra.mxu0 0.0
        %2562 = vmatprep.subr.mxu0 0.0
        %2563 = vmatpush1.msra.mxu0 0.0
        %2564 = vmatprep.subr.mxu0 0.0
        %2565 = vmatpush1.msra.mxu0 0.0
        %2566 = vmatprep.subr.mxu0 0.0
        %2567 = vmatpush1.msra.mxu0 0.0
        %2568 = vmatprep.subr.mxu0 0.0
        %2569 = vmatpush1.msra.mxu0 0.0
        %2570 = vmatprep.subr.mxu0 0.0
        %2571 = vmatpush1.msra.mxu0 0.0
        %2572 = vmatprep.subr.mxu0 0.0
        %2573 = vmatpush1.msra.mxu0 0.0
        %2574 = vmatprep.subr.mxu0 0.0
        %2575 = vmatpush1.msra.mxu0 0.0
        %2576 = vmatprep.subr.mxu0 0.0
        %2577 = vmatpush1.msra.mxu0 0.0
        %2578 = vmatprep.subr.mxu0 0.0
        %2579 = vmatpush1.msra.mxu0 0.0
        %2580 = vmatprep.subr.mxu0 0.0
        %2581 = vmatpush1.msra.mxu0 0.0
        %2582 = vmatprep.subr.mxu0 0.0
        %2583 = vmatpush1.msra.mxu0 0.0
        %2584 = vmatprep.subr.mxu0 0.0
        %2585 = vmatpush1.msra.mxu0 0.0
        %2586 = vmatprep.subr.mxu0 0.0
        %2587 = vmatpush1.msra.mxu0 0.0
        %2588 = vmatprep.subr.mxu0 0.0
        %2589 = vmatpush1.msra.mxu0 0.0
        %2590 = vmatprep.subr.mxu0 0.0
        %2591 = vmatpush1.msra.mxu0 0.0
        %2592 = vmatprep.subr.mxu0 0.0
        %2593 = vmatpush1.msra.mxu0 0.0
        %2594 = vmatprep.subr.mxu0 0.0
        %2595 = vmatpush1.msra.mxu0 0.0
        %2596 = vmatprep.subr.mxu0 0.0
        %2597 = vmatpush1.msra.mxu0 0.0
        %2598 = vmatprep.subr.mxu0 0.0
        %2599 = vmatpush1.msra.mxu0 0.0
        %2600 = vmatprep.mubr.f32.mxu0 0.0
        %2601 = vmatmul.mubr.f32.gmra.mrb[0].mxu0 %v2436
        %v2602 = vpop.f32.mrb[0].mxu0
        %v2603 = vadd.f32 0.0, %v2602
        %v2604 = vpop.f32.mrb[0].mxu0
        %v2605 = vadd.f32 0.0, %v2604
        %2606 = vmatprep.mubr.f32.mxu0 0.0
        %2607 = vmatmul.mubr.f32.gmra.mrb[0].mxu0 %v2439
        %v2608 = vpop.f32.mrb[0].mxu0
        %v2609 = vadd.f32 0.0, %v2608
        %v2610 = vpop.f32.mrb[0].mxu0
        %v2611 = vadd.f32 0.0, %v2610
        %2612 = vmatprep.mubr.f32.mxu0 0.0
        %2613 = vmatmul.mubr.f32.gmra.mrb[0].mxu0 %v2442
        %v2614 = vpop.f32.mrb[0].mxu0
        %v2615 = vadd.f32 0.0, %v2614
        %v2616 = vpop.f32.mrb[0].mxu0
        %v2617 = vadd.f32 0.0, %v2616
        %2618 = vmatprep.mubr.f32.mxu0 0.0
        %2619 = vmatmul.mubr.f32.gmra.mrb[0].mxu0 %v2445
        %v2620 = vpop.f32.mrb[0].mxu0
        %v2621 = vadd.f32 0.0, %v2620
        %v2622 = vpop.f32.mrb[0].mxu0
        %v2623 = vadd.f32 0.0, %v2622
        %2624 = vdwg.mxu0
        %v2625 = vadd.f32 %v2326, %v2514
        %v2626 = vadd.f32 %v2327, %v2516
        %v2627 = vadd.f32 %v2328, %v2603
        %v2628 = vadd.f32 %v2329, %v2605
        %v2629 = vadd.f32 %v2330, %v2520
        %v2630 = vadd.f32 %v2331, %v2522
        %v2631 = vadd.f32 %v2332, %v2609
        %v2632 = vadd.f32 %v2333, %v2611
        %v2633 = vadd.f32 %v2334, %v2526
        %v2634 = vadd.f32 %v2335, %v2528
        %v2635 = vadd.f32 %v2336, %v2615
        %v2636 = vadd.f32 %v2337, %v2617
        %v2637 = vadd.f32 %v2338, %v2532
        %v2638 = vadd.f32 %v2339, %v2534
        %v2639 = vadd.f32 %v2340, %v2621
        %v2640 = vadd.f32 %v2341, %v2623
        %2641 = vrot.lane.b32.xlu0 %v352, 111
        %v2642 = vpop.permute.xlu0 %2641
        %2643 = vrot.lane.b32.xlu0 %v356, 111
        %v2644 = vpop.permute.xlu0 %2643
        %2645 = vrot.lane.b32.xlu0 %v360, 111
        %v2646 = vpop.permute.xlu0 %2645
        %2647 = vrot.lane.b32.xlu0 %v364, 111
        %v2648 = vpop.permute.xlu0 %2647
        %2649 = vrot.lane.b32.xlu0 %v353, 111
        %v2650 = vpop.permute.xlu0 %2649
        %2651 = vrot.lane.b32.xlu0 %v357, 111
        %v2652 = vpop.permute.xlu0 %2651
        %2653 = vrot.lane.b32.xlu0 %v361, 111
        %v2654 = vpop.permute.xlu0 %2653
        %2655 = vrot.lane.b32.xlu0 %v365, 111
        %v2656 = vpop.permute.xlu0 %2655
        %2657 = vrot.lane.b32.xlu0 %v354, 111
        %v2658 = vpop.permute.xlu0 %2657
        %2659 = vrot.lane.b32.xlu0 %v358, 111
        %v2660 = vpop.permute.xlu0 %2659
        %2661 = vrot.lane.b32.xlu0 %v362, 111
        %v2662 = vpop.permute.xlu0 %2661
        %2663 = vrot.lane.b32.xlu0 %v366, 111
        %v2664 = vpop.permute.xlu0 %2663
        %2665 = vrot.lane.b32.xlu0 %v355, 111
        %v2666 = vpop.permute.xlu0 %2665
        %2667 = vrot.lane.b32.xlu0 %v359, 111
        %v2668 = vpop.permute.xlu0 %2667
        %2669 = vrot.lane.b32.xlu0 %v363, 111
        %v2670 = vpop.permute.xlu0 %2669
        %2671 = vrot.lane.b32.xlu0 %v367, 111
        %v2672 = vpop.permute.xlu0 %2671
        %vm2673 = vcmp.lt.s32.totalorder %v401, 111
        %v2674 = vsel %vm2673, %v2658, %v2666
        %v2675 = vsel %vm2673, %v2660, %v2668
        %v2676 = vsel %vm2673, %v2662, %v2670
        %v2677 = vsel %vm2673, %v2664, %v2672
        %v2678 = vsel %vm2673, %v2650, %v2658
        %v2679 = vsel %vm2673, %v2652, %v2660
        %v2680 = vsel %vm2673, %v2654, %v2662
        %v2681 = vsel %vm2673, %v2656, %v2664
        %v2682 = vsel %vm2673, %v2642, %v2650
        %v2683 = vsel %vm2673, %v2644, %v2652
        %v2684 = vsel %vm2673, %v2646, %v2654
        %v2685 = vsel %vm2673, %v2648, %v2656
        %v2686 = vsel %vm2673, %v2666, %v2642
        %v2687 = vsel %vm2673, %v2668, %v2644
        %v2688 = vsel %vm2673, %v2670, %v2646
        %v2689 = vsel %vm2673, %v2672, %v2648
        %s2690 = scalar_lea.vmem [#allocation8], 32
        %v2691 = vld [vmem:[%s2690] ss:$8 sm:$0xf]
        %v2693 = vlaneseq
        %v2694 = vshrl.u32 %v2693, 7
        %v2695 = vsub.s32 0, %v2694
        %v2696 = vrot.slane %v2691, %v2695
        %v2697 = vlaneseq
        %v2698 = vshrl.u32 %v2697, 7
        %v2699 = vsub.s32 1, %v2698
        %v2700 = vrot.slane %v2691, %v2699
        %v2701 = vlaneseq
        %v2702 = vshrl.u32 %v2701, 7
        %v2703 = vsub.s32 2, %v2702
        %v2704 = vrot.slane %v2691, %v2703
        %v2705 = vlaneseq
        %v2706 = vshrl.u32 %v2705, 7
        %v2707 = vsub.s32 3, %v2706
        %v2708 = vrot.slane %v2691, %v2707
        %v2713 = vmul.f32 %v2682, %v2696
        %v2714 = vmul.f32 %v2678, %v2700
        %v2715 = vmul.f32 %v2674, %v2704
        %v2716 = vmul.f32 %v2686, %v2708
        %v2717 = vmul.f32 %v2683, %v2696
        %v2718 = vmul.f32 %v2679, %v2700
        %v2719 = vmul.f32 %v2675, %v2704
        %v2720 = vmul.f32 %v2687, %v2708
        %v2721 = vmul.f32 %v2684, %v2696
        %v2722 = vmul.f32 %v2680, %v2700
        %v2723 = vmul.f32 %v2676, %v2704
        %v2724 = vmul.f32 %v2688, %v2708
        %v2725 = vmul.f32 %v2685, %v2696
        %v2726 = vmul.f32 %v2681, %v2700
        %v2727 = vmul.f32 %v2677, %v2704
        %v2728 = vmul.f32 %v2689, %v2708
        %s2729 = scalar_lea.vmem [#allocation5], 256
        %v2730 = vld [vmem:[%s2729] sm:$0xff]
        %v2731 = vld [vmem:[%s2729 + $0x8] sm:$0xff]
        %v2732 = vld [vmem:[%s2729 + $0x10] sm:$0xff]
        %v2733 = vld [vmem:[%s2729 + $0x18] sm:$0xff]
        %v2735 = vsel %vm554, %v2730, 0
        %v2738 = vsel %vm554, %v2731, 0
        %v2741 = vsel %vm554, %v2732, 0
        %v2744 = vsel %vm554, %v2733, 0
        %2746 = vmatprep.subr.mxu0 %v2714
        %2747 = vmatpush1.msra.mxu0 %v2713
        %2748 = vmatprep.subr.mxu0 %v2718
        %2749 = vmatpush1.msra.mxu0 %v2717
        %2750 = vmatprep.subr.mxu0 %v2722
        %2751 = vmatpush1.msra.mxu0 %v2721
        %2752 = vmatprep.subr.mxu0 %v2726
        %2753 = vmatpush1.msra.mxu0 %v2725
        %2754 = vmatprep.subr.mxu0 0.0
        %2755 = vmatpush1.msra.mxu0 0.0
        %2756 = vmatprep.subr.mxu0 0.0
        %2757 = vmatpush1.msra.mxu0 0.0
        %2758 = vmatprep.subr.mxu0 0.0
        %2759 = vmatpush1.msra.mxu0 0.0
        %2760 = vmatprep.subr.mxu0 0.0
        %2761 = vmatpush1.msra.mxu0 0.0
        %2762 = vmatprep.subr.mxu0 0.0
        %2763 = vmatpush1.msra.mxu0 0.0
        %2764 = vmatprep.subr.mxu0 0.0
        %2765 = vmatpush1.msra.mxu0 0.0
        %2766 = vmatprep.subr.mxu0 0.0
        %2767 = vmatpush1.msra.mxu0 0.0
        %2768 = vmatprep.subr.mxu0 0.0
        %2769 = vmatpush1.msra.mxu0 0.0
        %2770 = vmatprep.subr.mxu0 0.0
        %2771 = vmatpush1.msra.mxu0 0.0
        %2772 = vmatprep.subr.mxu0 0.0
        %2773 = vmatpush1.msra.mxu0 0.0
        %2774 = vmatprep.subr.mxu0 0.0
        %2775 = vmatpush1.msra.mxu0 0.0
        %2776 = vmatprep.subr.mxu0 0.0
        %2777 = vmatpush1.msra.mxu0 0.0
        %2778 = vmatprep.subr.mxu0 0.0
        %2779 = vmatpush1.msra.mxu0 0.0
        %2780 = vmatprep.subr.mxu0 0.0
        %2781 = vmatpush1.msra.mxu0 0.0
        %2782 = vmatprep.subr.mxu0 0.0
        %2783 = vmatpush1.msra.mxu0 0.0
        %2784 = vmatprep.subr.mxu0 0.0
        %2785 = vmatpush1.msra.mxu0 0.0
        %2786 = vmatprep.subr.mxu0 0.0
        %2787 = vmatpush1.msra.mxu0 0.0
        %2788 = vmatprep.subr.mxu0 0.0
        %2789 = vmatpush1.msra.mxu0 0.0
        %2790 = vmatprep.subr.mxu0 0.0
        %2791 = vmatpush1.msra.mxu0 0.0
        %2792 = vmatprep.subr.mxu0 0.0
        %2793 = vmatpush1.msra.mxu0 0.0
        %2794 = vmatprep.subr.mxu0 0.0
        %2795 = vmatpush1.msra.mxu0 0.0
        %2796 = vmatprep.subr.mxu0 0.0
        %2797 = vmatpush1.msra.mxu0 0.0
        %2798 = vmatprep.subr.mxu0 0.0
        %2799 = vmatpush1.msra.mxu0 0.0
        %2800 = vmatprep.subr.mxu0 0.0
        %2801 = vmatpush1.msra.mxu0 0.0
        %2802 = vmatprep.subr.mxu0 0.0
        %2803 = vmatpush1.msra.mxu0 0.0
        %2804 = vmatprep.subr.mxu0 0.0
        %2805 = vmatpush1.msra.mxu0 0.0
        %2806 = vmatprep.subr.mxu0 0.0
        %2807 = vmatpush1.msra.mxu0 0.0
        %2808 = vmatprep.subr.mxu0 0.0
        %2809 = vmatpush1.msra.mxu0 0.0
        %2810 = vmatprep.mubr.f32.mxu0 0.0
        %2811 = vmatmul.mubr.f32.gmra.mrb[0].mxu0 %v2735
        %v2812 = vpop.f32.mrb[0].mxu0
        %v2813 = vadd.f32 0.0, %v2812
        %v2814 = vpop.f32.mrb[0].mxu0
        %v2815 = vadd.f32 0.0, %v2814
        %2816 = vmatprep.mubr.f32.mxu0 0.0
        %2817 = vmatmul.mubr.f32.gmra.mrb[0].mxu0 %v2738
        %v2818 = vpop.f32.mrb[0].mxu0
        %v2819 = vadd.f32 0.0, %v2818
        %v2820 = vpop.f32.mrb[0].mxu0
        %v2821 = vadd.f32 0.0, %v2820
        %2822 = vmatprep.mubr.f32.mxu0 0.0
        %2823 = vmatmul.mubr.f32.gmra.mrb[0].mxu0 %v2741
        %v2824 = vpop.f32.mrb[0].mxu0
        %v2825 = vadd.f32 0.0, %v2824
        %v2826 = vpop.f32.mrb[0].mxu0
        %v2827 = vadd.f32 0.0, %v2826
        %2828 = vmatprep.mubr.f32.mxu0 0.0
        %2829 = vmatmul.mubr.f32.gmra.mrb[0].mxu0 %v2744
        %v2830 = vpop.f32.mrb[0].mxu0
        %v2831 = vadd.f32 0.0, %v2830
        %v2832 = vpop.f32.mrb[0].mxu0
        %v2833 = vadd.f32 0.0, %v2832
        %2834 = vdwg.mxu0
        %2835 = vmatprep.subr.mxu0 %v2716
        %2836 = vmatpush1.msra.mxu0 %v2715
        %2837 = vmatprep.subr.mxu0 %v2720
        %2838 = vmatpush1.msra.mxu0 %v2719
        %2839 = vmatprep.subr.mxu0 %v2724
        %2840 = vmatpush1.msra.mxu0 %v2723
        %2841 = vmatprep.subr.mxu0 %v2728
        %2842 = vmatpush1.msra.mxu0 %v2727
        %2843 = vmatprep.subr.mxu0 0.0
        %2844 = vmatpush1.msra.mxu0 0.0
        %2845 = vmatprep.subr.mxu0 0.0
        %2846 = vmatpush1.msra.mxu0 0.0
        %2847 = vmatprep.subr.mxu0 0.0
        %2848 = vmatpush1.msra.mxu0 0.0
        %2849 = vmatprep.subr.mxu0 0.0
        %2850 = vmatpush1.msra.mxu0 0.0
        %2851 = vmatprep.subr.mxu0 0.0
        %2852 = vmatpush1.msra.mxu0 0.0
        %2853 = vmatprep.subr.mxu0 0.0
        %2854 = vmatpush1.msra.mxu0 0.0
        %2855 = vmatprep.subr.mxu0 0.0
        %2856 = vmatpush1.msra.mxu0 0.0
        %2857 = vmatprep.subr.mxu0 0.0
        %2858 = vmatpush1.msra.mxu0 0.0
        %2859 = vmatprep.subr.mxu0 0.0
        %2860 = vmatpush1.msra.mxu0 0.0
        %2861 = vmatprep.subr.mxu0 0.0
        %2862 = vmatpush1.msra.mxu0 0.0
        %2863 = vmatprep.subr.mxu0 0.0
        %2864 = vmatpush1.msra.mxu0 0.0
        %2865 = vmatprep.subr.mxu0 0.0
        %2866 = vmatpush1.msra.mxu0 0.0
        %2867 = vmatprep.subr.mxu0 0.0
        %2868 = vmatpush1.msra.mxu0 0.0
        %2869 = vmatprep.subr.mxu0 0.0
        %2870 = vmatpush1.msra.mxu0 0.0
        %2871 = vmatprep.subr.mxu0 0.0
        %2872 = vmatpush1.msra.mxu0 0.0
        %2873 = vmatprep.subr.mxu0 0.0
        %2874 = vmatpush1.msra.mxu0 0.0
        %2875 = vmatprep.subr.mxu0 0.0
        %2876 = vmatpush1.msra.mxu0 0.0
        %2877 = vmatprep.subr.mxu0 0.0
        %2878 = vmatpush1.msra.mxu0 0.0
        %2879 = vmatprep.subr.mxu0 0.0
        %2880 = vmatpush1.msra.mxu0 0.0
        %2881 = vmatprep.subr.mxu0 0.0
        %2882 = vmatpush1.msra.mxu0 0.0
        %2883 = vmatprep.subr.mxu0 0.0
        %2884 = vmatpush1.msra.mxu0 0.0
        %2885 = vmatprep.subr.mxu0 0.0
        %2886 = vmatpush1.msra.mxu0 0.0
        %2887 = vmatprep.subr.mxu0 0.0
        %2888 = vmatpush1.msra.mxu0 0.0
        %2889 = vmatprep.subr.mxu0 0.0
        %2890 = vmatpush1.msra.mxu0 0.0
        %2891 = vmatprep.subr.mxu0 0.0
        %2892 = vmatpush1.msra.mxu0 0.0
        %2893 = vmatprep.subr.mxu0 0.0
        %2894 = vmatpush1.msra.mxu0 0.0
        %2895 = vmatprep.subr.mxu0 0.0
        %2896 = vmatpush1.msra.mxu0 0.0
        %2897 = vmatprep.subr.mxu0 0.0
        %2898 = vmatpush1.msra.mxu0 0.0
        %2899 = vmatprep.mubr.f32.mxu0 0.0
        %2900 = vmatmul.mubr.f32.gmra.mrb[0].mxu0 %v2735
        %v2901 = vpop.f32.mrb[0].mxu0
        %v2902 = vadd.f32 0.0, %v2901
        %v2903 = vpop.f32.mrb[0].mxu0
        %v2904 = vadd.f32 0.0, %v2903
        %2905 = vmatprep.mubr.f32.mxu0 0.0
        %2906 = vmatmul.mubr.f32.gmra.mrb[0].mxu0 %v2738
        %v2907 = vpop.f32.mrb[0].mxu0
        %v2908 = vadd.f32 0.0, %v2907
        %v2909 = vpop.f32.mrb[0].mxu0
        %v2910 = vadd.f32 0.0, %v2909
        %2911 = vmatprep.mubr.f32.mxu0 0.0
        %2912 = vmatmul.mubr.f32.gmra.mrb[0].mxu0 %v2741
        %v2913 = vpop.f32.mrb[0].mxu0
        %v2914 = vadd.f32 0.0, %v2913
        %v2915 = vpop.f32.mrb[0].mxu0
        %v2916 = vadd.f32 0.0, %v2915
        %2917 = vmatprep.mubr.f32.mxu0 0.0
        %2918 = vmatmul.mubr.f32.gmra.mrb[0].mxu0 %v2744
        %v2919 = vpop.f32.mrb[0].mxu0
        %v2920 = vadd.f32 0.0, %v2919
        %v2921 = vpop.f32.mrb[0].mxu0
        %v2922 = vadd.f32 0.0, %v2921
        %2923 = vdwg.mxu0
        %v2924 = vadd.f32 %v2625, %v2813
        %v2925 = vadd.f32 %v2626, %v2815
        %v2926 = vadd.f32 %v2627, %v2902
        %v2927 = vadd.f32 %v2628, %v2904
        %v2928 = vadd.f32 %v2629, %v2819
        %v2929 = vadd.f32 %v2630, %v2821
        %v2930 = vadd.f32 %v2631, %v2908
        %v2931 = vadd.f32 %v2632, %v2910
        %v2932 = vadd.f32 %v2633, %v2825
        %v2933 = vadd.f32 %v2634, %v2827
        %v2934 = vadd.f32 %v2635, %v2914
        %v2935 = vadd.f32 %v2636, %v2916
        %v2936 = vadd.f32 %v2637, %v2831
        %v2937 = vadd.f32 %v2638, %v2833
        %v2938 = vadd.f32 %v2639, %v2920
        %v2939 = vadd.f32 %v2640, %v2922
        %v2940 = vld [vmem:[%s2] sm:$0xff]
        %v2941 = vld [vmem:[%s2 + $0x8] sm:$0xff]
        %v2942 = vld [vmem:[%s2 + $0x10] sm:$0xff]
        %v2943 = vld [vmem:[%s2 + $0x18] sm:$0xff]
        %2945 = vset.pattern.permute.xlu0 0
        %2946 = vperm.xlu0 %2945, %v2940
        %v2947 = vpop.permute.xlu0 %2946
        %2950 = vset.pattern.permute.xlu0 0
        %2951 = vperm.xlu0 %2950, %v2941
        %v2952 = vpop.permute.xlu0 %2951
        %2955 = vset.pattern.permute.xlu0 0
        %2956 = vperm.xlu0 %2955, %v2942
        %v2957 = vpop.permute.xlu0 %2956
        %2960 = vset.pattern.permute.xlu0 0
        %2961 = vperm.xlu0 %2960, %v2943
        %v2962 = vpop.permute.xlu0 %2961
        %v2964 = vadd.f32 %v2924, %v2947
        %v2965 = vadd.f32 %v2925, %v2947
        %v2966 = vadd.f32 %v2926, %v2947
        %v2967 = vadd.f32 %v2927, %v2947
        %v2968 = vadd.f32 %v2928, %v2952
        %v2969 = vadd.f32 %v2929, %v2952
        %v2970 = vadd.f32 %v2930, %v2952
        %v2971 = vadd.f32 %v2931, %v2952
        %v2972 = vadd.f32 %v2932, %v2957
        %v2973 = vadd.f32 %v2933, %v2957
        %v2974 = vadd.f32 %v2934, %v2957
        %v2975 = vadd.f32 %v2935, %v2957
        %v2976 = vadd.f32 %v2936, %v2962
        %v2977 = vadd.f32 %v2937, %v2962
        %v2978 = vadd.f32 %v2938, %v2962
        %v2979 = vadd.f32 %v2939, %v2962
        %v2980 = vmax.f32 %v2964, 0.0
        %v2981 = vmax.f32 %v2965, 0.0
        %v2982 = vmax.f32 %v2966, 0.0
        %v2983 = vmax.f32 %v2967, 0.0
        %v2984 = vmax.f32 %v2968, 0.0
        %v2985 = vmax.f32 %v2969, 0.0
        %v2986 = vmax.f32 %v2970, 0.0
        %v2987 = vmax.f32 %v2971, 0.0
        %v2988 = vmax.f32 %v2972, 0.0
        %v2989 = vmax.f32 %v2973, 0.0
        %v2990 = vmax.f32 %v2974, 0.0
        %v2991 = vmax.f32 %v2975, 0.0
        %v2992 = vmax.f32 %v2976, 0.0
        %v2993 = vmax.f32 %v2977, 0.0
        %v2994 = vmax.f32 %v2978, 0.0
        %v2995 = vmax.f32 %v2979, 0.0
        %2996 = vrot.lane.b32.xlu0 %v2980, 17
        %v2997 = vpop.permute.xlu0 %2996
        %2998 = vrot.lane.b32.xlu0 %v2984, 17
        %v2999 = vpop.permute.xlu0 %2998
        %3000 = vrot.lane.b32.xlu0 %v2988, 17
        %v3001 = vpop.permute.xlu0 %3000
        %3002 = vrot.lane.b32.xlu0 %v2992, 17
        %v3003 = vpop.permute.xlu0 %3002
        %3004 = vrot.lane.b32.xlu0 %v2981, 17
        %v3005 = vpop.permute.xlu0 %3004
        %3006 = vrot.lane.b32.xlu0 %v2985, 17
        %v3007 = vpop.permute.xlu0 %3006
        %3008 = vrot.lane.b32.xlu0 %v2989, 17
        %v3009 = vpop.permute.xlu0 %3008
        %3010 = vrot.lane.b32.xlu0 %v2993, 17
        %v3011 = vpop.permute.xlu0 %3010
        %3012 = vrot.lane.b32.xlu0 %v2982, 17
        %v3013 = vpop.permute.xlu0 %3012
        %3014 = vrot.lane.b32.xlu0 %v2986, 17
        %v3015 = vpop.permute.xlu0 %3014
        %3016 = vrot.lane.b32.xlu0 %v2990, 17
        %v3017 = vpop.permute.xlu0 %3016
        %3018 = vrot.lane.b32.xlu0 %v2994, 17
        %v3019 = vpop.permute.xlu0 %3018
        %3020 = vrot.lane.b32.xlu0 %v2983, 17
        %v3021 = vpop.permute.xlu0 %3020
        %3022 = vrot.lane.b32.xlu0 %v2987, 17
        %v3023 = vpop.permute.xlu0 %3022
        %3024 = vrot.lane.b32.xlu0 %v2991, 17
        %v3025 = vpop.permute.xlu0 %3024
        %3026 = vrot.lane.b32.xlu0 %v2995, 17
        %v3027 = vpop.permute.xlu0 %3026
        %v3028 = vsel %vm402, %v3013, %v3021
        %v3029 = vsel %vm402, %v3015, %v3023
        %v3030 = vsel %vm402, %v3017, %v3025
        %v3031 = vsel %vm402, %v3019, %v3027
        %v3032 = vsel %vm402, %v3005, %v3013
        %v3033 = vsel %vm402, %v3007, %v3015
        %v3034 = vsel %vm402, %v3009, %v3017
        %v3035 = vsel %vm402, %v3011, %v3019
        %v3036 = vsel %vm402, %v2997, %v3005
        %v3037 = vsel %vm402, %v2999, %v3007
        %v3038 = vsel %vm402, %v3001, %v3009
        %v3039 = vsel %vm402, %v3003, %v3011
        %v3040 = vsel %vm402, %v3021, %v2997
        %v3041 = vsel %vm402, %v3023, %v2999
        %v3042 = vsel %vm402, %v3025, %v3001
        %v3043 = vsel %vm402, %v3027, %v3003
        %v3044 = vmul.f32 %v3040, %v424
        %v3045 = vmul.f32 %v3036, %v428
        %v3046 = vmul.f32 %v3032, %v432
        %v3047 = vmul.f32 %v3028, %v436
        %v3048 = vmul.f32 %v3041, %v424
        %v3049 = vmul.f32 %v3037, %v428
        %v3050 = vmul.f32 %v3033, %v432
        %v3051 = vmul.f32 %v3029, %v436
        %v3052 = vmul.f32 %v3042, %v424
        %v3053 = vmul.f32 %v3038, %v428
        %v3054 = vmul.f32 %v3034, %v432
        %v3055 = vmul.f32 %v3030, %v436
        %v3056 = vmul.f32 %v3043, %v424
        %v3057 = vmul.f32 %v3039, %v428
        %v3058 = vmul.f32 %v3035, %v432
        %v3059 = vmul.f32 %v3031, %v436
        %v3060 = vld [vmem:[#allocation7] sm:$0xff]
        %3061 = vrot.lane.b32.xlu0 %v2980, 16
        %v3062 = vpop.permute.xlu0 %3061
        %3063 = vrot.lane.b32.xlu0 %v2984, 16
        %v3064 = vpop.permute.xlu0 %3063
        %3065 = vrot.lane.b32.xlu0 %v2988, 16
        %v3066 = vpop.permute.xlu0 %3065
        %3067 = vrot.lane.b32.xlu0 %v2992, 16
        %v3068 = vpop.permute.xlu0 %3067
        %3069 = vrot.lane.b32.xlu0 %v2981, 16
        %v3070 = vpop.permute.xlu0 %3069
        %3071 = vrot.lane.b32.xlu0 %v2985, 16
        %v3072 = vpop.permute.xlu0 %3071
        %3073 = vrot.lane.b32.xlu0 %v2989, 16
        %v3074 = vpop.permute.xlu0 %3073
        %3075 = vrot.lane.b32.xlu0 %v2993, 16
        %v3076 = vpop.permute.xlu0 %3075
        %3077 = vrot.lane.b32.xlu0 %v2982, 16
        %v3078 = vpop.permute.xlu0 %3077
        %3079 = vrot.lane.b32.xlu0 %v2986, 16
        %v3080 = vpop.permute.xlu0 %3079
        %3081 = vrot.lane.b32.xlu0 %v2990, 16
        %v3082 = vpop.permute.xlu0 %3081
        %3083 = vrot.lane.b32.xlu0 %v2994, 16
        %v3084 = vpop.permute.xlu0 %3083
        %3085 = vrot.lane.b32.xlu0 %v2983, 16
        %v3086 = vpop.permute.xlu0 %3085
        %3087 = vrot.lane.b32.xlu0 %v2987, 16
        %v3088 = vpop.permute.xlu0 %3087
        %3089 = vrot.lane.b32.xlu0 %v2991, 16
        %v3090 = vpop.permute.xlu0 %3089
        %3091 = vrot.lane.b32.xlu0 %v2995, 16
        %v3092 = vpop.permute.xlu0 %3091
        %v3093 = vsel %vm493, %v3078, %v3086
        %v3094 = vsel %vm493, %v3080, %v3088
        %v3095 = vsel %vm493, %v3082, %v3090
        %v3096 = vsel %vm493, %v3084, %v3092
        %v3097 = vsel %vm493, %v3070, %v3078
        %v3098 = vsel %vm493, %v3072, %v3080
        %v3099 = vsel %vm493, %v3074, %v3082
        %v3100 = vsel %vm493, %v3076, %v3084
        %v3101 = vsel %vm493, %v3062, %v3070
        %v3102 = vsel %vm493, %v3064, %v3072
        %v3103 = vsel %vm493, %v3066, %v3074
        %v3104 = vsel %vm493, %v3068, %v3076
        %v3105 = vsel %vm493, %v3086, %v3062
        %v3106 = vsel %vm493, %v3088, %v3064
        %v3107 = vsel %vm493, %v3090, %v3066
        %v3108 = vsel %vm493, %v3092, %v3068
        %v3109 = vmul.f32 %v3105, %v516
        %v3110 = vmul.f32 %v3101, %v520
        %v3111 = vmul.f32 %v3097, %v524
        %v3112 = vmul.f32 %v3093, %v528
        %v3113 = vmul.f32 %v3106, %v516
        %v3114 = vmul.f32 %v3102, %v520
        %v3115 = vmul.f32 %v3098, %v524
        %v3116 = vmul.f32 %v3094, %v528
        %v3117 = vmul.f32 %v3107, %v516
        %v3118 = vmul.f32 %v3103, %v520
        %v3119 = vmul.f32 %v3099, %v524
        %v3120 = vmul.f32 %v3095, %v528
        %v3121 = vmul.f32 %v3108, %v516
        %v3122 = vmul.f32 %v3104, %v520
        %v3123 = vmul.f32 %v3100, %v524
        %v3124 = vmul.f32 %v3096, %v528
        %s3125 = scalar_lea.vmem [#allocation7], 8
        %v3126 = vld [vmem:[%s3125] sm:$0xff]
        %v3128 = vsel %vm554, %v3126, 0
        %3130 = vmatprep.subr.mxu0 %v3110
        %3131 = vmatpush1.msra.mxu0 %v3109
        %3132 = vmatprep.subr.mxu0 %v3114
        %3133 = vmatpush1.msra.mxu0 %v3113
        %3134 = vmatprep.subr.mxu0 %v3118
        %3135 = vmatpush1.msra.mxu0 %v3117
        %3136 = vmatprep.subr.mxu0 %v3122
        %3137 = vmatpush1.msra.mxu0 %v3121
        %3138 = vmatprep.subr.mxu0 0.0
        %3139 = vmatpush1.msra.mxu0 0.0
        %3140 = vmatprep.subr.mxu0 0.0
        %3141 = vmatpush1.msra.mxu0 0.0
        %3142 = vmatprep.subr.mxu0 0.0
        %3143 = vmatpush1.msra.mxu0 0.0
        %3144 = vmatprep.subr.mxu0 0.0
        %3145 = vmatpush1.msra.mxu0 0.0
        %3146 = vmatprep.subr.mxu0 0.0
        %3147 = vmatpush1.msra.mxu0 0.0
        %3148 = vmatprep.subr.mxu0 0.0
        %3149 = vmatpush1.msra.mxu0 0.0
        %3150 = vmatprep.subr.mxu0 0.0
        %3151 = vmatpush1.msra.mxu0 0.0
        %3152 = vmatprep.subr.mxu0 0.0
        %3153 = vmatpush1.msra.mxu0 0.0
        %3154 = vmatprep.subr.mxu0 0.0
        %3155 = vmatpush1.msra.mxu0 0.0
        %3156 = vmatprep.subr.mxu0 0.0
        %3157 = vmatpush1.msra.mxu0 0.0
        %3158 = vmatprep.subr.mxu0 0.0
        %3159 = vmatpush1.msra.mxu0 0.0
        %3160 = vmatprep.subr.mxu0 0.0
        %3161 = vmatpush1.msra.mxu0 0.0
        %3162 = vmatprep.subr.mxu0 0.0
        %3163 = vmatpush1.msra.mxu0 0.0
        %3164 = vmatprep.subr.mxu0 0.0
        %3165 = vmatpush1.msra.mxu0 0.0
        %3166 = vmatprep.subr.mxu0 0.0
        %3167 = vmatpush1.msra.mxu0 0.0
        %3168 = vmatprep.subr.mxu0 0.0
        %3169 = vmatpush1.msra.mxu0 0.0
        %3170 = vmatprep.subr.mxu0 0.0
        %3171 = vmatpush1.msra.mxu0 0.0
        %3172 = vmatprep.subr.mxu0 0.0
        %3173 = vmatpush1.msra.mxu0 0.0
        %3174 = vmatprep.subr.mxu0 0.0
        %3175 = vmatpush1.msra.mxu0 0.0
        %3176 = vmatprep.subr.mxu0 0.0
        %3177 = vmatpush1.msra.mxu0 0.0
        %3178 = vmatprep.subr.mxu0 0.0
        %3179 = vmatpush1.msra.mxu0 0.0
        %3180 = vmatprep.subr.mxu0 0.0
        %3181 = vmatpush1.msra.mxu0 0.0
        %3182 = vmatprep.subr.mxu0 0.0
        %3183 = vmatpush1.msra.mxu0 0.0
        %3184 = vmatprep.subr.mxu0 0.0
        %3185 = vmatpush1.msra.mxu0 0.0
        %3186 = vmatprep.subr.mxu0 0.0
        %3187 = vmatpush1.msra.mxu0 0.0
        %3188 = vmatprep.subr.mxu0 0.0
        %3189 = vmatpush1.msra.mxu0 0.0
        %3190 = vmatprep.subr.mxu0 0.0
        %3191 = vmatpush1.msra.mxu0 0.0
        %3192 = vmatprep.subr.mxu0 0.0
        %3193 = vmatpush1.msra.mxu0 0.0
        %3194 = vmatprep.mubr.f32.mxu0 0.0
        %3195 = vmatmul.mubr.f32.gmra.mrb[0].mxu0 %v3128
        %v3196 = vpop.f32.mrb[0].mxu0
        %v3197 = vadd.f32 0.0, %v3196
        %v3198 = vpop.f32.mrb[0].mxu0
        %v3199 = vadd.f32 0.0, %v3198
        %3200 = vdwg.mxu0
        %3201 = vmatprep.subr.mxu0 %v3112
        %3202 = vmatpush1.msra.mxu0 %v3111
        %3203 = vmatprep.subr.mxu0 %v3116
        %3204 = vmatpush1.msra.mxu0 %v3115
        %3205 = vmatprep.subr.mxu0 %v3120
        %3206 = vmatpush1.msra.mxu0 %v3119
        %3207 = vmatprep.subr.mxu0 %v3124
        %3208 = vmatpush1.msra.mxu0 %v3123
        %3209 = vmatprep.subr.mxu0 0.0
        %3210 = vmatpush1.msra.mxu0 0.0
        %3211 = vmatprep.subr.mxu0 0.0
        %3212 = vmatpush1.msra.mxu0 0.0
        %3213 = vmatprep.subr.mxu0 0.0
        %3214 = vmatpush1.msra.mxu0 0.0
        %3215 = vmatprep.subr.mxu0 0.0
        %3216 = vmatpush1.msra.mxu0 0.0
        %3217 = vmatprep.subr.mxu0 0.0
        %3218 = vmatpush1.msra.mxu0 0.0
        %3219 = vmatprep.subr.mxu0 0.0
        %3220 = vmatpush1.msra.mxu0 0.0
        %3221 = vmatprep.subr.mxu0 0.0
        %3222 = vmatpush1.msra.mxu0 0.0
        %3223 = vmatprep.subr.mxu0 0.0
        %3224 = vmatpush1.msra.mxu0 0.0
        %3225 = vmatprep.subr.mxu0 0.0
        %3226 = vmatpush1.msra.mxu0 0.0
        %3227 = vmatprep.subr.mxu0 0.0
        %3228 = vmatpush1.msra.mxu0 0.0
        %3229 = vmatprep.subr.mxu0 0.0
        %3230 = vmatpush1.msra.mxu0 0.0
        %3231 = vmatprep.subr.mxu0 0.0
        %3232 = vmatpush1.msra.mxu0 0.0
        %3233 = vmatprep.subr.mxu0 0.0
        %3234 = vmatpush1.msra.mxu0 0.0
        %3235 = vmatprep.subr.mxu0 0.0
        %3236 = vmatpush1.msra.mxu0 0.0
        %3237 = vmatprep.subr.mxu0 0.0
        %3238 = vmatpush1.msra.mxu0 0.0
        %3239 = vmatprep.subr.mxu0 0.0
        %3240 = vmatpush1.msra.mxu0 0.0
        %3241 = vmatprep.subr.mxu0 0.0
        %3242 = vmatpush1.msra.mxu0 0.0
        %3243 = vmatprep.subr.mxu0 0.0
        %3244 = vmatpush1.msra.mxu0 0.0
        %3245 = vmatprep.subr.mxu0 0.0
        %3246 = vmatpush1.msra.mxu0 0.0
        %3247 = vmatprep.subr.mxu0 0.0
        %3248 = vmatpush1.msra.mxu0 0.0
        %3249 = vmatprep.subr.mxu0 0.0
        %3250 = vmatpush1.msra.mxu0 0.0
        %3251 = vmatprep.subr.mxu0 0.0
        %3252 = vmatpush1.msra.mxu0 0.0
        %3253 = vmatprep.subr.mxu0 0.0
        %3254 = vmatpush1.msra.mxu0 0.0
        %3255 = vmatprep.subr.mxu0 0.0
        %3256 = vmatpush1.msra.mxu0 0.0
        %3257 = vmatprep.subr.mxu0 0.0
        %3258 = vmatpush1.msra.mxu0 0.0
        %3259 = vmatprep.subr.mxu0 0.0
        %3260 = vmatpush1.msra.mxu0 0.0
        %3261 = vmatprep.subr.mxu0 0.0
        %3262 = vmatpush1.msra.mxu0 0.0
        %3263 = vmatprep.subr.mxu0 0.0
        %3264 = vmatpush1.msra.mxu0 0.0
        %3265 = vmatprep.mubr.f32.mxu0 0.0
        %3266 = vmatmul.mubr.f32.gmra.mrb[0].mxu0 %v3128
        %v3267 = vpop.f32.mrb[0].mxu0
        %v3268 = vadd.f32 0.0, %v3267
        %v3269 = vpop.f32.mrb[0].mxu0
        %v3270 = vadd.f32 0.0, %v3269
        %3271 = vdwg.mxu0
        %v3273 = vsel %vm554, %v3060, 0
        %3275 = vmatprep.subr.mxu0 %v3045
        %3276 = vmatpush1.msra.mxu0 %v3044
        %3277 = vmatprep.subr.mxu0 %v3049
        %3278 = vmatpush1.msra.mxu0 %v3048
        %3279 = vmatprep.subr.mxu0 %v3053
        %3280 = vmatpush1.msra.mxu0 %v3052
        %3281 = vmatprep.subr.mxu0 %v3057
        %3282 = vmatpush1.msra.mxu0 %v3056
        %3283 = vmatprep.subr.mxu0 0.0
        %3284 = vmatpush1.msra.mxu0 0.0
        %3285 = vmatprep.subr.mxu0 0.0
        %3286 = vmatpush1.msra.mxu0 0.0
        %3287 = vmatprep.subr.mxu0 0.0
        %3288 = vmatpush1.msra.mxu0 0.0
        %3289 = vmatprep.subr.mxu0 0.0
        %3290 = vmatpush1.msra.mxu0 0.0
        %3291 = vmatprep.subr.mxu0 0.0
        %3292 = vmatpush1.msra.mxu0 0.0
        %3293 = vmatprep.subr.mxu0 0.0
        %3294 = vmatpush1.msra.mxu0 0.0
        %3295 = vmatprep.subr.mxu0 0.0
        %3296 = vmatpush1.msra.mxu0 0.0
        %3297 = vmatprep.subr.mxu0 0.0
        %3298 = vmatpush1.msra.mxu0 0.0
        %3299 = vmatprep.subr.mxu0 0.0
        %3300 = vmatpush1.msra.mxu0 0.0
        %3301 = vmatprep.subr.mxu0 0.0
        %3302 = vmatpush1.msra.mxu0 0.0
        %3303 = vmatprep.subr.mxu0 0.0
        %3304 = vmatpush1.msra.mxu0 0.0
        %3305 = vmatprep.subr.mxu0 0.0
        %3306 = vmatpush1.msra.mxu0 0.0
        %3307 = vmatprep.subr.mxu0 0.0
        %3308 = vmatpush1.msra.mxu0 0.0
        %3309 = vmatprep.subr.mxu0 0.0
        %3310 = vmatpush1.msra.mxu0 0.0
        %3311 = vmatprep.subr.mxu0 0.0
        %3312 = vmatpush1.msra.mxu0 0.0
        %3313 = vmatprep.subr.mxu0 0.0
        %3314 = vmatpush1.msra.mxu0 0.0
        %3315 = vmatprep.subr.mxu0 0.0
        %3316 = vmatpush1.msra.mxu0 0.0
        %3317 = vmatprep.subr.mxu0 0.0
        %3318 = vmatpush1.msra.mxu0 0.0
        %3319 = vmatprep.subr.mxu0 0.0
        %3320 = vmatpush1.msra.mxu0 0.0
        %3321 = vmatprep.subr.mxu0 0.0
        %3322 = vmatpush1.msra.mxu0 0.0
        %3323 = vmatprep.subr.mxu0 0.0
        %3324 = vmatpush1.msra.mxu0 0.0
        %3325 = vmatprep.subr.mxu0 0.0
        %3326 = vmatpush1.msra.mxu0 0.0
        %3327 = vmatprep.subr.mxu0 0.0
        %3328 = vmatpush1.msra.mxu0 0.0
        %3329 = vmatprep.subr.mxu0 0.0
        %3330 = vmatpush1.msra.mxu0 0.0
        %3331 = vmatprep.subr.mxu0 0.0
        %3332 = vmatpush1.msra.mxu0 0.0
        %3333 = vmatprep.subr.mxu0 0.0
        %3334 = vmatpush1.msra.mxu0 0.0
        %3335 = vmatprep.subr.mxu0 0.0
        %3336 = vmatpush1.msra.mxu0 0.0
        %3337 = vmatprep.subr.mxu0 0.0
        %3338 = vmatpush1.msra.mxu0 0.0
        %3339 = vmatprep.mubr.f32.mxu0 0.0
        %3340 = vmatmul.mubr.f32.gmra.mrb[0].mxu0 %v3273
        %v3341 = vpop.f32.mrb[0].mxu0
        %v3342 = vadd.f32 %v3197, %v3341
        %v3343 = vpop.f32.mrb[0].mxu0
        %v3344 = vadd.f32 %v3199, %v3343
        %3345 = vdwg.mxu0
        %3346 = vmatprep.subr.mxu0 %v3047
        %3347 = vmatpush1.msra.mxu0 %v3046
        %3348 = vmatprep.subr.mxu0 %v3051
        %3349 = vmatpush1.msra.mxu0 %v3050
        %3350 = vmatprep.subr.mxu0 %v3055
        %3351 = vmatpush1.msra.mxu0 %v3054
        %3352 = vmatprep.subr.mxu0 %v3059
        %3353 = vmatpush1.msra.mxu0 %v3058
        %3354 = vmatprep.subr.mxu0 0.0
        %3355 = vmatpush1.msra.mxu0 0.0
        %3356 = vmatprep.subr.mxu0 0.0
        %3357 = vmatpush1.msra.mxu0 0.0
        %3358 = vmatprep.subr.mxu0 0.0
        %3359 = vmatpush1.msra.mxu0 0.0
        %3360 = vmatprep.subr.mxu0 0.0
        %3361 = vmatpush1.msra.mxu0 0.0
        %3362 = vmatprep.subr.mxu0 0.0
        %3363 = vmatpush1.msra.mxu0 0.0
        %3364 = vmatprep.subr.mxu0 0.0
        %3365 = vmatpush1.msra.mxu0 0.0
        %3366 = vmatprep.subr.mxu0 0.0
        %3367 = vmatpush1.msra.mxu0 0.0
        %3368 = vmatprep.subr.mxu0 0.0
        %3369 = vmatpush1.msra.mxu0 0.0
        %3370 = vmatprep.subr.mxu0 0.0
        %3371 = vmatpush1.msra.mxu0 0.0
        %3372 = vmatprep.subr.mxu0 0.0
        %3373 = vmatpush1.msra.mxu0 0.0
        %3374 = vmatprep.subr.mxu0 0.0
        %3375 = vmatpush1.msra.mxu0 0.0
        %3376 = vmatprep.subr.mxu0 0.0
        %3377 = vmatpush1.msra.mxu0 0.0
        %3378 = vmatprep.subr.mxu0 0.0
        %3379 = vmatpush1.msra.mxu0 0.0
        %3380 = vmatprep.subr.mxu0 0.0
        %3381 = vmatpush1.msra.mxu0 0.0
        %3382 = vmatprep.subr.mxu0 0.0
        %3383 = vmatpush1.msra.mxu0 0.0
        %3384 = vmatprep.subr.mxu0 0.0
        %3385 = vmatpush1.msra.mxu0 0.0
        %3386 = vmatprep.subr.mxu0 0.0
        %3387 = vmatpush1.msra.mxu0 0.0
        %3388 = vmatprep.subr.mxu0 0.0
        %3389 = vmatpush1.msra.mxu0 0.0
        %3390 = vmatprep.subr.mxu0 0.0
        %3391 = vmatpush1.msra.mxu0 0.0
        %3392 = vmatprep.subr.mxu0 0.0
        %3393 = vmatpush1.msra.mxu0 0.0
        %3394 = vmatprep.subr.mxu0 0.0
        %3395 = vmatpush1.msra.mxu0 0.0
        %3396 = vmatprep.subr.mxu0 0.0
        %3397 = vmatpush1.msra.mxu0 0.0
        %3398 = vmatprep.subr.mxu0 0.0
        %3399 = vmatpush1.msra.mxu0 0.0
        %3400 = vmatprep.subr.mxu0 0.0
        %3401 = vmatpush1.msra.mxu0 0.0
        %3402 = vmatprep.subr.mxu0 0.0
        %3403 = vmatpush1.msra.mxu0 0.0
        %3404 = vmatprep.subr.mxu0 0.0
        %3405 = vmatpush1.msra.mxu0 0.0
        %3406 = vmatprep.subr.mxu0 0.0
        %3407 = vmatpush1.msra.mxu0 0.0
        %3408 = vmatprep.subr.mxu0 0.0
        %3409 = vmatpush1.msra.mxu0 0.0
        %3410 = vmatprep.mubr.f32.mxu0 0.0
        %3411 = vmatmul.mubr.f32.gmra.mrb[0].mxu0 %v3273
        %v3412 = vpop.f32.mrb[0].mxu0
        %v3413 = vadd.f32 %v3268, %v3412
        %v3414 = vpop.f32.mrb[0].mxu0
        %v3415 = vadd.f32 %v3270, %v3414
        %3416 = vdwg.mxu0
        %3417 = vrot.lane.b32.xlu0 %v2980, 15
        %v3418 = vpop.permute.xlu0 %3417
        %3419 = vrot.lane.b32.xlu0 %v2984, 15
        %v3420 = vpop.permute.xlu0 %3419
        %3421 = vrot.lane.b32.xlu0 %v2988, 15
        %v3422 = vpop.permute.xlu0 %3421
        %3423 = vrot.lane.b32.xlu0 %v2992, 15
        %v3424 = vpop.permute.xlu0 %3423
        %3425 = vrot.lane.b32.xlu0 %v2981, 15
        %v3426 = vpop.permute.xlu0 %3425
        %3427 = vrot.lane.b32.xlu0 %v2985, 15
        %v3428 = vpop.permute.xlu0 %3427
        %3429 = vrot.lane.b32.xlu0 %v2989, 15
        %v3430 = vpop.permute.xlu0 %3429
        %3431 = vrot.lane.b32.xlu0 %v2993, 15
        %v3432 = vpop.permute.xlu0 %3431
        %3433 = vrot.lane.b32.xlu0 %v2982, 15
        %v3434 = vpop.permute.xlu0 %3433
        %3435 = vrot.lane.b32.xlu0 %v2986, 15
        %v3436 = vpop.permute.xlu0 %3435
        %3437 = vrot.lane.b32.xlu0 %v2990, 15
        %v3438 = vpop.permute.xlu0 %3437
        %3439 = vrot.lane.b32.xlu0 %v2994, 15
        %v3440 = vpop.permute.xlu0 %3439
        %3441 = vrot.lane.b32.xlu0 %v2983, 15
        %v3442 = vpop.permute.xlu0 %3441
        %3443 = vrot.lane.b32.xlu0 %v2987, 15
        %v3444 = vpop.permute.xlu0 %3443
        %3445 = vrot.lane.b32.xlu0 %v2991, 15
        %v3446 = vpop.permute.xlu0 %3445
        %3447 = vrot.lane.b32.xlu0 %v2995, 15
        %v3448 = vpop.permute.xlu0 %3447
        %v3449 = vsel %vm967, %v3434, %v3442
        %v3450 = vsel %vm967, %v3436, %v3444
        %v3451 = vsel %vm967, %v3438, %v3446
        %v3452 = vsel %vm967, %v3440, %v3448
        %v3453 = vsel %vm967, %v3426, %v3434
        %v3454 = vsel %vm967, %v3428, %v3436
        %v3455 = vsel %vm967, %v3430, %v3438
        %v3456 = vsel %vm967, %v3432, %v3440
        %v3457 = vsel %vm967, %v3418, %v3426
        %v3458 = vsel %vm967, %v3420, %v3428
        %v3459 = vsel %vm967, %v3422, %v3430
        %v3460 = vsel %vm967, %v3424, %v3432
        %v3461 = vsel %vm967, %v3442, %v3418
        %v3462 = vsel %vm967, %v3444, %v3420
        %v3463 = vsel %vm967, %v3446, %v3422
        %v3464 = vsel %vm967, %v3448, %v3424
        %v3465 = vmul.f32 %v3461, %v990
        %v3466 = vmul.f32 %v3457, %v994
        %v3467 = vmul.f32 %v3453, %v998
        %v3468 = vmul.f32 %v3449, %v1002
        %v3469 = vmul.f32 %v3462, %v990
        %v3470 = vmul.f32 %v3458, %v994
        %v3471 = vmul.f32 %v3454, %v998
        %v3472 = vmul.f32 %v3450, %v1002
        %v3473 = vmul.f32 %v3463, %v990
        %v3474 = vmul.f32 %v3459, %v994
        %v3475 = vmul.f32 %v3455, %v998
        %v3476 = vmul.f32 %v3451, %v1002
        %v3477 = vmul.f32 %v3464, %v990
        %v3478 = vmul.f32 %v3460, %v994
        %v3479 = vmul.f32 %v3456, %v998
        %v3480 = vmul.f32 %v3452, %v1002
        %s3481 = scalar_lea.vmem [#allocation7], 16
        %v3482 = vld [vmem:[%s3481] sm:$0xff]
        %v3484 = vsel %vm554, %v3482, 0
        %3486 = vmatprep.subr.mxu0 %v3466
        %3487 = vmatpush1.msra.mxu0 %v3465
        %3488 = vmatprep.subr.mxu0 %v3470
        %3489 = vmatpush1.msra.mxu0 %v3469
        %3490 = vmatprep.subr.mxu0 %v3474
        %3491 = vmatpush1.msra.mxu0 %v3473
        %3492 = vmatprep.subr.mxu0 %v3478
        %3493 = vmatpush1.msra.mxu0 %v3477
        %3494 = vmatprep.subr.mxu0 0.0
        %3495 = vmatpush1.msra.mxu0 0.0
        %3496 = vmatprep.subr.mxu0 0.0
        %3497 = vmatpush1.msra.mxu0 0.0
        %3498 = vmatprep.subr.mxu0 0.0
        %3499 = vmatpush1.msra.mxu0 0.0
        %3500 = vmatprep.subr.mxu0 0.0
        %3501 = vmatpush1.msra.mxu0 0.0
        %3502 = vmatprep.subr.mxu0 0.0
        %3503 = vmatpush1.msra.mxu0 0.0
        %3504 = vmatprep.subr.mxu0 0.0
        %3505 = vmatpush1.msra.mxu0 0.0
        %3506 = vmatprep.subr.mxu0 0.0
        %3507 = vmatpush1.msra.mxu0 0.0
        %3508 = vmatprep.subr.mxu0 0.0
        %3509 = vmatpush1.msra.mxu0 0.0
        %3510 = vmatprep.subr.mxu0 0.0
        %3511 = vmatpush1.msra.mxu0 0.0
        %3512 = vmatprep.subr.mxu0 0.0
        %3513 = vmatpush1.msra.mxu0 0.0
        %3514 = vmatprep.subr.mxu0 0.0
        %3515 = vmatpush1.msra.mxu0 0.0
        %3516 = vmatprep.subr.mxu0 0.0
        %3517 = vmatpush1.msra.mxu0 0.0
        %3518 = vmatprep.subr.mxu0 0.0
        %3519 = vmatpush1.msra.mxu0 0.0
        %3520 = vmatprep.subr.mxu0 0.0
        %3521 = vmatpush1.msra.mxu0 0.0
        %3522 = vmatprep.subr.mxu0 0.0
        %3523 = vmatpush1.msra.mxu0 0.0
        %3524 = vmatprep.subr.mxu0 0.0
        %3525 = vmatpush1.msra.mxu0 0.0
        %3526 = vmatprep.subr.mxu0 0.0
        %3527 = vmatpush1.msra.mxu0 0.0
        %3528 = vmatprep.subr.mxu0 0.0
        %3529 = vmatpush1.msra.mxu0 0.0
        %3530 = vmatprep.subr.mxu0 0.0
        %3531 = vmatpush1.msra.mxu0 0.0
        %3532 = vmatprep.subr.mxu0 0.0
        %3533 = vmatpush1.msra.mxu0 0.0
        %3534 = vmatprep.subr.mxu0 0.0
        %3535 = vmatpush1.msra.mxu0 0.0
        %3536 = vmatprep.subr.mxu0 0.0
        %3537 = vmatpush1.msra.mxu0 0.0
        %3538 = vmatprep.subr.mxu0 0.0
        %3539 = vmatpush1.msra.mxu0 0.0
        %3540 = vmatprep.subr.mxu0 0.0
        %3541 = vmatpush1.msra.mxu0 0.0
        %3542 = vmatprep.subr.mxu0 0.0
        %3543 = vmatpush1.msra.mxu0 0.0
        %3544 = vmatprep.subr.mxu0 0.0
        %3545 = vmatpush1.msra.mxu0 0.0
        %3546 = vmatprep.subr.mxu0 0.0
        %3547 = vmatpush1.msra.mxu0 0.0
        %3548 = vmatprep.subr.mxu0 0.0
        %3549 = vmatpush1.msra.mxu0 0.0
        %3550 = vmatprep.mubr.f32.mxu0 0.0
        %3551 = vmatmul.mubr.f32.gmra.mrb[0].mxu0 %v3484
        %v3552 = vpop.f32.mrb[0].mxu0
        %v3553 = vadd.f32 0.0, %v3552
        %v3554 = vpop.f32.mrb[0].mxu0
        %v3555 = vadd.f32 0.0, %v3554
        %3556 = vdwg.mxu0
        %3557 = vmatprep.subr.mxu0 %v3468
        %3558 = vmatpush1.msra.mxu0 %v3467
        %3559 = vmatprep.subr.mxu0 %v3472
        %3560 = vmatpush1.msra.mxu0 %v3471
        %3561 = vmatprep.subr.mxu0 %v3476
        %3562 = vmatpush1.msra.mxu0 %v3475
        %3563 = vmatprep.subr.mxu0 %v3480
        %3564 = vmatpush1.msra.mxu0 %v3479
        %3565 = vmatprep.subr.mxu0 0.0
        %3566 = vmatpush1.msra.mxu0 0.0
        %3567 = vmatprep.subr.mxu0 0.0
        %3568 = vmatpush1.msra.mxu0 0.0
        %3569 = vmatprep.subr.mxu0 0.0
        %3570 = vmatpush1.msra.mxu0 0.0
        %3571 = vmatprep.subr.mxu0 0.0
        %3572 = vmatpush1.msra.mxu0 0.0
        %3573 = vmatprep.subr.mxu0 0.0
        %3574 = vmatpush1.msra.mxu0 0.0
        %3575 = vmatprep.subr.mxu0 0.0
        %3576 = vmatpush1.msra.mxu0 0.0
        %3577 = vmatprep.subr.mxu0 0.0
        %3578 = vmatpush1.msra.mxu0 0.0
        %3579 = vmatprep.subr.mxu0 0.0
        %3580 = vmatpush1.msra.mxu0 0.0
        %3581 = vmatprep.subr.mxu0 0.0
        %3582 = vmatpush1.msra.mxu0 0.0
        %3583 = vmatprep.subr.mxu0 0.0
        %3584 = vmatpush1.msra.mxu0 0.0
        %3585 = vmatprep.subr.mxu0 0.0
        %3586 = vmatpush1.msra.mxu0 0.0
        %3587 = vmatprep.subr.mxu0 0.0
        %3588 = vmatpush1.msra.mxu0 0.0
        %3589 = vmatprep.subr.mxu0 0.0
        %3590 = vmatpush1.msra.mxu0 0.0
        %3591 = vmatprep.subr.mxu0 0.0
        %3592 = vmatpush1.msra.mxu0 0.0
        %3593 = vmatprep.subr.mxu0 0.0
        %3594 = vmatpush1.msra.mxu0 0.0
        %3595 = vmatprep.subr.mxu0 0.0
        %3596 = vmatpush1.msra.mxu0 0.0
        %3597 = vmatprep.subr.mxu0 0.0
        %3598 = vmatpush1.msra.mxu0 0.0
        %3599 = vmatprep.subr.mxu0 0.0
        %3600 = vmatpush1.msra.mxu0 0.0
        %3601 = vmatprep.subr.mxu0 0.0
        %3602 = vmatpush1.msra.mxu0 0.0
        %3603 = vmatprep.subr.mxu0 0.0
        %3604 = vmatpush1.msra.mxu0 0.0
        %3605 = vmatprep.subr.mxu0 0.0
        %3606 = vmatpush1.msra.mxu0 0.0
        %3607 = vmatprep.subr.mxu0 0.0
        %3608 = vmatpush1.msra.mxu0 0.0
        %3609 = vmatprep.subr.mxu0 0.0
        %3610 = vmatpush1.msra.mxu0 0.0
        %3611 = vmatprep.subr.mxu0 0.0
        %3612 = vmatpush1.msra.mxu0 0.0
        %3613 = vmatprep.subr.mxu0 0.0
        %3614 = vmatpush1.msra.mxu0 0.0
        %3615 = vmatprep.subr.mxu0 0.0
        %3616 = vmatpush1.msra.mxu0 0.0
        %3617 = vmatprep.subr.mxu0 0.0
        %3618 = vmatpush1.msra.mxu0 0.0
        %3619 = vmatprep.subr.mxu0 0.0
        %3620 = vmatpush1.msra.mxu0 0.0
        %3621 = vmatprep.mubr.f32.mxu0 0.0
        %3622 = vmatmul.mubr.f32.gmra.mrb[0].mxu0 %v3484
        %v3623 = vpop.f32.mrb[0].mxu0
        %v3624 = vadd.f32 0.0, %v3623
        %v3625 = vpop.f32.mrb[0].mxu0
        %v3626 = vadd.f32 0.0, %v3625
        %3627 = vdwg.mxu0
        %v3628 = vadd.f32 %v3342, %v3553
        %v3629 = vadd.f32 %v3344, %v3555
        %v3630 = vadd.f32 %v3413, %v3624
        %v3631 = vadd.f32 %v3415, %v3626
        %3632 = vrot.lane.b32.xlu0 %v2980, 1
        %v3633 = vpop.permute.xlu0 %3632
        %3634 = vrot.lane.b32.xlu0 %v2984, 1
        %v3635 = vpop.permute.xlu0 %3634
        %3636 = vrot.lane.b32.xlu0 %v2988, 1
        %v3637 = vpop.permute.xlu0 %3636
        %3638 = vrot.lane.b32.xlu0 %v2992, 1
        %v3639 = vpop.permute.xlu0 %3638
        %3640 = vrot.lane.b32.xlu0 %v2981, 1
        %v3641 = vpop.permute.xlu0 %3640
        %3642 = vrot.lane.b32.xlu0 %v2985, 1
        %v3643 = vpop.permute.xlu0 %3642
        %3644 = vrot.lane.b32.xlu0 %v2989, 1
        %v3645 = vpop.permute.xlu0 %3644
        %3646 = vrot.lane.b32.xlu0 %v2993, 1
        %v3647 = vpop.permute.xlu0 %3646
        %3648 = vrot.lane.b32.xlu0 %v2982, 1
        %v3649 = vpop.permute.xlu0 %3648
        %3650 = vrot.lane.b32.xlu0 %v2986, 1
        %v3651 = vpop.permute.xlu0 %3650
        %3652 = vrot.lane.b32.xlu0 %v2990, 1
        %v3653 = vpop.permute.xlu0 %3652
        %3654 = vrot.lane.b32.xlu0 %v2994, 1
        %v3655 = vpop.permute.xlu0 %3654
        %3656 = vrot.lane.b32.xlu0 %v2983, 1
        %v3657 = vpop.permute.xlu0 %3656
        %3658 = vrot.lane.b32.xlu0 %v2987, 1
        %v3659 = vpop.permute.xlu0 %3658
        %3660 = vrot.lane.b32.xlu0 %v2991, 1
        %v3661 = vpop.permute.xlu0 %3660
        %3662 = vrot.lane.b32.xlu0 %v2995, 1
        %v3663 = vpop.permute.xlu0 %3662
        %v3664 = vsel %vm1266, %v3649, %v3657
        %v3665 = vsel %vm1266, %v3651, %v3659
        %v3666 = vsel %vm1266, %v3653, %v3661
        %v3667 = vsel %vm1266, %v3655, %v3663
        %v3668 = vsel %vm1266, %v3641, %v3649
        %v3669 = vsel %vm1266, %v3643, %v3651
        %v3670 = vsel %vm1266, %v3645, %v3653
        %v3671 = vsel %vm1266, %v3647, %v3655
        %v3672 = vsel %vm1266, %v3633, %v3641
        %v3673 = vsel %vm1266, %v3635, %v3643
        %v3674 = vsel %vm1266, %v3637, %v3645
        %v3675 = vsel %vm1266, %v3639, %v3647
        %v3676 = vsel %vm1266, %v3657, %v3633
        %v3677 = vsel %vm1266, %v3659, %v3635
        %v3678 = vsel %vm1266, %v3661, %v3637
        %v3679 = vsel %vm1266, %v3663, %v3639
        %v3680 = vmul.f32 %v3676, %v1289
        %v3681 = vmul.f32 %v3672, %v1293
        %v3682 = vmul.f32 %v3668, %v1297
        %v3683 = vmul.f32 %v3664, %v1301
        %v3684 = vmul.f32 %v3677, %v1289
        %v3685 = vmul.f32 %v3673, %v1293
        %v3686 = vmul.f32 %v3669, %v1297
        %v3687 = vmul.f32 %v3665, %v1301
        %v3688 = vmul.f32 %v3678, %v1289
        %v3689 = vmul.f32 %v3674, %v1293
        %v3690 = vmul.f32 %v3670, %v1297
        %v3691 = vmul.f32 %v3666, %v1301
        %v3692 = vmul.f32 %v3679, %v1289
        %v3693 = vmul.f32 %v3675, %v1293
        %v3694 = vmul.f32 %v3671, %v1297
        %v3695 = vmul.f32 %v3667, %v1301
        %s3696 = scalar_lea.vmem [#allocation7], 24
        %v3697 = vld [vmem:[%s3696] sm:$0xff]
        %v3699 = vsel %vm554, %v3697, 0
        %3701 = vmatprep.subr.mxu0 %v3681
        %3702 = vmatpush1.msra.mxu0 %v3680
        %3703 = vmatprep.subr.mxu0 %v3685
        %3704 = vmatpush1.msra.mxu0 %v3684
        %3705 = vmatprep.subr.mxu0 %v3689
        %3706 = vmatpush1.msra.mxu0 %v3688
        %3707 = vmatprep.subr.mxu0 %v3693
        %3708 = vmatpush1.msra.mxu0 %v3692
        %3709 = vmatprep.subr.mxu0 0.0
        %3710 = vmatpush1.msra.mxu0 0.0
        %3711 = vmatprep.subr.mxu0 0.0
        %3712 = vmatpush1.msra.mxu0 0.0
        %3713 = vmatprep.subr.mxu0 0.0
        %3714 = vmatpush1.msra.mxu0 0.0
        %3715 = vmatprep.subr.mxu0 0.0
        %3716 = vmatpush1.msra.mxu0 0.0
        %3717 = vmatprep.subr.mxu0 0.0
        %3718 = vmatpush1.msra.mxu0 0.0
        %3719 = vmatprep.subr.mxu0 0.0
        %3720 = vmatpush1.msra.mxu0 0.0
        %3721 = vmatprep.subr.mxu0 0.0
        %3722 = vmatpush1.msra.mxu0 0.0
        %3723 = vmatprep.subr.mxu0 0.0
        %3724 = vmatpush1.msra.mxu0 0.0
        %3725 = vmatprep.subr.mxu0 0.0
        %3726 = vmatpush1.msra.mxu0 0.0
        %3727 = vmatprep.subr.mxu0 0.0
        %3728 = vmatpush1.msra.mxu0 0.0
        %3729 = vmatprep.subr.mxu0 0.0
        %3730 = vmatpush1.msra.mxu0 0.0
        %3731 = vmatprep.subr.mxu0 0.0
        %3732 = vmatpush1.msra.mxu0 0.0
        %3733 = vmatprep.subr.mxu0 0.0
        %3734 = vmatpush1.msra.mxu0 0.0
        %3735 = vmatprep.subr.mxu0 0.0
        %3736 = vmatpush1.msra.mxu0 0.0
        %3737 = vmatprep.subr.mxu0 0.0
        %3738 = vmatpush1.msra.mxu0 0.0
        %3739 = vmatprep.subr.mxu0 0.0
        %3740 = vmatpush1.msra.mxu0 0.0
        %3741 = vmatprep.subr.mxu0 0.0
        %3742 = vmatpush1.msra.mxu0 0.0
        %3743 = vmatprep.subr.mxu0 0.0
        %3744 = vmatpush1.msra.mxu0 0.0
        %3745 = vmatprep.subr.mxu0 0.0
        %3746 = vmatpush1.msra.mxu0 0.0
        %3747 = vmatprep.subr.mxu0 0.0
        %3748 = vmatpush1.msra.mxu0 0.0
        %3749 = vmatprep.subr.mxu0 0.0
        %3750 = vmatpush1.msra.mxu0 0.0
        %3751 = vmatprep.subr.mxu0 0.0
        %3752 = vmatpush1.msra.mxu0 0.0
        %3753 = vmatprep.subr.mxu0 0.0
        %3754 = vmatpush1.msra.mxu0 0.0
        %3755 = vmatprep.subr.mxu0 0.0
        %3756 = vmatpush1.msra.mxu0 0.0
        %3757 = vmatprep.subr.mxu0 0.0
        %3758 = vmatpush1.msra.mxu0 0.0
        %3759 = vmatprep.subr.mxu0 0.0
        %3760 = vmatpush1.msra.mxu0 0.0
        %3761 = vmatprep.subr.mxu0 0.0
        %3762 = vmatpush1.msra.mxu0 0.0
        %3763 = vmatprep.subr.mxu0 0.0
        %3764 = vmatpush1.msra.mxu0 0.0
        %3765 = vmatprep.mubr.f32.mxu0 0.0
        %3766 = vmatmul.mubr.f32.gmra.mrb[0].mxu0 %v3699
        %v3767 = vpop.f32.mrb[0].mxu0
        %v3768 = vadd.f32 0.0, %v3767
        %v3769 = vpop.f32.mrb[0].mxu0
        %v3770 = vadd.f32 0.0, %v3769
        %3771 = vdwg.mxu0
        %3772 = vmatprep.subr.mxu0 %v3683
        %3773 = vmatpush1.msra.mxu0 %v3682
        %3774 = vmatprep.subr.mxu0 %v3687
        %3775 = vmatpush1.msra.mxu0 %v3686
        %3776 = vmatprep.subr.mxu0 %v3691
        %3777 = vmatpush1.msra.mxu0 %v3690
        %3778 = vmatprep.subr.mxu0 %v3695
        %3779 = vmatpush1.msra.mxu0 %v3694
        %3780 = vmatprep.subr.mxu0 0.0
        %3781 = vmatpush1.msra.mxu0 0.0
        %3782 = vmatprep.subr.mxu0 0.0
        %3783 = vmatpush1.msra.mxu0 0.0
        %3784 = vmatprep.subr.mxu0 0.0
        %3785 = vmatpush1.msra.mxu0 0.0
        %3786 = vmatprep.subr.mxu0 0.0
        %3787 = vmatpush1.msra.mxu0 0.0
        %3788 = vmatprep.subr.mxu0 0.0
        %3789 = vmatpush1.msra.mxu0 0.0
        %3790 = vmatprep.subr.mxu0 0.0
        %3791 = vmatpush1.msra.mxu0 0.0
        %3792 = vmatprep.subr.mxu0 0.0
        %3793 = vmatpush1.msra.mxu0 0.0
        %3794 = vmatprep.subr.mxu0 0.0
        %3795 = vmatpush1.msra.mxu0 0.0
        %3796 = vmatprep.subr.mxu0 0.0
        %3797 = vmatpush1.msra.mxu0 0.0
        %3798 = vmatprep.subr.mxu0 0.0
        %3799 = vmatpush1.msra.mxu0 0.0
        %3800 = vmatprep.subr.mxu0 0.0
        %3801 = vmatpush1.msra.mxu0 0.0
        %3802 = vmatprep.subr.mxu0 0.0
        %3803 = vmatpush1.msra.mxu0 0.0
        %3804 = vmatprep.subr.mxu0 0.0
        %3805 = vmatpush1.msra.mxu0 0.0
        %3806 = vmatprep.subr.mxu0 0.0
        %3807 = vmatpush1.msra.mxu0 0.0
        %3808 = vmatprep.subr.mxu0 0.0
        %3809 = vmatpush1.msra.mxu0 0.0
        %3810 = vmatprep.subr.mxu0 0.0
        %3811 = vmatpush1.msra.mxu0 0.0
        %3812 = vmatprep.subr.mxu0 0.0
        %3813 = vmatpush1.msra.mxu0 0.0
        %3814 = vmatprep.subr.mxu0 0.0
        %3815 = vmatpush1.msra.mxu0 0.0
        %3816 = vmatprep.subr.mxu0 0.0
        %3817 = vmatpush1.msra.mxu0 0.0
        %3818 = vmatprep.subr.mxu0 0.0
        %3819 = vmatpush1.msra.mxu0 0.0
        %3820 = vmatprep.subr.mxu0 0.0
        %3821 = vmatpush1.msra.mxu0 0.0
        %3822 = vmatprep.subr.mxu0 0.0
        %3823 = vmatpush1.msra.mxu0 0.0
        %3824 = vmatprep.subr.mxu0 0.0
        %3825 = vmatpush1.msra.mxu0 0.0
        %3826 = vmatprep.subr.mxu0 0.0
        %3827 = vmatpush1.msra.mxu0 0.0
        %3828 = vmatprep.subr.mxu0 0.0
        %3829 = vmatpush1.msra.mxu0 0.0
        %3830 = vmatprep.subr.mxu0 0.0
        %3831 = vmatpush1.msra.mxu0 0.0
        %3832 = vmatprep.subr.mxu0 0.0
        %3833 = vmatpush1.msra.mxu0 0.0
        %3834 = vmatprep.subr.mxu0 0.0
        %3835 = vmatpush1.msra.mxu0 0.0
        %3836 = vmatprep.mubr.f32.mxu0 0.0
        %3837 = vmatmul.mubr.f32.gmra.mrb[0].mxu0 %v3699
        %v3838 = vpop.f32.mrb[0].mxu0
        %v3839 = vadd.f32 0.0, %v3838
        %v3840 = vpop.f32.mrb[0].mxu0
        %v3841 = vadd.f32 0.0, %v3840
        %3842 = vdwg.mxu0
        %v3843 = vadd.f32 %v3628, %v3768
        %v3844 = vadd.f32 %v3629, %v3770
        %v3845 = vadd.f32 %v3630, %v3839
        %v3846 = vadd.f32 %v3631, %v3841
        %s3847 = scalar_lea.vmem [#allocation7], 32
        %v3848 = vld [vmem:[%s3847] sm:$0xff]
        %v3850 = vsel %vm554, %v3848, 0
        %3852 = vmatprep.subr.mxu0 %v2981
        %3853 = vmatpush1.msra.mxu0 %v2980
        %3854 = vmatprep.subr.mxu0 %v2985
        %3855 = vmatpush1.msra.mxu0 %v2984
        %3856 = vmatprep.subr.mxu0 %v2989
        %3857 = vmatpush1.msra.mxu0 %v2988
        %3858 = vmatprep.subr.mxu0 %v2993
        %3859 = vmatpush1.msra.mxu0 %v2992
        %3860 = vmatprep.subr.mxu0 0.0
        %3861 = vmatpush1.msra.mxu0 0.0
        %3862 = vmatprep.subr.mxu0 0.0
        %3863 = vmatpush1.msra.mxu0 0.0
        %3864 = vmatprep.subr.mxu0 0.0
        %3865 = vmatpush1.msra.mxu0 0.0
        %3866 = vmatprep.subr.mxu0 0.0
        %3867 = vmatpush1.msra.mxu0 0.0
        %3868 = vmatprep.subr.mxu0 0.0
        %3869 = vmatpush1.msra.mxu0 0.0
        %3870 = vmatprep.subr.mxu0 0.0
        %3871 = vmatpush1.msra.mxu0 0.0
        %3872 = vmatprep.subr.mxu0 0.0
        %3873 = vmatpush1.msra.mxu0 0.0
        %3874 = vmatprep.subr.mxu0 0.0
        %3875 = vmatpush1.msra.mxu0 0.0
        %3876 = vmatprep.subr.mxu0 0.0
        %3877 = vmatpush1.msra.mxu0 0.0
        %3878 = vmatprep.subr.mxu0 0.0
        %3879 = vmatpush1.msra.mxu0 0.0
        %3880 = vmatprep.subr.mxu0 0.0
        %3881 = vmatpush1.msra.mxu0 0.0
        %3882 = vmatprep.subr.mxu0 0.0
        %3883 = vmatpush1.msra.mxu0 0.0
        %3884 = vmatprep.subr.mxu0 0.0
        %3885 = vmatpush1.msra.mxu0 0.0
        %3886 = vmatprep.subr.mxu0 0.0
        %3887 = vmatpush1.msra.mxu0 0.0
        %3888 = vmatprep.subr.mxu0 0.0
        %3889 = vmatpush1.msra.mxu0 0.0
        %3890 = vmatprep.subr.mxu0 0.0
        %3891 = vmatpush1.msra.mxu0 0.0
        %3892 = vmatprep.subr.mxu0 0.0
        %3893 = vmatpush1.msra.mxu0 0.0
        %3894 = vmatprep.subr.mxu0 0.0
        %3895 = vmatpush1.msra.mxu0 0.0
        %3896 = vmatprep.subr.mxu0 0.0
        %3897 = vmatpush1.msra.mxu0 0.0
        %3898 = vmatprep.subr.mxu0 0.0
        %3899 = vmatpush1.msra.mxu0 0.0
        %3900 = vmatprep.subr.mxu0 0.0
        %3901 = vmatpush1.msra.mxu0 0.0
        %3902 = vmatprep.subr.mxu0 0.0
        %3903 = vmatpush1.msra.mxu0 0.0
        %3904 = vmatprep.subr.mxu0 0.0
        %3905 = vmatpush1.msra.mxu0 0.0
        %3906 = vmatprep.subr.mxu0 0.0
        %3907 = vmatpush1.msra.mxu0 0.0
        %3908 = vmatprep.subr.mxu0 0.0
        %3909 = vmatpush1.msra.mxu0 0.0
        %3910 = vmatprep.subr.mxu0 0.0
        %3911 = vmatpush1.msra.mxu0 0.0
        %3912 = vmatprep.subr.mxu0 0.0
        %3913 = vmatpush1.msra.mxu0 0.0
        %3914 = vmatprep.subr.mxu0 0.0
        %3915 = vmatpush1.msra.mxu0 0.0
        %3916 = vmatprep.mubr.f32.mxu0 0.0
        %3917 = vmatmul.mubr.f32.gmra.mrb[0].mxu0 %v3850
        %v3918 = vpop.f32.mrb[0].mxu0
        %v3919 = vadd.f32 0.0, %v3918
        %v3920 = vpop.f32.mrb[0].mxu0
        %v3921 = vadd.f32 0.0, %v3920
        %3922 = vdwg.mxu0
        %3923 = vmatprep.subr.mxu0 %v2983
        %3924 = vmatpush1.msra.mxu0 %v2982
        %3925 = vmatprep.subr.mxu0 %v2987
        %3926 = vmatpush1.msra.mxu0 %v2986
        %3927 = vmatprep.subr.mxu0 %v2991
        %3928 = vmatpush1.msra.mxu0 %v2990
        %3929 = vmatprep.subr.mxu0 %v2995
        %3930 = vmatpush1.msra.mxu0 %v2994
        %3931 = vmatprep.subr.mxu0 0.0
        %3932 = vmatpush1.msra.mxu0 0.0
        %3933 = vmatprep.subr.mxu0 0.0
        %3934 = vmatpush1.msra.mxu0 0.0
        %3935 = vmatprep.subr.mxu0 0.0
        %3936 = vmatpush1.msra.mxu0 0.0
        %3937 = vmatprep.subr.mxu0 0.0
        %3938 = vmatpush1.msra.mxu0 0.0
        %3939 = vmatprep.subr.mxu0 0.0
        %3940 = vmatpush1.msra.mxu0 0.0
        %3941 = vmatprep.subr.mxu0 0.0
        %3942 = vmatpush1.msra.mxu0 0.0
        %3943 = vmatprep.subr.mxu0 0.0
        %3944 = vmatpush1.msra.mxu0 0.0
        %3945 = vmatprep.subr.mxu0 0.0
        %3946 = vmatpush1.msra.mxu0 0.0
        %3947 = vmatprep.subr.mxu0 0.0
        %3948 = vmatpush1.msra.mxu0 0.0
        %3949 = vmatprep.subr.mxu0 0.0
        %3950 = vmatpush1.msra.mxu0 0.0
        %3951 = vmatprep.subr.mxu0 0.0
        %3952 = vmatpush1.msra.mxu0 0.0
        %3953 = vmatprep.subr.mxu0 0.0
        %3954 = vmatpush1.msra.mxu0 0.0
        %3955 = vmatprep.subr.mxu0 0.0
        %3956 = vmatpush1.msra.mxu0 0.0
        %3957 = vmatprep.subr.mxu0 0.0
        %3958 = vmatpush1.msra.mxu0 0.0
        %3959 = vmatprep.subr.mxu0 0.0
        %3960 = vmatpush1.msra.mxu0 0.0
        %3961 = vmatprep.subr.mxu0 0.0
        %3962 = vmatpush1.msra.mxu0 0.0
        %3963 = vmatprep.subr.mxu0 0.0
        %3964 = vmatpush1.msra.mxu0 0.0
        %3965 = vmatprep.subr.mxu0 0.0
        %3966 = vmatpush1.msra.mxu0 0.0
        %3967 = vmatprep.subr.mxu0 0.0
        %3968 = vmatpush1.msra.mxu0 0.0
        %3969 = vmatprep.subr.mxu0 0.0
        %3970 = vmatpush1.msra.mxu0 0.0
        %3971 = vmatprep.subr.mxu0 0.0
        %3972 = vmatpush1.msra.mxu0 0.0
        %3973 = vmatprep.subr.mxu0 0.0
        %3974 = vmatpush1.msra.mxu0 0.0
        %3975 = vmatprep.subr.mxu0 0.0
        %3976 = vmatpush1.msra.mxu0 0.0
        %3977 = vmatprep.subr.mxu0 0.0
        %3978 = vmatpush1.msra.mxu0 0.0
        %3979 = vmatprep.subr.mxu0 0.0
        %3980 = vmatpush1.msra.mxu0 0.0
        %3981 = vmatprep.subr.mxu0 0.0
        %3982 = vmatpush1.msra.mxu0 0.0
        %3983 = vmatprep.subr.mxu0 0.0
        %3984 = vmatpush1.msra.mxu0 0.0
        %3985 = vmatprep.subr.mxu0 0.0
        %3986 = vmatpush1.msra.mxu0 0.0
        %3987 = vmatprep.mubr.f32.mxu0 0.0
        %3988 = vmatmul.mubr.f32.gmra.mrb[0].mxu0 %v3850
        %v3989 = vpop.f32.mrb[0].mxu0
        %v3990 = vadd.f32 0.0, %v3989
        %v3991 = vpop.f32.mrb[0].mxu0
        %v3992 = vadd.f32 0.0, %v3991
        %3993 = vdwg.mxu0
        %v3994 = vadd.f32 %v3843, %v3919
        %v3995 = vadd.f32 %v3844, %v3921
        %v3996 = vadd.f32 %v3845, %v3990
        %v3997 = vadd.f32 %v3846, %v3992
        %3998 = vrot.lane.b32.xlu0 %v2980, 127
        %v3999 = vpop.permute.xlu0 %3998
        %4000 = vrot.lane.b32.xlu0 %v2984, 127
        %v4001 = vpop.permute.xlu0 %4000
        %4002 = vrot.lane.b32.xlu0 %v2988, 127
        %v4003 = vpop.permute.xlu0 %4002
        %4004 = vrot.lane.b32.xlu0 %v2992, 127
        %v4005 = vpop.permute.xlu0 %4004
        %4006 = vrot.lane.b32.xlu0 %v2981, 127
        %v4007 = vpop.permute.xlu0 %4006
        %4008 = vrot.lane.b32.xlu0 %v2985, 127
        %v4009 = vpop.permute.xlu0 %4008
        %4010 = vrot.lane.b32.xlu0 %v2989, 127
        %v4011 = vpop.permute.xlu0 %4010
        %4012 = vrot.lane.b32.xlu0 %v2993, 127
        %v4013 = vpop.permute.xlu0 %4012
        %4014 = vrot.lane.b32.xlu0 %v2982, 127
        %v4015 = vpop.permute.xlu0 %4014
        %4016 = vrot.lane.b32.xlu0 %v2986, 127
        %v4017 = vpop.permute.xlu0 %4016
        %4018 = vrot.lane.b32.xlu0 %v2990, 127
        %v4019 = vpop.permute.xlu0 %4018
        %4020 = vrot.lane.b32.xlu0 %v2994, 127
        %v4021 = vpop.permute.xlu0 %4020
        %4022 = vrot.lane.b32.xlu0 %v2983, 127
        %v4023 = vpop.permute.xlu0 %4022
        %4024 = vrot.lane.b32.xlu0 %v2987, 127
        %v4025 = vpop.permute.xlu0 %4024
        %4026 = vrot.lane.b32.xlu0 %v2991, 127
        %v4027 = vpop.permute.xlu0 %4026
        %4028 = vrot.lane.b32.xlu0 %v2995, 127
        %v4029 = vpop.permute.xlu0 %4028
        %v4030 = vsel %vm1776, %v4015, %v4023
        %v4031 = vsel %vm1776, %v4017, %v4025
        %v4032 = vsel %vm1776, %v4019, %v4027
        %v4033 = vsel %vm1776, %v4021, %v4029
        %v4034 = vsel %vm1776, %v4007, %v4015
        %v4035 = vsel %vm1776, %v4009, %v4017
        %v4036 = vsel %vm1776, %v4011, %v4019
        %v4037 = vsel %vm1776, %v4013, %v4021
        %v4038 = vsel %vm1776, %v3999, %v4007
        %v4039 = vsel %vm1776, %v4001, %v4009
        %v4040 = vsel %vm1776, %v4003, %v4011
        %v4041 = vsel %vm1776, %v4005, %v4013
        %v4042 = vsel %vm1776, %v4023, %v3999
        %v4043 = vsel %vm1776, %v4025, %v4001
        %v4044 = vsel %vm1776, %v4027, %v4003
        %v4045 = vsel %vm1776, %v4029, %v4005
        %v4046 = vmul.f32 %v4038, %v1799
        %v4047 = vmul.f32 %v4034, %v1803
        %v4048 = vmul.f32 %v4030, %v1807
        %v4049 = vmul.f32 %v4042, %v1811
        %v4050 = vmul.f32 %v4039, %v1799
        %v4051 = vmul.f32 %v4035, %v1803
        %v4052 = vmul.f32 %v4031, %v1807
        %v4053 = vmul.f32 %v4043, %v1811
        %v4054 = vmul.f32 %v4040, %v1799
        %v4055 = vmul.f32 %v4036, %v1803
        %v4056 = vmul.f32 %v4032, %v1807
        %v4057 = vmul.f32 %v4044, %v1811
        %v4058 = vmul.f32 %v4041, %v1799
        %v4059 = vmul.f32 %v4037, %v1803
        %v4060 = vmul.f32 %v4033, %v1807
        %v4061 = vmul.f32 %v4045, %v1811
        %s4062 = scalar_lea.vmem [#allocation7], 40
        %v4063 = vld [vmem:[%s4062] sm:$0xff]
        %v4065 = vsel %vm554, %v4063, 0
        %4067 = vmatprep.subr.mxu0 %v4047
        %4068 = vmatpush1.msra.mxu0 %v4046
        %4069 = vmatprep.subr.mxu0 %v4051
        %4070 = vmatpush1.msra.mxu0 %v4050
        %4071 = vmatprep.subr.mxu0 %v4055
        %4072 = vmatpush1.msra.mxu0 %v4054
        %4073 = vmatprep.subr.mxu0 %v4059
        %4074 = vmatpush1.msra.mxu0 %v4058
        %4075 = vmatprep.subr.mxu0 0.0
        %4076 = vmatpush1.msra.mxu0 0.0
        %4077 = vmatprep.subr.mxu0 0.0
        %4078 = vmatpush1.msra.mxu0 0.0
        %4079 = vmatprep.subr.mxu0 0.0
        %4080 = vmatpush1.msra.mxu0 0.0
        %4081 = vmatprep.subr.mxu0 0.0
        %4082 = vmatpush1.msra.mxu0 0.0
        %4083 = vmatprep.subr.mxu0 0.0
        %4084 = vmatpush1.msra.mxu0 0.0
        %4085 = vmatprep.subr.mxu0 0.0
        %4086 = vmatpush1.msra.mxu0 0.0
        %4087 = vmatprep.subr.mxu0 0.0
        %4088 = vmatpush1.msra.mxu0 0.0
        %4089 = vmatprep.subr.mxu0 0.0
        %4090 = vmatpush1.msra.mxu0 0.0
        %4091 = vmatprep.subr.mxu0 0.0
        %4092 = vmatpush1.msra.mxu0 0.0
        %4093 = vmatprep.subr.mxu0 0.0
        %4094 = vmatpush1.msra.mxu0 0.0
        %4095 = vmatprep.subr.mxu0 0.0
        %4096 = vmatpush1.msra.mxu0 0.0
        %4097 = vmatprep.subr.mxu0 0.0
        %4098 = vmatpush1.msra.mxu0 0.0
        %4099 = vmatprep.subr.mxu0 0.0
        %4100 = vmatpush1.msra.mxu0 0.0
        %4101 = vmatprep.subr.mxu0 0.0
        %4102 = vmatpush1.msra.mxu0 0.0
        %4103 = vmatprep.subr.mxu0 0.0
        %4104 = vmatpush1.msra.mxu0 0.0
        %4105 = vmatprep.subr.mxu0 0.0
        %4106 = vmatpush1.msra.mxu0 0.0
        %4107 = vmatprep.subr.mxu0 0.0
        %4108 = vmatpush1.msra.mxu0 0.0
        %4109 = vmatprep.subr.mxu0 0.0
        %4110 = vmatpush1.msra.mxu0 0.0
        %4111 = vmatprep.subr.mxu0 0.0
        %4112 = vmatpush1.msra.mxu0 0.0
        %4113 = vmatprep.subr.mxu0 0.0
        %4114 = vmatpush1.msra.mxu0 0.0
        %4115 = vmatprep.subr.mxu0 0.0
        %4116 = vmatpush1.msra.mxu0 0.0
        %4117 = vmatprep.subr.mxu0 0.0
        %4118 = vmatpush1.msra.mxu0 0.0
        %4119 = vmatprep.subr.mxu0 0.0
        %4120 = vmatpush1.msra.mxu0 0.0
        %4121 = vmatprep.subr.mxu0 0.0
        %4122 = vmatpush1.msra.mxu0 0.0
        %4123 = vmatprep.subr.mxu0 0.0
        %4124 = vmatpush1.msra.mxu0 0.0
        %4125 = vmatprep.subr.mxu0 0.0
        %4126 = vmatpush1.msra.mxu0 0.0
        %4127 = vmatprep.subr.mxu0 0.0
        %4128 = vmatpush1.msra.mxu0 0.0
        %4129 = vmatprep.subr.mxu0 0.0
        %4130 = vmatpush1.msra.mxu0 0.0
        %4131 = vmatprep.mubr.f32.mxu0 0.0
        %4132 = vmatmul.mubr.f32.gmra.mrb[0].mxu0 %v4065
        %v4133 = vpop.f32.mrb[0].mxu0
        %v4134 = vadd.f32 0.0, %v4133
        %v4135 = vpop.f32.mrb[0].mxu0
        %v4136 = vadd.f32 0.0, %v4135
        %4137 = vdwg.mxu0
        %4138 = vmatprep.subr.mxu0 %v4049
        %4139 = vmatpush1.msra.mxu0 %v4048
        %4140 = vmatprep.subr.mxu0 %v4053
        %4141 = vmatpush1.msra.mxu0 %v4052
        %4142 = vmatprep.subr.mxu0 %v4057
        %4143 = vmatpush1.msra.mxu0 %v4056
        %4144 = vmatprep.subr.mxu0 %v4061
        %4145 = vmatpush1.msra.mxu0 %v4060
        %4146 = vmatprep.subr.mxu0 0.0
        %4147 = vmatpush1.msra.mxu0 0.0
        %4148 = vmatprep.subr.mxu0 0.0
        %4149 = vmatpush1.msra.mxu0 0.0
        %4150 = vmatprep.subr.mxu0 0.0
        %4151 = vmatpush1.msra.mxu0 0.0
        %4152 = vmatprep.subr.mxu0 0.0
        %4153 = vmatpush1.msra.mxu0 0.0
        %4154 = vmatprep.subr.mxu0 0.0
        %4155 = vmatpush1.msra.mxu0 0.0
        %4156 = vmatprep.subr.mxu0 0.0
        %4157 = vmatpush1.msra.mxu0 0.0
        %4158 = vmatprep.subr.mxu0 0.0
        %4159 = vmatpush1.msra.mxu0 0.0
        %4160 = vmatprep.subr.mxu0 0.0
        %4161 = vmatpush1.msra.mxu0 0.0
        %4162 = vmatprep.subr.mxu0 0.0
        %4163 = vmatpush1.msra.mxu0 0.0
        %4164 = vmatprep.subr.mxu0 0.0
        %4165 = vmatpush1.msra.mxu0 0.0
        %4166 = vmatprep.subr.mxu0 0.0
        %4167 = vmatpush1.msra.mxu0 0.0
        %4168 = vmatprep.subr.mxu0 0.0
        %4169 = vmatpush1.msra.mxu0 0.0
        %4170 = vmatprep.subr.mxu0 0.0
        %4171 = vmatpush1.msra.mxu0 0.0
        %4172 = vmatprep.subr.mxu0 0.0
        %4173 = vmatpush1.msra.mxu0 0.0
        %4174 = vmatprep.subr.mxu0 0.0
        %4175 = vmatpush1.msra.mxu0 0.0
        %4176 = vmatprep.subr.mxu0 0.0
        %4177 = vmatpush1.msra.mxu0 0.0
        %4178 = vmatprep.subr.mxu0 0.0
        %4179 = vmatpush1.msra.mxu0 0.0
        %4180 = vmatprep.subr.mxu0 0.0
        %4181 = vmatpush1.msra.mxu0 0.0
        %4182 = vmatprep.subr.mxu0 0.0
        %4183 = vmatpush1.msra.mxu0 0.0
        %4184 = vmatprep.subr.mxu0 0.0
        %4185 = vmatpush1.msra.mxu0 0.0
        %4186 = vmatprep.subr.mxu0 0.0
        %4187 = vmatpush1.msra.mxu0 0.0
        %4188 = vmatprep.subr.mxu0 0.0
        %4189 = vmatpush1.msra.mxu0 0.0
        %4190 = vmatprep.subr.mxu0 0.0
        %4191 = vmatpush1.msra.mxu0 0.0
        %4192 = vmatprep.subr.mxu0 0.0
        %4193 = vmatpush1.msra.mxu0 0.0
        %4194 = vmatprep.subr.mxu0 0.0
        %4195 = vmatpush1.msra.mxu0 0.0
        %4196 = vmatprep.subr.mxu0 0.0
        %4197 = vmatpush1.msra.mxu0 0.0
        %4198 = vmatprep.subr.mxu0 0.0
        %4199 = vmatpush1.msra.mxu0 0.0
        %4200 = vmatprep.subr.mxu0 0.0
        %4201 = vmatpush1.msra.mxu0 0.0
        %4202 = vmatprep.mubr.f32.mxu0 0.0
        %4203 = vmatmul.mubr.f32.gmra.mrb[0].mxu0 %v4065
        %v4204 = vpop.f32.mrb[0].mxu0
        %v4205 = vadd.f32 0.0, %v4204
        %v4206 = vpop.f32.mrb[0].mxu0
        %v4207 = vadd.f32 0.0, %v4206
        %4208 = vdwg.mxu0
        %v4209 = vadd.f32 %v3994, %v4134
        %v4210 = vadd.f32 %v3995, %v4136
        %v4211 = vadd.f32 %v3996, %v4205
        %v4212 = vadd.f32 %v3997, %v4207
        %4213 = vrot.lane.b32.xlu0 %v2980, 113
        %v4214 = vpop.permute.xlu0 %4213
        %4215 = vrot.lane.b32.xlu0 %v2984, 113
        %v4216 = vpop.permute.xlu0 %4215
        %4217 = vrot.lane.b32.xlu0 %v2988, 113
        %v4218 = vpop.permute.xlu0 %4217
        %4219 = vrot.lane.b32.xlu0 %v2992, 113
        %v4220 = vpop.permute.xlu0 %4219
        %4221 = vrot.lane.b32.xlu0 %v2981, 113
        %v4222 = vpop.permute.xlu0 %4221
        %4223 = vrot.lane.b32.xlu0 %v2985, 113
        %v4224 = vpop.permute.xlu0 %4223
        %4225 = vrot.lane.b32.xlu0 %v2989, 113
        %v4226 = vpop.permute.xlu0 %4225
        %4227 = vrot.lane.b32.xlu0 %v2993, 113
        %v4228 = vpop.permute.xlu0 %4227
        %4229 = vrot.lane.b32.xlu0 %v2982, 113
        %v4230 = vpop.permute.xlu0 %4229
        %4231 = vrot.lane.b32.xlu0 %v2986, 113
        %v4232 = vpop.permute.xlu0 %4231
        %4233 = vrot.lane.b32.xlu0 %v2990, 113
        %v4234 = vpop.permute.xlu0 %4233
        %4235 = vrot.lane.b32.xlu0 %v2994, 113
        %v4236 = vpop.permute.xlu0 %4235
        %4237 = vrot.lane.b32.xlu0 %v2983, 113
        %v4238 = vpop.permute.xlu0 %4237
        %4239 = vrot.lane.b32.xlu0 %v2987, 113
        %v4240 = vpop.permute.xlu0 %4239
        %4241 = vrot.lane.b32.xlu0 %v2991, 113
        %v4242 = vpop.permute.xlu0 %4241
        %4243 = vrot.lane.b32.xlu0 %v2995, 113
        %v4244 = vpop.permute.xlu0 %4243
        %v4245 = vsel %vm2075, %v4230, %v4238
        %v4246 = vsel %vm2075, %v4232, %v4240
        %v4247 = vsel %vm2075, %v4234, %v4242
        %v4248 = vsel %vm2075, %v4236, %v4244
        %v4249 = vsel %vm2075, %v4222, %v4230
        %v4250 = vsel %vm2075, %v4224, %v4232
        %v4251 = vsel %vm2075, %v4226, %v4234
        %v4252 = vsel %vm2075, %v4228, %v4236
        %v4253 = vsel %vm2075, %v4214, %v4222
        %v4254 = vsel %vm2075, %v4216, %v4224
        %v4255 = vsel %vm2075, %v4218, %v4226
        %v4256 = vsel %vm2075, %v4220, %v4228
        %v4257 = vsel %vm2075, %v4238, %v4214
        %v4258 = vsel %vm2075, %v4240, %v4216
        %v4259 = vsel %vm2075, %v4242, %v4218
        %v4260 = vsel %vm2075, %v4244, %v4220
        %v4261 = vmul.f32 %v4253, %v2098
        %v4262 = vmul.f32 %v4249, %v2102
        %v4263 = vmul.f32 %v4245, %v2106
        %v4264 = vmul.f32 %v4257, %v2110
        %v4265 = vmul.f32 %v4254, %v2098
        %v4266 = vmul.f32 %v4250, %v2102
        %v4267 = vmul.f32 %v4246, %v2106
        %v4268 = vmul.f32 %v4258, %v2110
        %v4269 = vmul.f32 %v4255, %v2098
        %v4270 = vmul.f32 %v4251, %v2102
        %v4271 = vmul.f32 %v4247, %v2106
        %v4272 = vmul.f32 %v4259, %v2110
        %v4273 = vmul.f32 %v4256, %v2098
        %v4274 = vmul.f32 %v4252, %v2102
        %v4275 = vmul.f32 %v4248, %v2106
        %v4276 = vmul.f32 %v4260, %v2110
        %s4277 = scalar_lea.vmem [#allocation7], 48
        %v4278 = vld [vmem:[%s4277] sm:$0xff]
        %v4280 = vsel %vm554, %v4278, 0
        %4282 = vmatprep.subr.mxu0 %v4262
        %4283 = vmatpush1.msra.mxu0 %v4261
        %4284 = vmatprep.subr.mxu0 %v4266
        %4285 = vmatpush1.msra.mxu0 %v4265
        %4286 = vmatprep.subr.mxu0 %v4270
        %4287 = vmatpush1.msra.mxu0 %v4269
        %4288 = vmatprep.subr.mxu0 %v4274
        %4289 = vmatpush1.msra.mxu0 %v4273
        %4290 = vmatprep.subr.mxu0 0.0
        %4291 = vmatpush1.msra.mxu0 0.0
        %4292 = vmatprep.subr.mxu0 0.0
        %4293 = vmatpush1.msra.mxu0 0.0
        %4294 = vmatprep.subr.mxu0 0.0
        %4295 = vmatpush1.msra.mxu0 0.0
        %4296 = vmatprep.subr.mxu0 0.0
        %4297 = vmatpush1.msra.mxu0 0.0
        %4298 = vmatprep.subr.mxu0 0.0
        %4299 = vmatpush1.msra.mxu0 0.0
        %4300 = vmatprep.subr.mxu0 0.0
        %4301 = vmatpush1.msra.mxu0 0.0
        %4302 = vmatprep.subr.mxu0 0.0
        %4303 = vmatpush1.msra.mxu0 0.0
        %4304 = vmatprep.subr.mxu0 0.0
        %4305 = vmatpush1.msra.mxu0 0.0
        %4306 = vmatprep.subr.mxu0 0.0
        %4307 = vmatpush1.msra.mxu0 0.0
        %4308 = vmatprep.subr.mxu0 0.0
        %4309 = vmatpush1.msra.mxu0 0.0
        %4310 = vmatprep.subr.mxu0 0.0
        %4311 = vmatpush1.msra.mxu0 0.0
        %4312 = vmatprep.subr.mxu0 0.0
        %4313 = vmatpush1.msra.mxu0 0.0
        %4314 = vmatprep.subr.mxu0 0.0
        %4315 = vmatpush1.msra.mxu0 0.0
        %4316 = vmatprep.subr.mxu0 0.0
        %4317 = vmatpush1.msra.mxu0 0.0
        %4318 = vmatprep.subr.mxu0 0.0
        %4319 = vmatpush1.msra.mxu0 0.0
        %4320 = vmatprep.subr.mxu0 0.0
        %4321 = vmatpush1.msra.mxu0 0.0
        %4322 = vmatprep.subr.mxu0 0.0
        %4323 = vmatpush1.msra.mxu0 0.0
        %4324 = vmatprep.subr.mxu0 0.0
        %4325 = vmatpush1.msra.mxu0 0.0
        %4326 = vmatprep.subr.mxu0 0.0
        %4327 = vmatpush1.msra.mxu0 0.0
        %4328 = vmatprep.subr.mxu0 0.0
        %4329 = vmatpush1.msra.mxu0 0.0
        %4330 = vmatprep.subr.mxu0 0.0
        %4331 = vmatpush1.msra.mxu0 0.0
        %4332 = vmatprep.subr.mxu0 0.0
        %4333 = vmatpush1.msra.mxu0 0.0
        %4334 = vmatprep.subr.mxu0 0.0
        %4335 = vmatpush1.msra.mxu0 0.0
        %4336 = vmatprep.subr.mxu0 0.0
        %4337 = vmatpush1.msra.mxu0 0.0
        %4338 = vmatprep.subr.mxu0 0.0
        %4339 = vmatpush1.msra.mxu0 0.0
        %4340 = vmatprep.subr.mxu0 0.0
        %4341 = vmatpush1.msra.mxu0 0.0
        %4342 = vmatprep.subr.mxu0 0.0
        %4343 = vmatpush1.msra.mxu0 0.0
        %4344 = vmatprep.subr.mxu0 0.0
        %4345 = vmatpush1.msra.mxu0 0.0
        %4346 = vmatprep.mubr.f32.mxu0 0.0
        %4347 = vmatmul.mubr.f32.gmra.mrb[0].mxu0 %v4280
        %v4348 = vpop.f32.mrb[0].mxu0
        %v4349 = vadd.f32 0.0, %v4348
        %v4350 = vpop.f32.mrb[0].mxu0
        %v4351 = vadd.f32 0.0, %v4350
        %4352 = vdwg.mxu0
        %4353 = vmatprep.subr.mxu0 %v4264
        %4354 = vmatpush1.msra.mxu0 %v4263
        %4355 = vmatprep.subr.mxu0 %v4268
        %4356 = vmatpush1.msra.mxu0 %v4267
        %4357 = vmatprep.subr.mxu0 %v4272
        %4358 = vmatpush1.msra.mxu0 %v4271
        %4359 = vmatprep.subr.mxu0 %v4276
        %4360 = vmatpush1.msra.mxu0 %v4275
        %4361 = vmatprep.subr.mxu0 0.0
        %4362 = vmatpush1.msra.mxu0 0.0
        %4363 = vmatprep.subr.mxu0 0.0
        %4364 = vmatpush1.msra.mxu0 0.0
        %4365 = vmatprep.subr.mxu0 0.0
        %4366 = vmatpush1.msra.mxu0 0.0
        %4367 = vmatprep.subr.mxu0 0.0
        %4368 = vmatpush1.msra.mxu0 0.0
        %4369 = vmatprep.subr.mxu0 0.0
        %4370 = vmatpush1.msra.mxu0 0.0
        %4371 = vmatprep.subr.mxu0 0.0
        %4372 = vmatpush1.msra.mxu0 0.0
        %4373 = vmatprep.subr.mxu0 0.0
        %4374 = vmatpush1.msra.mxu0 0.0
        %4375 = vmatprep.subr.mxu0 0.0
        %4376 = vmatpush1.msra.mxu0 0.0
        %4377 = vmatprep.subr.mxu0 0.0
        %4378 = vmatpush1.msra.mxu0 0.0
        %4379 = vmatprep.subr.mxu0 0.0
        %4380 = vmatpush1.msra.mxu0 0.0
        %4381 = vmatprep.subr.mxu0 0.0
        %4382 = vmatpush1.msra.mxu0 0.0
        %4383 = vmatprep.subr.mxu0 0.0
        %4384 = vmatpush1.msra.mxu0 0.0
        %4385 = vmatprep.subr.mxu0 0.0
        %4386 = vmatpush1.msra.mxu0 0.0
        %4387 = vmatprep.subr.mxu0 0.0
        %4388 = vmatpush1.msra.mxu0 0.0
        %4389 = vmatprep.subr.mxu0 0.0
        %4390 = vmatpush1.msra.mxu0 0.0
        %4391 = vmatprep.subr.mxu0 0.0
        %4392 = vmatpush1.msra.mxu0 0.0
        %4393 = vmatprep.subr.mxu0 0.0
        %4394 = vmatpush1.msra.mxu0 0.0
        %4395 = vmatprep.subr.mxu0 0.0
        %4396 = vmatpush1.msra.mxu0 0.0
        %4397 = vmatprep.subr.mxu0 0.0
        %4398 = vmatpush1.msra.mxu0 0.0
        %4399 = vmatprep.subr.mxu0 0.0
        %4400 = vmatpush1.msra.mxu0 0.0
        %4401 = vmatprep.subr.mxu0 0.0
        %4402 = vmatpush1.msra.mxu0 0.0
        %4403 = vmatprep.subr.mxu0 0.0
        %4404 = vmatpush1.msra.mxu0 0.0
        %4405 = vmatprep.subr.mxu0 0.0
        %4406 = vmatpush1.msra.mxu0 0.0
        %4407 = vmatprep.subr.mxu0 0.0
        %4408 = vmatpush1.msra.mxu0 0.0
        %4409 = vmatprep.subr.mxu0 0.0
        %4410 = vmatpush1.msra.mxu0 0.0
        %4411 = vmatprep.subr.mxu0 0.0
        %4412 = vmatpush1.msra.mxu0 0.0
        %4413 = vmatprep.subr.mxu0 0.0
        %4414 = vmatpush1.msra.mxu0 0.0
        %4415 = vmatprep.subr.mxu0 0.0
        %4416 = vmatpush1.msra.mxu0 0.0
        %4417 = vmatprep.mubr.f32.mxu0 0.0
        %4418 = vmatmul.mubr.f32.gmra.mrb[0].mxu0 %v4280
        %v4419 = vpop.f32.mrb[0].mxu0
        %v4420 = vadd.f32 0.0, %v4419
        %v4421 = vpop.f32.mrb[0].mxu0
        %v4422 = vadd.f32 0.0, %v4421
        %4423 = vdwg.mxu0
        %v4424 = vadd.f32 %v4209, %v4349
        %v4425 = vadd.f32 %v4210, %v4351
        %v4426 = vadd.f32 %v4211, %v4420
        %v4427 = vadd.f32 %v4212, %v4422
        %4428 = vrot.lane.b32.xlu0 %v2980, 112
        %v4429 = vpop.permute.xlu0 %4428
        %4430 = vrot.lane.b32.xlu0 %v2984, 112
        %v4431 = vpop.permute.xlu0 %4430
        %4432 = vrot.lane.b32.xlu0 %v2988, 112
        %v4433 = vpop.permute.xlu0 %4432
        %4434 = vrot.lane.b32.xlu0 %v2992, 112
        %v4435 = vpop.permute.xlu0 %4434
        %4436 = vrot.lane.b32.xlu0 %v2981, 112
        %v4437 = vpop.permute.xlu0 %4436
        %4438 = vrot.lane.b32.xlu0 %v2985, 112
        %v4439 = vpop.permute.xlu0 %4438
        %4440 = vrot.lane.b32.xlu0 %v2989, 112
        %v4441 = vpop.permute.xlu0 %4440
        %4442 = vrot.lane.b32.xlu0 %v2993, 112
        %v4443 = vpop.permute.xlu0 %4442
        %4444 = vrot.lane.b32.xlu0 %v2982, 112
        %v4445 = vpop.permute.xlu0 %4444
        %4446 = vrot.lane.b32.xlu0 %v2986, 112
        %v4447 = vpop.permute.xlu0 %4446
        %4448 = vrot.lane.b32.xlu0 %v2990, 112
        %v4449 = vpop.permute.xlu0 %4448
        %4450 = vrot.lane.b32.xlu0 %v2994, 112
        %v4451 = vpop.permute.xlu0 %4450
        %4452 = vrot.lane.b32.xlu0 %v2983, 112
        %v4453 = vpop.permute.xlu0 %4452
        %4454 = vrot.lane.b32.xlu0 %v2987, 112
        %v4455 = vpop.permute.xlu0 %4454
        %4456 = vrot.lane.b32.xlu0 %v2991, 112
        %v4457 = vpop.permute.xlu0 %4456
        %4458 = vrot.lane.b32.xlu0 %v2995, 112
        %v4459 = vpop.permute.xlu0 %4458
        %v4460 = vsel %vm2374, %v4445, %v4453
        %v4461 = vsel %vm2374, %v4447, %v4455
        %v4462 = vsel %vm2374, %v4449, %v4457
        %v4463 = vsel %vm2374, %v4451, %v4459
        %v4464 = vsel %vm2374, %v4437, %v4445
        %v4465 = vsel %vm2374, %v4439, %v4447
        %v4466 = vsel %vm2374, %v4441, %v4449
        %v4467 = vsel %vm2374, %v4443, %v4451
        %v4468 = vsel %vm2374, %v4429, %v4437
        %v4469 = vsel %vm2374, %v4431, %v4439
        %v4470 = vsel %vm2374, %v4433, %v4441
        %v4471 = vsel %vm2374, %v4435, %v4443
        %v4472 = vsel %vm2374, %v4453, %v4429
        %v4473 = vsel %vm2374, %v4455, %v4431
        %v4474 = vsel %vm2374, %v4457, %v4433
        %v4475 = vsel %vm2374, %v4459, %v4435
        %v4476 = vmul.f32 %v4468, %v2397
        %v4477 = vmul.f32 %v4464, %v2401
        %v4478 = vmul.f32 %v4460, %v2405
        %v4479 = vmul.f32 %v4472, %v2409
        %v4480 = vmul.f32 %v4469, %v2397
        %v4481 = vmul.f32 %v4465, %v2401
        %v4482 = vmul.f32 %v4461, %v2405
        %v4483 = vmul.f32 %v4473, %v2409
        %v4484 = vmul.f32 %v4470, %v2397
        %v4485 = vmul.f32 %v4466, %v2401
        %v4486 = vmul.f32 %v4462, %v2405
        %v4487 = vmul.f32 %v4474, %v2409
        %v4488 = vmul.f32 %v4471, %v2397
        %v4489 = vmul.f32 %v4467, %v2401
        %v4490 = vmul.f32 %v4463, %v2405
        %v4491 = vmul.f32 %v4475, %v2409
        %s4492 = scalar_lea.vmem [#allocation7], 56
        %v4493 = vld [vmem:[%s4492] sm:$0xff]
        %v4495 = vsel %vm554, %v4493, 0
        %4497 = vmatprep.subr.mxu0 %v4477
        %4498 = vmatpush1.msra.mxu0 %v4476
        %4499 = vmatprep.subr.mxu0 %v4481
        %4500 = vmatpush1.msra.mxu0 %v4480
        %4501 = vmatprep.subr.mxu0 %v4485
        %4502 = vmatpush1.msra.mxu0 %v4484
        %4503 = vmatprep.subr.mxu0 %v4489
        %4504 = vmatpush1.msra.mxu0 %v4488
        %4505 = vmatprep.subr.mxu0 0.0
        %4506 = vmatpush1.msra.mxu0 0.0
        %4507 = vmatprep.subr.mxu0 0.0
        %4508 = vmatpush1.msra.mxu0 0.0
        %4509 = vmatprep.subr.mxu0 0.0
        %4510 = vmatpush1.msra.mxu0 0.0
        %4511 = vmatprep.subr.mxu0 0.0
        %4512 = vmatpush1.msra.mxu0 0.0
        %4513 = vmatprep.subr.mxu0 0.0
        %4514 = vmatpush1.msra.mxu0 0.0
        %4515 = vmatprep.subr.mxu0 0.0
        %4516 = vmatpush1.msra.mxu0 0.0
        %4517 = vmatprep.subr.mxu0 0.0
        %4518 = vmatpush1.msra.mxu0 0.0
        %4519 = vmatprep.subr.mxu0 0.0
        %4520 = vmatpush1.msra.mxu0 0.0
        %4521 = vmatprep.subr.mxu0 0.0
        %4522 = vmatpush1.msra.mxu0 0.0
        %4523 = vmatprep.subr.mxu0 0.0
        %4524 = vmatpush1.msra.mxu0 0.0
        %4525 = vmatprep.subr.mxu0 0.0
        %4526 = vmatpush1.msra.mxu0 0.0
        %4527 = vmatprep.subr.mxu0 0.0
        %4528 = vmatpush1.msra.mxu0 0.0
        %4529 = vmatprep.subr.mxu0 0.0
        %4530 = vmatpush1.msra.mxu0 0.0
        %4531 = vmatprep.subr.mxu0 0.0
        %4532 = vmatpush1.msra.mxu0 0.0
        %4533 = vmatprep.subr.mxu0 0.0
        %4534 = vmatpush1.msra.mxu0 0.0
        %4535 = vmatprep.subr.mxu0 0.0
        %4536 = vmatpush1.msra.mxu0 0.0
        %4537 = vmatprep.subr.mxu0 0.0
        %4538 = vmatpush1.msra.mxu0 0.0
        %4539 = vmatprep.subr.mxu0 0.0
        %4540 = vmatpush1.msra.mxu0 0.0
        %4541 = vmatprep.subr.mxu0 0.0
        %4542 = vmatpush1.msra.mxu0 0.0
        %4543 = vmatprep.subr.mxu0 0.0
        %4544 = vmatpush1.msra.mxu0 0.0
        %4545 = vmatprep.subr.mxu0 0.0
        %4546 = vmatpush1.msra.mxu0 0.0
        %4547 = vmatprep.subr.mxu0 0.0
        %4548 = vmatpush1.msra.mxu0 0.0
        %4549 = vmatprep.subr.mxu0 0.0
        %4550 = vmatpush1.msra.mxu0 0.0
        %4551 = vmatprep.subr.mxu0 0.0
        %4552 = vmatpush1.msra.mxu0 0.0
        %4553 = vmatprep.subr.mxu0 0.0
        %4554 = vmatpush1.msra.mxu0 0.0
        %4555 = vmatprep.subr.mxu0 0.0
        %4556 = vmatpush1.msra.mxu0 0.0
        %4557 = vmatprep.subr.mxu0 0.0
        %4558 = vmatpush1.msra.mxu0 0.0
        %4559 = vmatprep.subr.mxu0 0.0
        %4560 = vmatpush1.msra.mxu0 0.0
        %4561 = vmatprep.mubr.f32.mxu0 0.0
        %4562 = vmatmul.mubr.f32.gmra.mrb[0].mxu0 %v4495
        %v4563 = vpop.f32.mrb[0].mxu0
        %v4564 = vadd.f32 0.0, %v4563
        %v4565 = vpop.f32.mrb[0].mxu0
        %v4566 = vadd.f32 0.0, %v4565
        %4567 = vdwg.mxu0
        %4568 = vmatprep.subr.mxu0 %v4479
        %4569 = vmatpush1.msra.mxu0 %v4478
        %4570 = vmatprep.subr.mxu0 %v4483
        %4571 = vmatpush1.msra.mxu0 %v4482
        %4572 = vmatprep.subr.mxu0 %v4487
        %4573 = vmatpush1.msra.mxu0 %v4486
        %4574 = vmatprep.subr.mxu0 %v4491
        %4575 = vmatpush1.msra.mxu0 %v4490
        %4576 = vmatprep.subr.mxu0 0.0
        %4577 = vmatpush1.msra.mxu0 0.0
        %4578 = vmatprep.subr.mxu0 0.0
        %4579 = vmatpush1.msra.mxu0 0.0
        %4580 = vmatprep.subr.mxu0 0.0
        %4581 = vmatpush1.msra.mxu0 0.0
        %4582 = vmatprep.subr.mxu0 0.0
        %4583 = vmatpush1.msra.mxu0 0.0
        %4584 = vmatprep.subr.mxu0 0.0
        %4585 = vmatpush1.msra.mxu0 0.0
        %4586 = vmatprep.subr.mxu0 0.0
        %4587 = vmatpush1.msra.mxu0 0.0
        %4588 = vmatprep.subr.mxu0 0.0
        %4589 = vmatpush1.msra.mxu0 0.0
        %4590 = vmatprep.subr.mxu0 0.0
        %4591 = vmatpush1.msra.mxu0 0.0
        %4592 = vmatprep.subr.mxu0 0.0
        %4593 = vmatpush1.msra.mxu0 0.0
        %4594 = vmatprep.subr.mxu0 0.0
        %4595 = vmatpush1.msra.mxu0 0.0
        %4596 = vmatprep.subr.mxu0 0.0
        %4597 = vmatpush1.msra.mxu0 0.0
        %4598 = vmatprep.subr.mxu0 0.0
        %4599 = vmatpush1.msra.mxu0 0.0
        %4600 = vmatprep.subr.mxu0 0.0
        %4601 = vmatpush1.msra.mxu0 0.0
        %4602 = vmatprep.subr.mxu0 0.0
        %4603 = vmatpush1.msra.mxu0 0.0
        %4604 = vmatprep.subr.mxu0 0.0
        %4605 = vmatpush1.msra.mxu0 0.0
        %4606 = vmatprep.subr.mxu0 0.0
        %4607 = vmatpush1.msra.mxu0 0.0
        %4608 = vmatprep.subr.mxu0 0.0
        %4609 = vmatpush1.msra.mxu0 0.0
        %4610 = vmatprep.subr.mxu0 0.0
        %4611 = vmatpush1.msra.mxu0 0.0
        %4612 = vmatprep.subr.mxu0 0.0
        %4613 = vmatpush1.msra.mxu0 0.0
        %4614 = vmatprep.subr.mxu0 0.0
        %4615 = vmatpush1.msra.mxu0 0.0
        %4616 = vmatprep.subr.mxu0 0.0
        %4617 = vmatpush1.msra.mxu0 0.0
        %4618 = vmatprep.subr.mxu0 0.0
        %4619 = vmatpush1.msra.mxu0 0.0
        %4620 = vmatprep.subr.mxu0 0.0
        %4621 = vmatpush1.msra.mxu0 0.0
        %4622 = vmatprep.subr.mxu0 0.0
        %4623 = vmatpush1.msra.mxu0 0.0
        %4624 = vmatprep.subr.mxu0 0.0
        %4625 = vmatpush1.msra.mxu0 0.0
        %4626 = vmatprep.subr.mxu0 0.0
        %4627 = vmatpush1.msra.mxu0 0.0
        %4628 = vmatprep.subr.mxu0 0.0
        %4629 = vmatpush1.msra.mxu0 0.0
        %4630 = vmatprep.subr.mxu0 0.0
        %4631 = vmatpush1.msra.mxu0 0.0
        %4632 = vmatprep.mubr.f32.mxu0 0.0
        %4633 = vmatmul.mubr.f32.gmra.mrb[0].mxu0 %v4495
        %v4634 = vpop.f32.mrb[0].mxu0
        %v4635 = vadd.f32 0.0, %v4634
        %v4636 = vpop.f32.mrb[0].mxu0
        %v4637 = vadd.f32 0.0, %v4636
        %4638 = vdwg.mxu0
        %v4639 = vadd.f32 %v4424, %v4564
        %v4640 = vadd.f32 %v4425, %v4566
        %v4641 = vadd.f32 %v4426, %v4635
        %v4642 = vadd.f32 %v4427, %v4637
        %4643 = vrot.lane.b32.xlu0 %v2980, 111
        %v4644 = vpop.permute.xlu0 %4643
        %4645 = vrot.lane.b32.xlu0 %v2984, 111
        %v4646 = vpop.permute.xlu0 %4645
        %4647 = vrot.lane.b32.xlu0 %v2988, 111
        %v4648 = vpop.permute.xlu0 %4647
        %4649 = vrot.lane.b32.xlu0 %v2992, 111
        %v4650 = vpop.permute.xlu0 %4649
        %4651 = vrot.lane.b32.xlu0 %v2981, 111
        %v4652 = vpop.permute.xlu0 %4651
        %4653 = vrot.lane.b32.xlu0 %v2985, 111
        %v4654 = vpop.permute.xlu0 %4653
        %4655 = vrot.lane.b32.xlu0 %v2989, 111
        %v4656 = vpop.permute.xlu0 %4655
        %4657 = vrot.lane.b32.xlu0 %v2993, 111
        %v4658 = vpop.permute.xlu0 %4657
        %4659 = vrot.lane.b32.xlu0 %v2982, 111
        %v4660 = vpop.permute.xlu0 %4659
        %4661 = vrot.lane.b32.xlu0 %v2986, 111
        %v4662 = vpop.permute.xlu0 %4661
        %4663 = vrot.lane.b32.xlu0 %v2990, 111
        %v4664 = vpop.permute.xlu0 %4663
        %4665 = vrot.lane.b32.xlu0 %v2994, 111
        %v4666 = vpop.permute.xlu0 %4665
        %4667 = vrot.lane.b32.xlu0 %v2983, 111
        %v4668 = vpop.permute.xlu0 %4667
        %4669 = vrot.lane.b32.xlu0 %v2987, 111
        %v4670 = vpop.permute.xlu0 %4669
        %4671 = vrot.lane.b32.xlu0 %v2991, 111
        %v4672 = vpop.permute.xlu0 %4671
        %4673 = vrot.lane.b32.xlu0 %v2995, 111
        %v4674 = vpop.permute.xlu0 %4673
        %v4675 = vsel %vm2673, %v4660, %v4668
        %v4676 = vsel %vm2673, %v4662, %v4670
        %v4677 = vsel %vm2673, %v4664, %v4672
        %v4678 = vsel %vm2673, %v4666, %v4674
        %v4679 = vsel %vm2673, %v4652, %v4660
        %v4680 = vsel %vm2673, %v4654, %v4662
        %v4681 = vsel %vm2673, %v4656, %v4664
        %v4682 = vsel %vm2673, %v4658, %v4666
        %v4683 = vsel %vm2673, %v4644, %v4652
        %v4684 = vsel %vm2673, %v4646, %v4654
        %v4685 = vsel %vm2673, %v4648, %v4656
        %v4686 = vsel %vm2673, %v4650, %v4658
        %v4687 = vsel %vm2673, %v4668, %v4644
        %v4688 = vsel %vm2673, %v4670, %v4646
        %v4689 = vsel %vm2673, %v4672, %v4648
        %v4690 = vsel %vm2673, %v4674, %v4650
        %v4691 = vmul.f32 %v4683, %v2696
        %v4692 = vmul.f32 %v4679, %v2700
        %v4693 = vmul.f32 %v4675, %v2704
        %v4694 = vmul.f32 %v4687, %v2708
        %v4695 = vmul.f32 %v4684, %v2696
        %v4696 = vmul.f32 %v4680, %v2700
        %v4697 = vmul.f32 %v4676, %v2704
        %v4698 = vmul.f32 %v4688, %v2708
        %v4699 = vmul.f32 %v4685, %v2696
        %v4700 = vmul.f32 %v4681, %v2700
        %v4701 = vmul.f32 %v4677, %v2704
        %v4702 = vmul.f32 %v4689, %v2708
        %v4703 = vmul.f32 %v4686, %v2696
        %v4704 = vmul.f32 %v4682, %v2700
        %v4705 = vmul.f32 %v4678, %v2704
        %v4706 = vmul.f32 %v4690, %v2708
        %s4707 = scalar_lea.vmem [#allocation7], 64
        %v4708 = vld [vmem:[%s4707] sm:$0xff]
        %v4710 = vsel %vm554, %v4708, 0
        %4712 = vmatprep.subr.mxu0 %v4692
        %4713 = vmatpush1.msra.mxu0 %v4691
        %4714 = vmatprep.subr.mxu0 %v4696
        %4715 = vmatpush1.msra.mxu0 %v4695
        %4716 = vmatprep.subr.mxu0 %v4700
        %4717 = vmatpush1.msra.mxu0 %v4699
        %4718 = vmatprep.subr.mxu0 %v4704
        %4719 = vmatpush1.msra.mxu0 %v4703
        %4720 = vmatprep.subr.mxu0 0.0
        %4721 = vmatpush1.msra.mxu0 0.0
        %4722 = vmatprep.subr.mxu0 0.0
        %4723 = vmatpush1.msra.mxu0 0.0
        %4724 = vmatprep.subr.mxu0 0.0
        %4725 = vmatpush1.msra.mxu0 0.0
        %4726 = vmatprep.subr.mxu0 0.0
        %4727 = vmatpush1.msra.mxu0 0.0
        %4728 = vmatprep.subr.mxu0 0.0
        %4729 = vmatpush1.msra.mxu0 0.0
        %4730 = vmatprep.subr.mxu0 0.0
        %4731 = vmatpush1.msra.mxu0 0.0
        %4732 = vmatprep.subr.mxu0 0.0
        %4733 = vmatpush1.msra.mxu0 0.0
        %4734 = vmatprep.subr.mxu0 0.0
        %4735 = vmatpush1.msra.mxu0 0.0
        %4736 = vmatprep.subr.mxu0 0.0
        %4737 = vmatpush1.msra.mxu0 0.0
        %4738 = vmatprep.subr.mxu0 0.0
        %4739 = vmatpush1.msra.mxu0 0.0
        %4740 = vmatprep.subr.mxu0 0.0
        %4741 = vmatpush1.msra.mxu0 0.0
        %4742 = vmatprep.subr.mxu0 0.0
        %4743 = vmatpush1.msra.mxu0 0.0
        %4744 = vmatprep.subr.mxu0 0.0
        %4745 = vmatpush1.msra.mxu0 0.0
        %4746 = vmatprep.subr.mxu0 0.0
        %4747 = vmatpush1.msra.mxu0 0.0
        %4748 = vmatprep.subr.mxu0 0.0
        %4749 = vmatpush1.msra.mxu0 0.0
        %4750 = vmatprep.subr.mxu0 0.0
        %4751 = vmatpush1.msra.mxu0 0.0
        %4752 = vmatprep.subr.mxu0 0.0
        %4753 = vmatpush1.msra.mxu0 0.0
        %4754 = vmatprep.subr.mxu0 0.0
        %4755 = vmatpush1.msra.mxu0 0.0
        %4756 = vmatprep.subr.mxu0 0.0
        %4757 = vmatpush1.msra.mxu0 0.0
        %4758 = vmatprep.subr.mxu0 0.0
        %4759 = vmatpush1.msra.mxu0 0.0
        %4760 = vmatprep.subr.mxu0 0.0
        %4761 = vmatpush1.msra.mxu0 0.0
        %4762 = vmatprep.subr.mxu0 0.0
        %4763 = vmatpush1.msra.mxu0 0.0
        %4764 = vmatprep.subr.mxu0 0.0
        %4765 = vmatpush1.msra.mxu0 0.0
        %4766 = vmatprep.subr.mxu0 0.0
        %4767 = vmatpush1.msra.mxu0 0.0
        %4768 = vmatprep.subr.mxu0 0.0
        %4769 = vmatpush1.msra.mxu0 0.0
        %4770 = vmatprep.subr.mxu0 0.0
        %4771 = vmatpush1.msra.mxu0 0.0
        %4772 = vmatprep.subr.mxu0 0.0
        %4773 = vmatpush1.msra.mxu0 0.0
        %4774 = vmatprep.subr.mxu0 0.0
        %4775 = vmatpush1.msra.mxu0 0.0
        %4776 = vmatprep.mubr.f32.mxu0 0.0
        %4777 = vmatmul.mubr.f32.gmra.mrb[0].mxu0 %v4710
        %v4778 = vpop.f32.mrb[0].mxu0
        %v4779 = vadd.f32 0.0, %v4778
        %v4780 = vpop.f32.mrb[0].mxu0
        %v4781 = vadd.f32 0.0, %v4780
        %4782 = vdwg.mxu0
        %4783 = vmatprep.subr.mxu0 %v4694
        %4784 = vmatpush1.msra.mxu0 %v4693
        %4785 = vmatprep.subr.mxu0 %v4698
        %4786 = vmatpush1.msra.mxu0 %v4697
        %4787 = vmatprep.subr.mxu0 %v4702
        %4788 = vmatpush1.msra.mxu0 %v4701
        %4789 = vmatprep.subr.mxu0 %v4706
        %4790 = vmatpush1.msra.mxu0 %v4705
        %4791 = vmatprep.subr.mxu0 0.0
        %4792 = vmatpush1.msra.mxu0 0.0
        %4793 = vmatprep.subr.mxu0 0.0
        %4794 = vmatpush1.msra.mxu0 0.0
        %4795 = vmatprep.subr.mxu0 0.0
        %4796 = vmatpush1.msra.mxu0 0.0
        %4797 = vmatprep.subr.mxu0 0.0
        %4798 = vmatpush1.msra.mxu0 0.0
        %4799 = vmatprep.subr.mxu0 0.0
        %4800 = vmatpush1.msra.mxu0 0.0
        %4801 = vmatprep.subr.mxu0 0.0
        %4802 = vmatpush1.msra.mxu0 0.0
        %4803 = vmatprep.subr.mxu0 0.0
        %4804 = vmatpush1.msra.mxu0 0.0
        %4805 = vmatprep.subr.mxu0 0.0
        %4806 = vmatpush1.msra.mxu0 0.0
        %4807 = vmatprep.subr.mxu0 0.0
        %4808 = vmatpush1.msra.mxu0 0.0
        %4809 = vmatprep.subr.mxu0 0.0
        %4810 = vmatpush1.msra.mxu0 0.0
        %4811 = vmatprep.subr.mxu0 0.0
        %4812 = vmatpush1.msra.mxu0 0.0
        %4813 = vmatprep.subr.mxu0 0.0
        %4814 = vmatpush1.msra.mxu0 0.0
        %4815 = vmatprep.subr.mxu0 0.0
        %4816 = vmatpush1.msra.mxu0 0.0
        %4817 = vmatprep.subr.mxu0 0.0
        %4818 = vmatpush1.msra.mxu0 0.0
        %4819 = vmatprep.subr.mxu0 0.0
        %4820 = vmatpush1.msra.mxu0 0.0
        %4821 = vmatprep.subr.mxu0 0.0
        %4822 = vmatpush1.msra.mxu0 0.0
        %4823 = vmatprep.subr.mxu0 0.0
        %4824 = vmatpush1.msra.mxu0 0.0
        %4825 = vmatprep.subr.mxu0 0.0
        %4826 = vmatpush1.msra.mxu0 0.0
        %4827 = vmatprep.subr.mxu0 0.0
        %4828 = vmatpush1.msra.mxu0 0.0
        %4829 = vmatprep.subr.mxu0 0.0
        %4830 = vmatpush1.msra.mxu0 0.0
        %4831 = vmatprep.subr.mxu0 0.0
        %4832 = vmatpush1.msra.mxu0 0.0
        %4833 = vmatprep.subr.mxu0 0.0
        %4834 = vmatpush1.msra.mxu0 0.0
        %4835 = vmatprep.subr.mxu0 0.0
        %4836 = vmatpush1.msra.mxu0 0.0
        %4837 = vmatprep.subr.mxu0 0.0
        %4838 = vmatpush1.msra.mxu0 0.0
        %4839 = vmatprep.subr.mxu0 0.0
        %4840 = vmatpush1.msra.mxu0 0.0
        %4841 = vmatprep.subr.mxu0 0.0
        %4842 = vmatpush1.msra.mxu0 0.0
        %4843 = vmatprep.subr.mxu0 0.0
        %4844 = vmatpush1.msra.mxu0 0.0
        %4845 = vmatprep.subr.mxu0 0.0
        %4846 = vmatpush1.msra.mxu0 0.0
        %4847 = vmatprep.mubr.f32.mxu0 0.0
        %4848 = vmatmul.mubr.f32.gmra.mrb[0].mxu0 %v4710
        %v4849 = vpop.f32.mrb[0].mxu0
        %v4850 = vadd.f32 0.0, %v4849
        %v4851 = vpop.f32.mrb[0].mxu0
        %v4852 = vadd.f32 0.0, %v4851
        %4853 = vdwg.mxu0
        %v4854 = vadd.f32 %v4639, %v4779
        %v4855 = vadd.f32 %v4640, %v4781
        %v4856 = vadd.f32 %v4641, %v4850
        %v4857 = vadd.f32 %v4642, %v4852
        %v4858 = vld [vmem:[%s4] sm:$0xff]
        %4860 = vset.pattern.permute.xlu0 0
        %4861 = vperm.xlu0 %4860, %v4858
        %v4862 = vpop.permute.xlu0 %4861
        %v4864 = vadd.f32 %v4854, %v4862
        %v4865 = vadd.f32 %v4855, %v4862
        %v4866 = vadd.f32 %v4856, %v4862
        %v4867 = vadd.f32 %v4857, %v4862
        %v4868 = vrot.slane %v4864, 4
        %v4869 = vmax.f32 %v4864, %v4868
        %v4870 = vrot.slane %v4869, 2
        %v4871 = vmax.f32 %v4869, %v4870
        %v4872 = vrot.slane %v4871, 1
        %v4873 = vmax.f32 %v4871, %v4872
        %v4874 = vrot.slane %v4865, 4
        %v4875 = vmax.f32 %v4865, %v4874
        %v4876 = vrot.slane %v4875, 2
        %v4877 = vmax.f32 %v4875, %v4876
        %v4878 = vrot.slane %v4877, 1
        %v4879 = vmax.f32 %v4877, %v4878
        %v4880 = vrot.slane %v4866, 4
        %v4881 = vmax.f32 %v4866, %v4880
        %v4882 = vrot.slane %v4881, 2
        %v4883 = vmax.f32 %v4881, %v4882
        %v4884 = vrot.slane %v4883, 1
        %v4885 = vmax.f32 %v4883, %v4884
        %v4886 = vrot.slane %v4867, 4
        %v4887 = vmax.f32 %v4867, %v4886
        %v4888 = vrot.slane %v4887, 2
        %v4889 = vmax.f32 %v4887, %v4888
        %v4890 = vrot.slane %v4889, 1
        %v4891 = vmax.f32 %v4889, %v4890
        %v4892 = vsub.f32 %v4864, %v4873
        %v4893 = vsub.f32 %v4865, %v4879
        %v4894 = vsub.f32 %v4866, %v4885
        %v4895 = vsub.f32 %v4867, %v4891
        %v4896 = vmul.f32 %v4892, 1.442695
        %v4897 = vpow.pop %v4896
        %v4898 = vmul.f32 %v4893, 1.442695
        %v4899 = vpow.pop %v4898
        %v4900 = vmul.f32 %v4894, 1.442695
        %v4901 = vpow.pop %v4900
        %v4902 = vmul.f32 %v4895, 1.442695
        %v4903 = vpow.pop %v4902
        %v4904 = vrot.slane %v4897, 4
        %v4905 = vadd.f32 %v4897, %v4904
        %v4906 = vrot.slane %v4905, 2
        %v4907 = vadd.f32 %v4905, %v4906
        %v4908 = vrot.slane %v4907, 1
        %v4909 = vadd.f32 %v4907, %v4908
        %v4910 = vrot.slane %v4899, 4
        %v4911 = vadd.f32 %v4899, %v4910
        %v4912 = vrot.slane %v4911, 2
        %v4913 = vadd.f32 %v4911, %v4912
        %v4914 = vrot.slane %v4913, 1
        %v4915 = vadd.f32 %v4913, %v4914
        %v4916 = vrot.slane %v4901, 4
        %v4917 = vadd.f32 %v4901, %v4916
        %v4918 = vrot.slane %v4917, 2
        %v4919 = vadd.f32 %v4917, %v4918
        %v4920 = vrot.slane %v4919, 1
        %v4921 = vadd.f32 %v4919, %v4920
        %v4922 = vrot.slane %v4903, 4
        %v4923 = vadd.f32 %v4903, %v4922
        %v4924 = vrot.slane %v4923, 2
        %v4925 = vadd.f32 %v4923, %v4924
        %v4926 = vrot.slane %v4925, 1
        %v4927 = vadd.f32 %v4925, %v4926
        %v4928 = vrcp.pop %v4909
        %v4929 = vmul.f32 %v4897, %v4928
        %v4930 = vrcp.pop %v4915
        %v4931 = vmul.f32 %v4899, %v4930
        %v4932 = vrcp.pop %v4921
        %v4933 = vmul.f32 %v4901, %v4932
        %v4934 = vrcp.pop %v4927
        %v4935 = vmul.f32 %v4903, %v4934
        %4936 = vst [vmem:[%s344] sm:$0xff] %v4864
        %4937 = vst [vmem:[%s344 + $0x8] sm:$0xff] %v4865
        %4938 = vst [vmem:[%s344 + $0x10] sm:$0xff] %v4866
        %4939 = vst [vmem:[%s344 + $0x18] sm:$0xff] %v4867
        %4940 = vst [vmem:[%s351] sm:$0xff] %v4929
        %4941 = vst [vmem:[%s351 + $0x8] sm:$0xff] %v4931
        %4942 = vst [vmem:[%s351 + $0x10] sm:$0xff] %v4933
        %4943 = vst [vmem:[%s351 + $0x18] sm:$0xff] %v4935
        %s4944 = sand.u32 %s169, 1
        %s4945 = scalar_lea.sflag [#allocation4], %s4944
        %s4946 = sand.u32 %s169, 1
        %s4947 = smul.addr %s4946, 32
        %s4948 = scalar_lea.vmem [#allocation10], %s4947
        %s4949 = sand.u32 %s195, 1
        %s4950 = scalar_lea.sflag [#allocation12], %s4949
        %s4951 = sand.u32 %s195, 1
        %s4952 = smul.addr %s4951, 32
        %s4953 = scalar_lea.vmem [#allocation11], %s4952
        // Predicated region
        $region61: #{tpu_custom_call.1} parent=43 // pred_check
          %p4954 = pneg %p179
        $region62: #{tpu_custom_call.1} parent=43 // pred_check_branch
          %4956 = sbr.rel (%p4954) target = $region64
        $region63: #{tpu_custom_call.1} parent=43 // pred_region
          %s4958 = ssub.s32 512, 512
          %4959 = vsyncadd %s4945, %s4958
          %s4960 = smul.addr %s30, 4
          %s4961 = smul.addr %s4960, 128
          %s4962 = scalar_lea.hbm %s6, %s4961
          %s4964 = sshll.u32 %s4948, 4
          %s4965 = int_to_ptr.vmem [resolvable:$true] %s4964
          %4967 = dma.vmem_to_hbm [thread:$0]  %s4965, 512, %s4962, %s4945
        $region64: #{tpu_custom_call.1} parent=43 // pred_fallthru
          _
        // Predicated region
        $region65: #{tpu_custom_call.1} parent=43 // pred_check
          %p4968 = pneg %p205
        $region66: #{tpu_custom_call.1} parent=43 // pred_check_branch
          %4970 = sbr.rel (%p4968) target = $region68
        $region67: #{tpu_custom_call.1} parent=43 // pred_region
          %s4972 = ssub.s32 512, 512
          %4973 = vsyncadd %s4950, %s4972
          %s4974 = smul.addr %s30, 4
          %s4975 = smul.addr %s4974, 128
          %s4976 = scalar_lea.hbm %s7, %s4975
          %s4978 = sshll.u32 %s4953, 4
          %s4979 = int_to_ptr.vmem [resolvable:$true] %s4978
          %4981 = dma.vmem_to_hbm [thread:$0]  %s4979, 512, %s4976, %s4950
        $region68: #{tpu_custom_call.1} parent=43 // pred_fallthru
          _
      $region44: #{tpu_custom_call.1} parent=5 // pred_fallthru
        _
      %p4982 = scmp.le.s32.totalorder 2, %s25
      // Predicated region
      $region69: #{tpu_custom_call.1} parent=5 // pred_check
        %p4983 = pneg %p4982
      $region70: #{tpu_custom_call.1} parent=5 // pred_check_branch
        %4985 = sbr.rel (%p4983) target = $region72
      $region71: #{tpu_custom_call.1} parent=5 // pred_region
        %s4986 = ssub.s32 %s25, 2
        // Predicated region
        $region73: #{tpu_custom_call.1} parent=71 // pred_check
          %p4987 = pneg %p185
        $region74: #{tpu_custom_call.1} parent=71 // pred_check_branch
          %4989 = sbr.rel (%p4987) target = $region76
        $region75: #{tpu_custom_call.1} parent=71 // pred_region
          %s4990 = sand.u32 %s170, 1
          %s4991 = scalar_lea.sflag [#allocation4], %s4990
          %s4992 = sand.u32 %s170, 1
          %s4993 = smul.addr %s4992, 32
          %s4994 = scalar_lea.vmem [#allocation10], %s4993
          %4995 = dma.done %s4991, 512
        $region76: #{tpu_custom_call.1} parent=71 // pred_fallthru
          _
        // Predicated region
        $region77: #{tpu_custom_call.1} parent=71 // pred_check
          %p4996 = pneg %p211
        $region78: #{tpu_custom_call.1} parent=71 // pred_check_branch
          %4998 = sbr.rel (%p4996) target = $region80
        $region79: #{tpu_custom_call.1} parent=71 // pred_region
          %s4999 = sand.u32 %s196, 1
          %s5000 = scalar_lea.sflag [#allocation12], %s4999
          %s5001 = sand.u32 %s196, 1
          %s5002 = smul.addr %s5001, 32
          %s5003 = scalar_lea.vmem [#allocation11], %s5002
          %5004 = dma.done %s5000, 512
        $region80: #{tpu_custom_call.1} parent=71 // pred_fallthru
          _
      $region72: #{tpu_custom_call.1} parent=5 // pred_fallthru
        _
    $region6: #{tpu_custom_call.1} parent=1 // loop_footer
      %s29 = sadd.s32 1, %s25
    $region7: #{tpu_custom_call.1} parent=1 // loop_footer_branch
      %24 = sbr.rel target = $region3
    $region8: #{tpu_custom_call.1} parent=1 // loop_exit
      _
    %5005 = vsyncpa [#allocation3], 1
    %s5006 = scalar_lea.sflag [#allocation3], 1
    %5007 = vsyncpa %s5006, 1
    %5008 = vsyncpa [#allocation6], 1
    %5009 = vsyncpa [#allocation9], 1
    %5010 = vsyncpa [#allocation4], 1
    %s5011 = scalar_lea.sflag [#allocation4], 1
    %5012 = vsyncpa %s5011, 1
    %5013 = vsyncpa [#allocation12], 1
    %s5014 = scalar_lea.sflag [#allocation12], 1
    %5015 = vsyncpa %s5014, 1

</llo_original>
